<compile_context>
chip_gen: v6e
topology: v6e:2x2x1
jax: 0.10.0
libtpu: 0.0.40
codegen_flags: <defaults>
</compile_context>

<pallas_src>
import functools

import jax
import jax.numpy as jnp
from jax.experimental import pallas as pl
from jax.experimental.pallas import tpu as pltpu


def _round_up(v, m):
    return (v + m - 1) // m * m


def _mxu_m_cap():
    """Instance-tile cap: 128 on v5e-and-older (4x128^2 MXU), 256 on v6e/v7x (2x256^2)."""
    try:
        kind = jax.devices()[0].device_kind.lower()
    except Exception:
        return 128
    if any(tag in kind for tag in ("v2", "v3", "v4", "v5")):
        return 128
    return 256


# ---------------------------------------------------------------------------
# Fused kernel: feature MLP + gated attention + online-softmax pooling + classifier
# ---------------------------------------------------------------------------
def _fused_mil_kernel(x_ref, w1_ref, b1_ref, w2_ref, b2_ref,
                      wa_ref, ba_ref, wb_ref, bb_ref, wc_ref, bc_ref,
                      wcls_ref, bcls_ref,
                      logits_ref, prob_ref, araw_ref,
                      h1_sc, m_sc, l_sc, acc_sc, araw_sc,
                      *, tm, n_valid, n_tiles, k_tiles):
    i = pl.program_id(1)   # instance tile
    k = pl.program_id(2)   # Din (K) chunk

    # ---- per-bag accumulator init ----------------------------------------------------------
    @pl.when(jnp.logical_and(i == 0, k == 0))
    def _init_bag():
        m_sc[...] = jnp.full_like(m_sc, -jnp.inf)
        l_sc[...] = jnp.zeros_like(l_sc)
        acc_sc[...] = jnp.zeros_like(acc_sc)
        araw_sc[...] = jnp.zeros_like(araw_sc)

    # ---- first MLP layer, K-tiled: x @ W1 (bf16 MXU, f32 accumulate) -----------------------
    partial = jnp.dot(x_ref[...], w1_ref[...], preferred_element_type=jnp.float32)  # (TM, HID)

    def _attention_and_pool(h1_pre):
        # relu(x@W1 + b1) @ W2 + b2  -> per-instance features
        h1 = jnp.maximum(h1_pre + b1_ref[...], 0.0).astype(jnp.bfloat16)        # (TM, HID)
        feats = jnp.dot(h1, w2_ref[...], preferred_element_type=jnp.float32) + b2_ref[...]
        feats_bf = feats.astype(jnp.bfloat16)                                    # (TM, F)

        # gated-attention scores, produced lane-dense as a row (1, TM)
        a = jnp.tanh(jnp.dot(feats_bf, wa_ref[...],
                             preferred_element_type=jnp.float32) + ba_ref[...])  # (TM, A)
        g = jax.nn.sigmoid(jnp.dot(feats_bf, wb_ref[...],
                                   preferred_element_type=jnp.float32) + bb_ref[...])
        gated = (a * g).astype(jnp.bfloat16)                                     # (TM, A)
        scores = jax.lax.dot_general(
            wc_ref[...], gated, (((1,), (1,)), ((), ())),
            preferred_element_type=jnp.float32) + bc_ref[...]                    # (1, TM) f32

        # stash RAW (pre-softmax) scores into the lane-dense per-bag row scratch.
        # (when n_tiles > 1, tm is a multiple of 128, so the lane offset is 128-aligned)
        if n_tiles == 1:
            araw_sc[:, 0:tm] = scores
        else:
            start = pl.multiple_of(i * tm, tm)
            araw_sc[:, pl.ds(start, tm)] = scores

        # mask padded instances out of the softmax
        col = jax.lax.broadcasted_iota(jnp.int32, scores.shape, 1) + i * tm
        masked = jnp.where(col < n_valid, scores, -1e30)

        # online softmax over instances + attention pooling ((1,TM) @ (TM,F) on the MXU)
        m_prev = m_sc[...]                                                       # (1, 1)
        m_new = jnp.maximum(m_prev, jnp.max(masked, axis=-1, keepdims=True))
        alpha = jnp.exp(m_prev - m_new)
        p = jnp.exp(masked - m_new)                                              # (1, TM)
        l_sc[...] = alpha * l_sc[...] + jnp.sum(p, axis=-1, keepdims=True)
        acc_sc[...] = alpha * acc_sc[...] + jnp.dot(
            p.astype(jnp.bfloat16), feats_bf, preferred_element_type=jnp.float32)  # (1, F)
        m_sc[...] = m_new

        # finalize once per bag: classifier, exact class softmax, lane-dense A_raw writeback
        @pl.when(i == n_tiles - 1)
        def _finalize():
            m_pool = acc_sc[...] / l_sc[...]                                     # exact divide
            logits = jnp.dot(m_pool.astype(jnp.bfloat16), wcls_ref[...],
                             preferred_element_type=jnp.float32) + bcls_ref[...]  # (1, C)
            logits_ref[...] = logits
            lmax = jnp.max(logits, axis=-1, keepdims=True)
            el = jnp.exp(logits - lmax)
            prob_ref[...] = el / jnp.sum(el, axis=-1, keepdims=True)             # exact softmax
            araw_ref[...] = araw_sc[...]

    if k_tiles == 1:
        # Din fits in one chunk: keep h1 in registers, no scratch round trip.
        _attention_and_pool(partial)
    else:
        @pl.when(k == 0)
        def _set():
            h1_sc[...] = partial

        @pl.when(k != 0)
        def _acc():
            h1_sc[...] = h1_sc[...] + partial

        @pl.when(k == k_tiles - 1)
        def _tail():
            _attention_and_pool(h1_sc[...])


# ---------------------------------------------------------------------------
# pallas_call wrapper
# ---------------------------------------------------------------------------
def _vmem_limit_bytes(tm, tk, k_tiles, hid, feat, attn_d, n_classes, n_lanes, single_buf):
    bf = 2
    wbuf = 1 if single_buf else 2
    est = 2 * tm * tk * bf                                    # x tile, double-buffered
    est += (2 if k_tiles > 1 else wbuf) * tk * hid * bf       # W1 (streams when K-tiled)
    est += wbuf * (hid * feat + 2 * feat * attn_d + feat * n_classes) * bf
    est += wbuf * (hid + feat + 2 * attn_d + 1 + n_classes + 256) * 4   # biases (f32)
    est += (tm * hid if k_tiles > 1 else 8 * 128) * 4         # h1 K-accumulator scratch
    est += (feat + n_lanes + 2 * 8 * 128) * 4                 # acc / araw / m / l scratch
    est += 2 * (2 * n_classes + n_lanes) * 4                  # outputs
    return min(64 * 1024 * 1024, max(32 * 1024 * 1024, 2 * est + (8 << 20)))


def _fused_forward(x_padded, p, *, tm, tk, n_valid, single_buffer_weights):
    """x_padded: (n_bags, N_pad, Din_pad) bf16.  Returns (logits, probs, a_raw row)."""
    n_bags, n_pad, din_pad = x_padded.shape
    n_tiles = n_pad // tm
    k_tiles = din_pad // tk
    hid = p["w1"].shape[1]
    feat = p["w2"].shape[1]
    attn_d = p["wa"].shape[1]
    n_classes = p["wcls"].shape[1]
    n_lanes = _round_up(n_pad, 128)

    kernel = functools.partial(_fused_mil_kernel, tm=tm, n_valid=n_valid,
                               n_tiles=n_tiles, k_tiles=k_tiles)

    wkw = dict(pipeline_mode=pl.Buffered(1)) if single_buffer_weights else {}

    def const(shape):   # constant block every grid step -> single VMEM buffer
        return pl.BlockSpec(shape, lambda b, i, k: (0, 0), **wkw)

    if k_tiles == 1:
        w1_spec = const((tk, hid))
    else:
        w1_spec = pl.BlockSpec((tk, hid), lambda b, i, k: (k, 0))   # streams over K

    vmem_limit = _vmem_limit_bytes(tm, tk, k_tiles, hid, feat, attn_d, n_classes,
                                   n_lanes, single_buffer_weights)

    cost = pl.CostEstimate(
        flops=int(n_bags * n_tiles * tm * (2 * din_pad * hid + 2 * hid * feat
                                           + 4 * feat * attn_d + 2 * attn_d + 2 * feat)
                  + n_bags * 2 * feat * n_classes),
        transcendentals=int(n_bags * n_tiles * tm * (2 * attn_d + 1) + n_bags * n_classes),
        bytes_accessed=int(x_padded.size * 2
                           + (din_pad * hid + hid * feat + 2 * feat * attn_d
                              + feat * n_classes) * 2
                           + n_bags * (n_lanes + 2 * n_classes) * 4),
    )

    return pl.pallas_call(
        kernel,
        grid=(n_bags, n_tiles, k_tiles),
        in_specs=[
            pl.BlockSpec((None, tm, tk), lambda b, i, k: (b, i, k)),     # x tile
            w1_spec, const((1, hid)),                                    # W1, b1
            const((hid, feat)), const((1, feat)),                        # W2, b2
            const((feat, attn_d)), const((1, attn_d)),                   # Wa, ba
            const((feat, attn_d)), const((1, attn_d)),                   # Wb, bb
            const((1, attn_d)), const((1, 1)),                           # wc (row), bc
            const((feat, n_classes)), const((1, n_classes)),             # Wcls, bcls
        ],
        out_specs=(
            pl.BlockSpec((None, 1, n_classes), lambda b, i, k: (b, 0, 0)),   # logits (resident)
            pl.BlockSpec((None, 1, n_classes), lambda b, i, k: (b, 0, 0)),   # Y_prob (resident)
            pl.BlockSpec((None, 1, n_lanes), lambda b, i, k: (b, 0, 0)),     # A_raw row (resident)
        ),
        out_shape=(
            jax.ShapeDtypeStruct((n_bags, 1, n_classes), jnp.float32),
            jax.ShapeDtypeStruct((n_bags, 1, n_classes), jnp.float32),
            jax.ShapeDtypeStruct((n_bags, 1, n_lanes), jnp.float32),
        ),
        scratch_shapes=[
            pltpu.VMEM((tm, hid), jnp.float32) if k_tiles > 1
            else pltpu.VMEM((8, 128), jnp.float32),                      # h1 K-accumulator
            pltpu.VMEM((1, 1), jnp.float32),                             # running max
            pltpu.VMEM((1, 1), jnp.float32),                             # running sum
            pltpu.VMEM((1, feat), jnp.float32),                          # pooled-feature acc
            pltpu.VMEM((1, n_lanes), jnp.float32),                       # raw-score row
        ],
        compiler_params=pltpu.CompilerParams(
            dimension_semantics=("parallel", "arbitrary", "arbitrary"),
            vmem_limit_bytes=vmem_limit),
        cost_estimate=cost,
    )(x_padded,
      p["w1"], p["b1"], p["w2"], p["b2"],
      p["wa"], p["ba"], p["wb"], p["bb"],
      p["wc_row"], p["bc"], p["wcls"], p["bcls"])


# ---------------------------------------------------------------------------
# Wrapper: IntegratedModel.forward
# ---------------------------------------------------------------------------
def _prepare_params(params, din, din_pad):
    w1 = params["fe_w1"]
    if din_pad != din:
        w1 = jnp.pad(w1, ((0, din_pad - din), (0, 0)))   # zero rows match zero-padded x cols
    return {
        "w1": w1.astype(jnp.bfloat16),
        "b1": params["fe_b1"].astype(jnp.float32),
        "w2": params["fe_w2"].astype(jnp.bfloat16),
        "b2": params["fe_b2"].astype(jnp.float32),
        "wa": params["attn_wa"].astype(jnp.bfloat16),
        "ba": params["attn_ba"].astype(jnp.float32),
        "wb": params["attn_wb"].astype(jnp.bfloat16),
        "bb": params["attn_bb"].astype(jnp.float32),
        "wc_row": params["attn_wc"].T.astype(jnp.bfloat16),   # (1, attn_d)
        "bc": params["attn_bc"].astype(jnp.float32),          # (1, 1)
        "wcls": params["cls_w"].astype(jnp.bfloat16),
        "bcls": params["cls_b"].astype(jnp.float32),
    }


def _pick_tiles(num_images, din, hid, *, instance_tile_cap=None, max_k_tile=None,
                k_stream_budget_bytes=16 * 1024 * 1024):
    cap = instance_tile_cap if instance_tile_cap is not None else _mxu_m_cap()
    tm = min(_round_up(num_images, 16), cap)   # bf16 sublane floor (16), MXU-M cap
    n_pad = _round_up(num_images, tm)

    din128 = _round_up(din, 128)
    # Largest K chunk (multiple of 128) whose double-buffered x tile + W1 slab fits the budget.
    tk_budget = max(128, (k_stream_budget_bytes // (4 * (tm + hid))) // 128 * 128)
    tk = min(din128, tk_budget)
    if max_k_tile is not None:
        tk = min(tk, max(128, _round_up(max_k_tile, 128)))
    tk = max(tk, 128)
    din_pad = _round_up(din, tk)
    return tm, n_pad, tk, din_pad


def integrated_model_forward(x_list, params, label=None, *,
                             instance_tile_cap=None, max_k_tile=None):
    # TODO(synk): CLAM instance_eval branch (label-dependent instance loss) not modeled;
    # results_dict stays empty and `label` is unused.
    shapes = {tuple(int(d) for d in x.shape) for x in x_list}
    assert len(shapes) == 1, "all bags in x_list must share a shape to batch into one kernel"
    batch_size, num_images, c, h, w = x_list[0].shape
    assert batch_size == 1, "CLAM head squeeze() semantics require batch_size == 1 per bag"

    n_bags = len(x_list)
    din = c * h * w
    hid = params["fe_w1"].shape[1]
    tm, n_pad, tk, din_pad = _pick_tiles(num_images, din, hid,
                                         instance_tile_cap=instance_tile_cap,
                                         max_k_tile=max_k_tile)

    x = jnp.stack(
        [jnp.reshape(xi.astype(jnp.float32), (num_images, din)) for xi in x_list], axis=0)
    x = jnp.pad(x, ((0, 0), (0, n_pad - num_images), (0, din_pad - din))).astype(jnp.bfloat16)

    p = _prepare_params(params, din, din_pad)

    try:
        logits_all, prob_all, araw_all = _fused_forward(
            x, p, tm=tm, tk=tk, n_valid=num_images, single_buffer_weights=True)
    except Exception:
        # Fallback for jax versions without BlockSpec(pipeline_mode=pl.Buffered(1)) support.
        logits_all, prob_all, araw_all = _fused_forward(
            x, p, tm=tm, tk=tk, n_valid=num_images, single_buffer_weights=False)

    outputs = []
    for b in range(n_bags):
        logits = logits_all[b]                       # (1, C)
        y_prob = prob_all[b]                         # (1, C)
        y_hat = jnp.argmax(logits, axis=-1)          # (1,)  (torch.topk(.,1) index)
        a_raw = araw_all[b, :, :num_images]          # (1, N) raw (pre-softmax) attention
        outputs.append((logits, y_prob, y_hat, a_raw, {}))
    return outputs


def init_params(key, in_dim, hidden_dim, feat_dim, attn_dim, n_classes):
    ks = jax.random.split(key, 5)

    def lin(k, fan_in, fan_out):
        scale = 1.0 / jnp.sqrt(fan_in)
        return jax.random.uniform(k, (fan_in, fan_out), jnp.float32, -scale, scale)

    return {
        "fe_w1": lin(ks[0], in_dim, hidden_dim),
        "fe_b1": jnp.zeros((1, hidden_dim), jnp.float32),
        "fe_w2": lin(ks[1], hidden_dim, feat_dim),
        "fe_b2": jnp.zeros((1, feat_dim), jnp.float32),
        "attn_wa": lin(ks[2], feat_dim, attn_dim),
        "attn_ba": jnp.zeros((1, attn_dim), jnp.float32),
        "attn_wb": lin(ks[3], feat_dim, attn_dim),
        "attn_bb": jnp.zeros((1, attn_dim), jnp.float32),
        "attn_wc": lin(ks[4], attn_dim, 1),
        "attn_bc": jnp.zeros((1, 1), jnp.float32),
        "cls_w": lin(jax.random.fold_in(key, 99), feat_dim, n_classes),
        "cls_b": jnp.zeros((1, n_classes), jnp.float32),
    }


# ---------------------------------------------------------------------------
# Pure-JAX reference (f32) for a sanity check
# ---------------------------------------------------------------------------
def _reference_forward(x_list, params):
    outs = []
    for xi in x_list:
        b, n, c, h, w = xi.shape
        xf = xi.reshape(b * n, c * h * w).astype(jnp.float32)
        h1 = jnp.maximum(xf @ params["fe_w1"] + params["fe_b1"], 0.0)
        feats = h1 @ params["fe_w2"] + params["fe_b2"]
        hh = feats.reshape(b, n, -1)[0]
        a = jnp.tanh(hh @ params["attn_wa"] + params["attn_ba"])
        g = jax.nn.sigmoid(hh @ params["attn_wb"] + params["attn_bb"])
        A = (a * g) @ params["attn_wc"] + params["attn_bc"]        # (n, 1)
        A_soft = jax.nn.softmax(A, axis=0)
        m = jnp.sum(A_soft * hh, axis=0, keepdims=True)
        logits = m @ params["cls_w"] + params["cls_b"]
        prob = jax.nn.softmax(logits, axis=-1)
        outs.append((logits, prob, A.T))
    return outs


def _check(outputs, refs, num_images, n_classes, atol):
    for (logits, y_prob, y_hat, a_raw, _), (rl, rp, ra) in zip(outputs, refs):
        jax.block_until_ready((logits, y_prob, y_hat, a_raw))
        assert logits.shape == (1, n_classes)
        assert y_prob.shape == (1, n_classes)
        assert y_hat.shape == (1,)
        assert a_raw.shape == (1, num_images)
        # bf16 MXU path vs f32 reference: loose tolerances
        assert jnp.allclose(logits, rl, atol=atol, rtol=atol)
        assert jnp.allclose(y_prob, rp, atol=atol, rtol=atol)
        assert jnp.allclose(a_raw, ra, atol=atol, rtol=atol)


if __name__ == "__main__":
    key = jax.random.PRNGKey(0)
    label = jnp.array([1], dtype=jnp.int32)  # unused (instance_eval not modeled)

    # --- test 1: tiny bags (single instance tile, single K chunk) ---------------------------
    BATCH, NUM_IMAGES, C, H, W = 1, 8, 4, 16, 16
    HIDDEN, FEAT, ATTN_D, N_CLASSES = 128, 128, 64, 2
    k_params, k_x0, k_x1 = jax.random.split(key, 3)
    params = init_params(k_params, C * H * W, HIDDEN, FEAT, ATTN_D, N_CLASSES)
    x_list = [
        jax.random.normal(k_x0, (BATCH, NUM_IMAGES, C, H, W), jnp.float32),
        jax.random.normal(k_x1, (BATCH, NUM_IMAGES, C, H, W), jnp.float32),
    ]
    _check(integrated_model_forward(x_list, params, label=label),
           _reference_forward(x_list, params), NUM_IMAGES, N_CLASSES, atol=5e-2)

    # --- test 2: same inputs, forced small K chunk (exercises Din K-tiling path) ------------
    _check(integrated_model_forward(x_list, params, label=label, max_k_tile=256),
           _reference_forward(x_list, params), NUM_IMAGES, N_CLASSES, atol=5e-2)

    # --- test 3: many instances (multi-tile online softmax + lane-dense A_raw row) ----------
    NUM_IMAGES2, C2, H2, W2 = 300, 3, 16, 16
    k_params2, k_x2 = jax.random.split(jax.random.fold_in(key, 7), 2)
    params2 = init_params(k_params2, C2 * H2 * W2, HIDDEN, FEAT, ATTN_D, N_CLASSES)
    x_list2 = [jax.random.normal(k_x2, (1, NUM_IMAGES2, C2, H2, W2), jnp.float32)]
    _check(integrated_model_forward(x_list2, params2, label=label),
           _reference_forward(x_list2, params2), NUM_IMAGES2, N_CLASSES, atol=8e-2)

    print("KERNEL_OK")
</pallas_src>

<mosaic_0001>
module attributes {stable_mosaic.version = 11 : i64} {
  func.func @_fused_mil_kernel(%arg0: i32, %arg1: i32, %arg2: i32, %arg3: memref<1x16x1024xbf16, #tpu.memory_space<vmem>>, %arg4: memref<1024x128xbf16, #tpu.memory_space<vmem>>, %arg5: memref<1x128xf32, #tpu.memory_space<vmem>>, %arg6: memref<128x128xbf16, #tpu.memory_space<vmem>>, %arg7: memref<1x128xf32, #tpu.memory_space<vmem>>, %arg8: memref<128x64xbf16, #tpu.memory_space<vmem>>, %arg9: memref<1x64xf32, #tpu.memory_space<vmem>>, %arg10: memref<128x64xbf16, #tpu.memory_space<vmem>>, %arg11: memref<1x64xf32, #tpu.memory_space<vmem>>, %arg12: memref<1x64xbf16, #tpu.memory_space<vmem>>, %arg13: memref<1x1xf32, #tpu.memory_space<vmem>>, %arg14: memref<128x2xbf16, #tpu.memory_space<vmem>>, %arg15: memref<1x2xf32, #tpu.memory_space<vmem>>, %arg16: memref<1x1x2xf32, #tpu.memory_space<vmem>>, %arg17: memref<1x1x2xf32, #tpu.memory_space<vmem>>, %arg18: memref<1x1x128xf32, #tpu.memory_space<vmem>>, %arg19: memref<8x128xf32, #tpu.memory_space<vmem>>, %arg20: memref<1x1xf32, #tpu.memory_space<vmem>>, %arg21: memref<1x1xf32, #tpu.memory_space<vmem>>, %arg22: memref<1x128xf32, #tpu.memory_space<vmem>>, %arg23: memref<1x128xf32, #tpu.memory_space<vmem>>) attributes {dimension_semantics = [#tpu.dimension_semantics<parallel>, #tpu.dimension_semantics<arbitrary>, #tpu.dimension_semantics<arbitrary>], iteration_bounds = array<i64: 2, 1, 1>, scalar_prefetch = 0 : i64, scratch_operands = 5 : i64, tpu.core_type = #tpu.core_type<tc>, window_params = [{transform_indices = @transform_0, window_bounds = array<i64: 1, 16, 1024>}, {pipeline_mode = #tpu.pipeline_mode<synchronous>, transform_indices = @transform_1, window_bounds = array<i64: 1024, 128>}, {pipeline_mode = #tpu.pipeline_mode<synchronous>, transform_indices = @transform_2, window_bounds = array<i64: 1, 128>}, {pipeline_mode = #tpu.pipeline_mode<synchronous>, transform_indices = @transform_3, window_bounds = array<i64: 128, 128>}, {pipeline_mode = #tpu.pipeline_mode<synchronous>, transform_indices = @transform_4, window_bounds = array<i64: 1, 128>}, {pipeline_mode = #tpu.pipeline_mode<synchronous>, transform_indices = @transform_5, window_bounds = array<i64: 128, 64>}, {pipeline_mode = #tpu.pipeline_mode<synchronous>, transform_indices = @transform_6, window_bounds = array<i64: 1, 64>}, {pipeline_mode = #tpu.pipeline_mode<synchronous>, transform_indices = @transform_7, window_bounds = array<i64: 128, 64>}, {pipeline_mode = #tpu.pipeline_mode<synchronous>, transform_indices = @transform_8, window_bounds = array<i64: 1, 64>}, {pipeline_mode = #tpu.pipeline_mode<synchronous>, transform_indices = @transform_9, window_bounds = array<i64: 1, 64>}, {pipeline_mode = #tpu.pipeline_mode<synchronous>, transform_indices = @transform_10, window_bounds = array<i64: 1, 1>}, {pipeline_mode = #tpu.pipeline_mode<synchronous>, transform_indices = @transform_11, window_bounds = array<i64: 128, 2>}, {pipeline_mode = #tpu.pipeline_mode<synchronous>, transform_indices = @transform_12, window_bounds = array<i64: 1, 2>}, {transform_indices = @transform_13, window_bounds = array<i64: 1, 1, 2>}, {transform_indices = @transform_14, window_bounds = array<i64: 1, 1, 2>}, {transform_indices = @transform_15, window_bounds = array<i64: 1, 1, 128>}]} {
    %c0_i32 = arith.constant 0 : i32
    %0 = arith.cmpi eq, %arg1, %c0_i32 : i32
    %c0_i32_0 = arith.constant 0 : i32
    %1 = arith.cmpi eq, %arg2, %c0_i32_0 : i32
    %2 = arith.andi %0, %1 : i1
    %3 = arith.extui %2 : i1 to i32
    %c0_i32_1 = arith.constant 0 : i32
    %4 = arith.cmpi ne, %3, %c0_i32_1 : i32
    scf.if %4 {
      %cst_50 = arith.constant 0xFF800000 : f32
      %79 = vector.broadcast %cst_50 : f32 to vector<1x1xf32>
      %c0_51 = arith.constant 0 : index
      %c0_52 = arith.constant 0 : index
      %80 = vector.load %arg20[%c0_51, %c0_52] : memref<1x1xf32, #tpu.memory_space<vmem>>, vector<1x1xf32>
      tpu.vector_store %arg20[%c0_51, %c0_52], %79 {strides = array<i32>} : memref<1x1xf32, #tpu.memory_space<vmem>>, vector<1x1xf32>,
      %cst_53 = arith.constant 0.000000e+00 : f32
      %81 = vector.broadcast %cst_53 : f32 to vector<1x1xf32>
      %c0_54 = arith.constant 0 : index
      %c0_55 = arith.constant 0 : index
      %82 = vector.load %arg21[%c0_54, %c0_55] : memref<1x1xf32, #tpu.memory_space<vmem>>, vector<1x1xf32>
      tpu.vector_store %arg21[%c0_54, %c0_55], %81 {strides = array<i32>} : memref<1x1xf32, #tpu.memory_space<vmem>>, vector<1x1xf32>,
      %cst_56 = arith.constant 0.000000e+00 : f32
      %83 = vector.broadcast %cst_56 : f32 to vector<1x128xf32>
      %c0_57 = arith.constant 0 : index
      %c0_58 = arith.constant 0 : index
      %84 = vector.load %arg22[%c0_57, %c0_58] : memref<1x128xf32, #tpu.memory_space<vmem>>, vector<1x128xf32>
      tpu.vector_store %arg22[%c0_57, %c0_58], %83 {strides = array<i32>} : memref<1x128xf32, #tpu.memory_space<vmem>>, vector<1x128xf32>,
      %cst_59 = arith.constant 0.000000e+00 : f32
      %85 = vector.broadcast %cst_59 : f32 to vector<1x128xf32>
      %c0_60 = arith.constant 0 : index
      %c0_61 = arith.constant 0 : index
      %86 = vector.load %arg23[%c0_60, %c0_61] : memref<1x128xf32, #tpu.memory_space<vmem>>, vector<1x128xf32>
      tpu.vector_store %arg23[%c0_60, %c0_61], %85 {strides = array<i32>} : memref<1x128xf32, #tpu.memory_space<vmem>>, vector<1x128xf32>,
    } else {
    }
    %c0 = arith.constant 0 : index
    %c0_2 = arith.constant 0 : index
    %c0_3 = arith.constant 0 : index
    %5 = vector.load %arg3[%c0, %c0_2, %c0_3] : memref<1x16x1024xbf16, #tpu.memory_space<vmem>>, vector<1x16x1024xbf16>
    %6 = vector.shape_cast %5 : vector<1x16x1024xbf16> to vector<16x1024xbf16>
    %c0_4 = arith.constant 0 : index
    %c0_5 = arith.constant 0 : index
    %7 = vector.load %arg4[%c0_4, %c0_5] : memref<1024x128xbf16, #tpu.memory_space<vmem>>, vector<1024x128xbf16>
    %cst = arith.constant dense<0.000000e+00> : vector<16x128xf32>
    %8 = tpu.matmul %6, %7, %cst {dimension_numbers = #tpu.dot_dimension_numbers<[1], [0], [0], [1], [0, 0, 1, 1], [], []>} : vector<16x1024xbf16>, vector<1024x128xbf16>, vector<16x128xf32> -> vector<16x128xf32>
    %c0_6 = arith.constant 0 : index
    %c0_7 = arith.constant 0 : index
    %9 = vector.load %arg5[%c0_6, %c0_7] : memref<1x128xf32, #tpu.memory_space<vmem>>, vector<1x128xf32>
    %10 = vector.broadcast %9 : vector<1x128xf32> to vector<16x128xf32>
    %11 = arith.addf %8, %10 : vector<16x128xf32>
    %cst_8 = arith.constant 0.000000e+00 : f32
    %12 = vector.broadcast %cst_8 : f32 to vector<16x128xf32>
    %13 = arith.maximumf %11, %12 : vector<16x128xf32>
    %14 = arith.truncf %13 : vector<16x128xf32> to vector<16x128xbf16>
    %c0_9 = arith.constant 0 : index
    %c0_10 = arith.constant 0 : index
    %15 = vector.load %arg6[%c0_9, %c0_10] : memref<128x128xbf16, #tpu.memory_space<vmem>>, vector<128x128xbf16>
    %cst_11 = arith.constant dense<0.000000e+00> : vector<16x128xf32>
    %16 = tpu.matmul %14, %15, %cst_11 {dimension_numbers = #tpu.dot_dimension_numbers<[1], [0], [0], [1], [0, 0, 1, 1], [], []>} : vector<16x128xbf16>, vector<128x128xbf16>, vector<16x128xf32> -> vector<16x128xf32>
    %c0_12 = arith.constant 0 : index
    %c0_13 = arith.constant 0 : index
    %17 = vector.load %arg7[%c0_12, %c0_13] : memref<1x128xf32, #tpu.memory_space<vmem>>, vector<1x128xf32>
    %18 = vector.broadcast %17 : vector<1x128xf32> to vector<16x128xf32>
    %19 = arith.addf %16, %18 : vector<16x128xf32>
    %20 = arith.truncf %19 : vector<16x128xf32> to vector<16x128xbf16>
    %c0_14 = arith.constant 0 : index
    %c0_15 = arith.constant 0 : index
    %21 = vector.load %arg8[%c0_14, %c0_15] : memref<128x64xbf16, #tpu.memory_space<vmem>>, vector<128x64xbf16>
    %cst_16 = arith.constant dense<0.000000e+00> : vector<16x64xf32>
    %22 = tpu.matmul %20, %21, %cst_16 {dimension_numbers = #tpu.dot_dimension_numbers<[1], [0], [0], [1], [0, 0, 1, 1], [], []>} : vector<16x128xbf16>, vector<128x64xbf16>, vector<16x64xf32> -> vector<16x64xf32>
    %c0_17 = arith.constant 0 : index
    %c0_18 = arith.constant 0 : index
    %23 = vector.load %arg9[%c0_17, %c0_18] : memref<1x64xf32, #tpu.memory_space<vmem>>, vector<1x64xf32>
    %24 = vector.broadcast %23 : vector<1x64xf32> to vector<16x64xf32>
    %25 = arith.addf %22, %24 : vector<16x64xf32>
    %26 = math.tanh %25 : vector<16x64xf32>
    %c0_19 = arith.constant 0 : index
    %c0_20 = arith.constant 0 : index
    %27 = vector.load %arg10[%c0_19, %c0_20] : memref<128x64xbf16, #tpu.memory_space<vmem>>, vector<128x64xbf16>
    %cst_21 = arith.constant dense<0.000000e+00> : vector<16x64xf32>
    %28 = tpu.matmul %20, %27, %cst_21 {dimension_numbers = #tpu.dot_dimension_numbers<[1], [0], [0], [1], [0, 0, 1, 1], [], []>} : vector<16x128xbf16>, vector<128x64xbf16>, vector<16x64xf32> -> vector<16x64xf32>
    %c0_22 = arith.constant 0 : index
    %c0_23 = arith.constant 0 : index
    %29 = vector.load %arg11[%c0_22, %c0_23] : memref<1x64xf32, #tpu.memory_space<vmem>>, vector<1x64xf32>
    %30 = vector.broadcast %29 : vector<1x64xf32> to vector<16x64xf32>
    %31 = arith.addf %28, %30 : vector<16x64xf32>
    %32 = arith.negf %31 : vector<16x64xf32>
    %33 = math.exp %32 : vector<16x64xf32>
    %cst_24 = arith.constant 1.000000e+00 : f32
    %34 = vector.broadcast %cst_24 : f32 to vector<16x64xf32>
    %35 = arith.addf %34, %33 : vector<16x64xf32>
    %36 = arith.divf %34, %35 : vector<16x64xf32>
    %37 = arith.mulf %26, %36 : vector<16x64xf32>
    %38 = arith.truncf %37 : vector<16x64xf32> to vector<16x64xbf16>
    %c0_25 = arith.constant 0 : index
    %c0_26 = arith.constant 0 : index
    %39 = vector.load %arg12[%c0_25, %c0_26] : memref<1x64xbf16, #tpu.memory_space<vmem>>, vector<1x64xbf16>
    %cst_27 = arith.constant dense<0.000000e+00> : vector<1x16xf32>
    %40 = tpu.matmul %39, %38, %cst_27 {dimension_numbers = #tpu.dot_dimension_numbers<[1], [1], [0], [0], [0, 0, 1, 0], [], []>} : vector<1x64xbf16>, vector<16x64xbf16>, vector<1x16xf32> -> vector<1x16xf32>
    %c0_28 = arith.constant 0 : index
    %c0_29 = arith.constant 0 : index
    %41 = vector.load %arg13[%c0_28, %c0_29] : memref<1x1xf32, #tpu.memory_space<vmem>>, vector<1x1xf32>
    %42 = vector.broadcast %41 : vector<1x1xf32> to vector<1x16xf32>
    %43 = arith.addf %40, %42 : vector<1x16xf32>
    %c0_30 = arith.constant 0 : index
    %c0_31 = arith.constant 0 : index
    %44 = vector.load %arg23[%c0_30, %c0_31] : memref<1x128xf32, #tpu.memory_space<vmem>>, vector<1x16xf32>
    tpu.vector_store %arg23[%c0_30, %c0_31], %43 {strides = array<i32>} : memref<1x128xf32, #tpu.memory_space<vmem>>, vector<1x16xf32>,
    %45 = tpu.iota {dimensions = array<i32: 1>} : vector<1x16xi32>
    %c16_i32 = arith.constant 16 : i32
    %46 = arith.muli %arg1, %c16_i32 : i32
    %47 = vector.broadcast %46 : i32 to vector<1x16xi32>
    %48 = arith.addi %45, %47 : vector<1x16xi32>
    %c8_i32 = arith.constant 8 : i32
    %49 = vector.broadcast %c8_i32 : i32 to vector<1x16xi32>
    %50 = arith.cmpi slt, %48, %49 : vector<1x16xi32>
    %cst_32 = arith.constant -1.000000e+30 : f32
    %51 = vector.broadcast %cst_32 : f32 to vector<1x16xf32>
    %52 = arith.select %50, %43, %51 : vector<1x16xi1>, vector<1x16xf32>
    %c0_33 = arith.constant 0 : index
    %c0_34 = arith.constant 0 : index
    %53 = vector.load %arg20[%c0_33, %c0_34] : memref<1x1xf32, #tpu.memory_space<vmem>>, vector<1x1xf32>
    %cst_35 = arith.constant dense<0xFF800000> : vector<1xf32>
    %54 = vector.multi_reduction <maximumf>, %52, %cst_35 [1] : vector<1x16xf32> to vector<1xf32>
    %55 = vector.shape_cast %54 : vector<1xf32> to vector<1x1xf32>
    %56 = arith.maximumf %53, %55 : vector<1x1xf32>
    %57 = arith.subf %53, %56 : vector<1x1xf32>
    %58 = math.exp %57 : vector<1x1xf32>
    %59 = vector.broadcast %56 : vector<1x1xf32> to vector<1x16xf32>
    %60 = arith.subf %52, %59 : vector<1x16xf32>
    %61 = math.exp %60 : vector<1x16xf32>
    %c0_36 = arith.constant 0 : index
    %c0_37 = arith.constant 0 : index
    %62 = vector.load %arg21[%c0_36, %c0_37] : memref<1x1xf32, #tpu.memory_space<vmem>>, vector<1x1xf32>
    %63 = arith.mulf %58, %62 : vector<1x1xf32>
    %cst_38 = arith.constant dense<0.000000e+00> : vector<1xf32>
    %64 = vector.multi_reduction <add>, %61, %cst_38 [1] : vector<1x16xf32> to vector<1xf32>
    %65 = vector.shape_cast %64 : vector<1xf32> to vector<1x1xf32>
    %66 = arith.addf %63, %65 : vector<1x1xf32>
    %c0_39 = arith.constant 0 : index
    %c0_40 = arith.constant 0 : index
    %67 = vector.load %arg21[%c0_39, %c0_40] : memref<1x1xf32, #tpu.memory_space<vmem>>, vector<1x1xf32>
    tpu.vector_store %arg21[%c0_39, %c0_40], %66 {strides = array<i32>} : memref<1x1xf32, #tpu.memory_space<vmem>>, vector<1x1xf32>,
    %c0_41 = arith.constant 0 : index
    %c0_42 = arith.constant 0 : index
    %68 = vector.load %arg22[%c0_41, %c0_42] : memref<1x128xf32, #tpu.memory_space<vmem>>, vector<1x128xf32>
    %69 = vector.broadcast %58 : vector<1x1xf32> to vector<1x128xf32>
    %70 = arith.mulf %69, %68 : vector<1x128xf32>
    %71 = arith.truncf %61 : vector<1x16xf32> to vector<1x16xbf16>
    %cst_43 = arith.constant dense<0.000000e+00> : vector<1x128xf32>
    %72 = tpu.matmul %71, %20, %cst_43 {dimension_numbers = #tpu.dot_dimension_numbers<[1], [0], [0], [1], [0, 0, 1, 1], [], []>} : vector<1x16xbf16>, vector<16x128xbf16>, vector<1x128xf32> -> vector<1x128xf32>
    %73 = arith.addf %70, %72 : vector<1x128xf32>
    %c0_44 = arith.constant 0 : index
    %c0_45 = arith.constant 0 : index
    %74 = vector.load %arg22[%c0_44, %c0_45] : memref<1x128xf32, #tpu.memory_space<vmem>>, vector<1x128xf32>
    tpu.vector_store %arg22[%c0_44, %c0_45], %73 {strides = array<i32>} : memref<1x128xf32, #tpu.memory_space<vmem>>, vector<1x128xf32>,
    %c0_46 = arith.constant 0 : index
    %c0_47 = arith.constant 0 : index
    %75 = vector.load %arg20[%c0_46, %c0_47] : memref<1x1xf32, #tpu.memory_space<vmem>>, vector<1x1xf32>
    tpu.vector_store %arg20[%c0_46, %c0_47], %56 {strides = array<i32>} : memref<1x1xf32, #tpu.memory_space<vmem>>, vector<1x1xf32>,
    %c0_i32_48 = arith.constant 0 : i32
    %76 = arith.cmpi eq, %arg1, %c0_i32_48 : i32
    %77 = arith.extui %76 : i1 to i32
    %c0_i32_49 = arith.constant 0 : i32
    %78 = arith.cmpi ne, %77, %c0_i32_49 : i32
    scf.if %78 {
      %c0_50 = arith.constant 0 : index
      %c0_51 = arith.constant 0 : index
      %79 = vector.load %arg22[%c0_50, %c0_51] : memref<1x128xf32, #tpu.memory_space<vmem>>, vector<1x128xf32>
      %c0_52 = arith.constant 0 : index
      %c0_53 = arith.constant 0 : index
      %80 = vector.load %arg21[%c0_52, %c0_53] : memref<1x1xf32, #tpu.memory_space<vmem>>, vector<1x1xf32>
      %81 = vector.broadcast %80 : vector<1x1xf32> to vector<1x128xf32>
      %82 = arith.divf %79, %81 : vector<1x128xf32>
      %83 = arith.truncf %82 : vector<1x128xf32> to vector<1x128xbf16>
      %c0_54 = arith.constant 0 : index
      %c0_55 = arith.constant 0 : index
      %84 = vector.load %arg14[%c0_54, %c0_55] : memref<128x2xbf16, #tpu.memory_space<vmem>>, vector<128x2xbf16>
      %cst_56 = arith.constant dense<0.000000e+00> : vector<1x2xf32>
      %85 = tpu.matmul %83, %84, %cst_56 {dimension_numbers = #tpu.dot_dimension_numbers<[1], [0], [0], [1], [0, 0, 1, 1], [], []>} : vector<1x128xbf16>, vector<128x2xbf16>, vector<1x2xf32> -> vector<1x2xf32>
      %c0_57 = arith.constant 0 : index
      %c0_58 = arith.constant 0 : index
      %86 = vector.load %arg15[%c0_57, %c0_58] : memref<1x2xf32, #tpu.memory_space<vmem>>, vector<1x2xf32>
      %87 = arith.addf %85, %86 : vector<1x2xf32>
      %c0_59 = arith.constant 0 : index
      %c0_60 = arith.constant 0 : index
      %c0_61 = arith.constant 0 : index
      %88 = vector.load %arg16[%c0_59, %c0_60, %c0_61] : memref<1x1x2xf32, #tpu.memory_space<vmem>>, vector<1x1x2xf32>
      %89 = vector.shape_cast %88 : vector<1x1x2xf32> to vector<1x2xf32>
      %90 = vector.shape_cast %87 : vector<1x2xf32> to vector<1x1x2xf32>
      tpu.vector_store %arg16[%c0_59, %c0_60, %c0_61], %90 {strides = array<i32>} : memref<1x1x2xf32, #tpu.memory_space<vmem>>, vector<1x1x2xf32>,
      %cst_62 = arith.constant dense<0xFF800000> : vector<1xf32>
      %91 = vector.multi_reduction <maximumf>, %87, %cst_62 [1] : vector<1x2xf32> to vector<1xf32>
      %92 = vector.shape_cast %91 : vector<1xf32> to vector<1x1xf32>
      %93 = vector.broadcast %92 : vector<1x1xf32> to vector<1x2xf32>
      %94 = arith.subf %87, %93 : vector<1x2xf32>
      %95 = math.exp %94 : vector<1x2xf32>
      %cst_63 = arith.constant dense<0.000000e+00> : vector<1xf32>
      %96 = vector.multi_reduction <add>, %95, %cst_63 [1] : vector<1x2xf32> to vector<1xf32>
      %97 = vector.shape_cast %96 : vector<1xf32> to vector<1x1xf32>
      %98 = vector.broadcast %97 : vector<1x1xf32> to vector<1x2xf32>
      %99 = arith.divf %95, %98 : vector<1x2xf32>
      %c0_64 = arith.constant 0 : index
      %c0_65 = arith.constant 0 : index
      %c0_66 = arith.constant 0 : index
      %100 = vector.load %arg17[%c0_64, %c0_65, %c0_66] : memref<1x1x2xf32, #tpu.memory_space<vmem>>, vector<1x1x2xf32>
      %101 = vector.shape_cast %100 : vector<1x1x2xf32> to vector<1x2xf32>
      %102 = vector.shape_cast %99 : vector<1x2xf32> to vector<1x1x2xf32>
      tpu.vector_store %arg17[%c0_64, %c0_65, %c0_66], %102 {strides = array<i32>} : memref<1x1x2xf32, #tpu.memory_space<vmem>>, vector<1x1x2xf32>,
      %c0_67 = arith.constant 0 : index
      %c0_68 = arith.constant 0 : index
      %103 = vector.load %arg23[%c0_67, %c0_68] : memref<1x128xf32, #tpu.memory_space<vmem>>, vector<1x128xf32>
      %c0_69 = arith.constant 0 : index
      %c0_70 = arith.constant 0 : index
      %c0_71 = arith.constant 0 : index
      %104 = vector.load %arg18[%c0_69, %c0_70, %c0_71] : memref<1x1x128xf32, #tpu.memory_space<vmem>>, vector<1x1x128xf32>
      %105 = vector.shape_cast %104 : vector<1x1x128xf32> to vector<1x128xf32>
      %106 = vector.shape_cast %103 : vector<1x128xf32> to vector<1x1x128xf32>
      tpu.vector_store %arg18[%c0_69, %c0_70, %c0_71], %106 {strides = array<i32>} : memref<1x1x128xf32, #tpu.memory_space<vmem>>, vector<1x1x128xf32>,
    } else {
    }
    return
  }
  func.func @transform_0(%arg0: i32, %arg1: i32, %arg2: i32) -> (i32, i32, i32) {
    %c0_i32 = arith.constant 0 : i32
    return %arg0, %arg1, %arg2 : i32, i32, i32
  }
  func.func @transform_1(%arg0: i32, %arg1: i32, %arg2: i32) -> (i32, i32) {
    %c0_i32 = arith.constant 0 : i32
    %c0_i32_0 = arith.constant 0 : i32
    %c0_i32_1 = arith.constant 0 : i32
    return %c0_i32, %c0_i32_0 : i32, i32
  }
  func.func @transform_2(%arg0: i32, %arg1: i32, %arg2: i32) -> (i32, i32) {
    %c0_i32 = arith.constant 0 : i32
    %c0_i32_0 = arith.constant 0 : i32
    %c0_i32_1 = arith.constant 0 : i32
    return %c0_i32, %c0_i32_0 : i32, i32
  }
  func.func @transform_3(%arg0: i32, %arg1: i32, %arg2: i32) -> (i32, i32) {
    %c0_i32 = arith.constant 0 : i32
    %c0_i32_0 = arith.constant 0 : i32
    %c0_i32_1 = arith.constant 0 : i32
    return %c0_i32, %c0_i32_0 : i32, i32
  }
  func.func @transform_4(%arg0: i32, %arg1: i32, %arg2: i32) -> (i32, i32) {
    %c0_i32 = arith.constant 0 : i32
    %c0_i32_0 = arith.constant 0 : i32
    %c0_i32_1 = arith.constant 0 : i32
    return %c0_i32, %c0_i32_0 : i32, i32
  }
  func.func @transform_5(%arg0: i32, %arg1: i32, %arg2: i32) -> (i32, i32) {
    %c0_i32 = arith.constant 0 : i32
    %c0_i32_0 = arith.constant 0 : i32
    %c0_i32_1 = arith.constant 0 : i32
    return %c0_i32, %c0_i32_0 : i32, i32
  }
  func.func @transform_6(%arg0: i32, %arg1: i32, %arg2: i32) -> (i32, i32) {
    %c0_i32 = arith.constant 0 : i32
    %c0_i32_0 = arith.constant 0 : i32
    %c0_i32_1 = arith.constant 0 : i32
    return %c0_i32, %c0_i32_0 : i32, i32
  }
  func.func @transform_7(%arg0: i32, %arg1: i32, %arg2: i32) -> (i32, i32) {
    %c0_i32 = arith.constant 0 : i32
    %c0_i32_0 = arith.constant 0 : i32
    %c0_i32_1 = arith.constant 0 : i32
    return %c0_i32, %c0_i32_0 : i32, i32
  }
  func.func @transform_8(%arg0: i32, %arg1: i32, %arg2: i32) -> (i32, i32) {
    %c0_i32 = arith.constant 0 : i32
    %c0_i32_0 = arith.constant 0 : i32
    %c0_i32_1 = arith.constant 0 : i32
    return %c0_i32, %c0_i32_0 : i32, i32
  }
  func.func @transform_9(%arg0: i32, %arg1: i32, %arg2: i32) -> (i32, i32) {
    %c0_i32 = arith.constant 0 : i32
    %c0_i32_0 = arith.constant 0 : i32
    %c0_i32_1 = arith.constant 0 : i32
    return %c0_i32, %c0_i32_0 : i32, i32
  }
  func.func @transform_10(%arg0: i32, %arg1: i32, %arg2: i32) -> (i32, i32) {
    %c0_i32 = arith.constant 0 : i32
    %c0_i32_0 = arith.constant 0 : i32
    %c0_i32_1 = arith.constant 0 : i32
    return %c0_i32, %c0_i32_0 : i32, i32
  }
  func.func @transform_11(%arg0: i32, %arg1: i32, %arg2: i32) -> (i32, i32) {
    %c0_i32 = arith.constant 0 : i32
    %c0_i32_0 = arith.constant 0 : i32
    %c0_i32_1 = arith.constant 0 : i32
    return %c0_i32, %c0_i32_0 : i32, i32
  }
  func.func @transform_12(%arg0: i32, %arg1: i32, %arg2: i32) -> (i32, i32) {
    %c0_i32 = arith.constant 0 : i32
    %c0_i32_0 = arith.constant 0 : i32
    %c0_i32_1 = arith.constant 0 : i32
    return %c0_i32, %c0_i32_0 : i32, i32
  }
  func.func @transform_13(%arg0: i32, %arg1: i32, %arg2: i32) -> (i32, i32, i32) {
    %c0_i32 = arith.constant 0 : i32
    %c0_i32_0 = arith.constant 0 : i32
    %c0_i32_1 = arith.constant 0 : i32
    return %arg0, %c0_i32, %c0_i32_0 : i32, i32, i32
  }
  func.func @transform_14(%arg0: i32, %arg1: i32, %arg2: i32) -> (i32, i32, i32) {
    %c0_i32 = arith.constant 0 : i32
    %c0_i32_0 = arith.constant 0 : i32
    %c0_i32_1 = arith.constant 0 : i32
    return %arg0, %c0_i32, %c0_i32_0 : i32, i32, i32
  }
  func.func @transform_15(%arg0: i32, %arg1: i32, %arg2: i32) -> (i32, i32, i32) {
    %c0_i32 = arith.constant 0 : i32
    %c0_i32_0 = arith.constant 0 : i32
    %c0_i32_1 = arith.constant 0 : i32
    return %arg0, %c0_i32, %c0_i32_0 : i32, i32, i32
  }
}

module attributes {stable_mosaic.version = 11 : i64} {
  func.func @_fused_mil_kernel(%arg0: i32, %arg1: i32, %arg2: i32, %arg3: memref<1x16x1024xbf16, #tpu.memory_space<vmem>>, %arg4: memref<1024x128xbf16, #tpu.memory_space<vmem>>, %arg5: memref<1x128xf32, #tpu.memory_space<vmem>>, %arg6: memref<128x128xbf16, #tpu.memory_space<vmem>>, %arg7: memref<1x128xf32, #tpu.memory_space<vmem>>, %arg8: memref<128x64xbf16, #tpu.memory_space<vmem>>, %arg9: memref<1x64xf32, #tpu.memory_space<vmem>>, %arg10: memref<128x64xbf16, #tpu.memory_space<vmem>>, %arg11: memref<1x64xf32, #tpu.memory_space<vmem>>, %arg12: memref<1x64xbf16, #tpu.memory_space<vmem>>, %arg13: memref<1x1xf32, #tpu.memory_space<vmem>>, %arg14: memref<128x2xbf16, #tpu.memory_space<vmem>>, %arg15: memref<1x2xf32, #tpu.memory_space<vmem>>, %arg16: memref<1x1x2xf32, #tpu.memory_space<vmem>>, %arg17: memref<1x1x2xf32, #tpu.memory_space<vmem>>, %arg18: memref<1x1x128xf32, #tpu.memory_space<vmem>>, %arg19: memref<8x128xf32, #tpu.memory_space<vmem>>, %arg20: memref<1x1xf32, #tpu.memory_space<vmem>>, %arg21: memref<1x1xf32, #tpu.memory_space<vmem>>, %arg22: memref<1x128xf32, #tpu.memory_space<vmem>>, %arg23: memref<1x128xf32, #tpu.memory_space<vmem>>) attributes {dimension_semantics = [#tpu.dimension_semantics<parallel>, #tpu.dimension_semantics<arbitrary>, #tpu.dimension_semantics<arbitrary>], iteration_bounds = array<i64: 2, 1, 1>, scalar_prefetch = 0 : i64, scratch_operands = 5 : i64, tpu.core_type = #tpu.core_type<tc>, window_params = [{transform_indices = @transform_0, window_bounds = array<i64: 1, 16, 1024>}, {pipeline_mode = #tpu.pipeline_mode<synchronous>, transform_indices = @transform_1, window_bounds = array<i64: 1024, 128>}, {pipeline_mode = #tpu.pipeline_mode<synchronous>, transform_indices = @transform_2, window_bounds = array<i64: 1, 128>}, {pipeline_mode = #tpu.pipeline_mode<synchronous>, transform_indices = @transform_3, window_bounds = array<i64: 128, 128>}, {pipeline_mode = #tpu.pipeline_mode<synchronous>, transform_indices = @transform_4, window_bounds = array<i64: 1, 128>}, {pipeline_mode = #tpu.pipeline_mode<synchronous>, transform_indices = @transform_5, window_bounds = array<i64: 128, 64>}, {pipeline_mode = #tpu.pipeline_mode<synchronous>, transform_indices = @transform_6, window_bounds = array<i64: 1, 64>}, {pipeline_mode = #tpu.pipeline_mode<synchronous>, transform_indices = @transform_7, window_bounds = array<i64: 128, 64>}, {pipeline_mode = #tpu.pipeline_mode<synchronous>, transform_indices = @transform_8, window_bounds = array<i64: 1, 64>}, {pipeline_mode = #tpu.pipeline_mode<synchronous>, transform_indices = @transform_9, window_bounds = array<i64: 1, 64>}, {pipeline_mode = #tpu.pipeline_mode<synchronous>, transform_indices = @transform_10, window_bounds = array<i64: 1, 1>}, {pipeline_mode = #tpu.pipeline_mode<synchronous>, transform_indices = @transform_11, window_bounds = array<i64: 128, 2>}, {pipeline_mode = #tpu.pipeline_mode<synchronous>, transform_indices = @transform_12, window_bounds = array<i64: 1, 2>}, {transform_indices = @transform_13, window_bounds = array<i64: 1, 1, 2>}, {transform_indices = @transform_14, window_bounds = array<i64: 1, 1, 2>}, {transform_indices = @transform_15, window_bounds = array<i64: 1, 1, 128>}]} {
    %c0_i32 = arith.constant 0 : i32
    %0 = arith.cmpi eq, %arg1, %c0_i32 : i32
    %c0_i32_0 = arith.constant 0 : i32
    %1 = arith.cmpi eq, %arg2, %c0_i32_0 : i32
    %2 = arith.andi %0, %1 : i1
    %3 = arith.extui %2 : i1 to i32
    %c0_i32_1 = arith.constant 0 : i32
    %4 = arith.cmpi ne, %3, %c0_i32_1 : i32
    scf.if %4 {
      %cst_50 = arith.constant 0xFF800000 : f32
      %79 = vector.broadcast %cst_50 : f32 to vector<1x1xf32>
      %c0_51 = arith.constant 0 : index
      %c0_52 = arith.constant 0 : index
      %80 = vector.load %arg20[%c0_51, %c0_52] : memref<1x1xf32, #tpu.memory_space<vmem>>, vector<1x1xf32>
      tpu.vector_store %arg20[%c0_51, %c0_52], %79 {strides = array<i32>} : memref<1x1xf32, #tpu.memory_space<vmem>>, vector<1x1xf32>,
      %cst_53 = arith.constant 0.000000e+00 : f32
      %81 = vector.broadcast %cst_53 : f32 to vector<1x1xf32>
      %c0_54 = arith.constant 0 : index
      %c0_55 = arith.constant 0 : index
      %82 = vector.load %arg21[%c0_54, %c0_55] : memref<1x1xf32, #tpu.memory_space<vmem>>, vector<1x1xf32>
      tpu.vector_store %arg21[%c0_54, %c0_55], %81 {strides = array<i32>} : memref<1x1xf32, #tpu.memory_space<vmem>>, vector<1x1xf32>,
      %cst_56 = arith.constant 0.000000e+00 : f32
      %83 = vector.broadcast %cst_56 : f32 to vector<1x128xf32>
      %c0_57 = arith.constant 0 : index
      %c0_58 = arith.constant 0 : index
      %84 = vector.load %arg22[%c0_57, %c0_58] : memref<1x128xf32, #tpu.memory_space<vmem>>, vector<1x128xf32>
      tpu.vector_store %arg22[%c0_57, %c0_58], %83 {strides = array<i32>} : memref<1x128xf32, #tpu.memory_space<vmem>>, vector<1x128xf32>,
      %cst_59 = arith.constant 0.000000e+00 : f32
      %85 = vector.broadcast %cst_59 : f32 to vector<1x128xf32>
      %c0_60 = arith.constant 0 : index
      %c0_61 = arith.constant 0 : index
      %86 = vector.load %arg23[%c0_60, %c0_61] : memref<1x128xf32, #tpu.memory_space<vmem>>, vector<1x128xf32>
      tpu.vector_store %arg23[%c0_60, %c0_61], %85 {strides = array<i32>} : memref<1x128xf32, #tpu.memory_space<vmem>>, vector<1x128xf32>,
    } else {
    }
    %c0 = arith.constant 0 : index
    %c0_2 = arith.constant 0 : index
    %c0_3 = arith.constant 0 : index
    %5 = vector.load %arg3[%c0, %c0_2, %c0_3] : memref<1x16x1024xbf16, #tpu.memory_space<vmem>>, vector<1x16x1024xbf16>
    %6 = vector.shape_cast %5 : vector<1x16x1024xbf16> to vector<16x1024xbf16>
    %c0_4 = arith.constant 0 : index
    %c0_5 = arith.constant 0 : index
    %7 = vector.load %arg4[%c0_4, %c0_5] : memref<1024x128xbf16, #tpu.memory_space<vmem>>, vector<1024x128xbf16>
    %cst = arith.constant dense<0.000000e+00> : vector<16x128xf32>
    %8 = tpu.matmul %6, %7, %cst {dimension_numbers = #tpu.dot_dimension_numbers<[1], [0], [0], [1], [0, 0, 1, 1], [], []>} : vector<16x1024xbf16>, vector<1024x128xbf16>, vector<16x128xf32> -> vector<16x128xf32>
    %c0_6 = arith.constant 0 : index
    %c0_7 = arith.constant 0 : index
    %9 = vector.load %arg5[%c0_6, %c0_7] : memref<1x128xf32, #tpu.memory_space<vmem>>, vector<1x128xf32>
    %10 = vector.broadcast %9 : vector<1x128xf32> to vector<16x128xf32>
    %11 = arith.addf %8, %10 : vector<16x128xf32>
    %cst_8 = arith.constant 0.000000e+00 : f32
    %12 = vector.broadcast %cst_8 : f32 to vector<16x128xf32>
    %13 = arith.maximumf %11, %12 : vector<16x128xf32>
    %14 = arith.truncf %13 : vector<16x128xf32> to vector<16x128xbf16>
    %c0_9 = arith.constant 0 : index
    %c0_10 = arith.constant 0 : index
    %15 = vector.load %arg6[%c0_9, %c0_10] : memref<128x128xbf16, #tpu.memory_space<vmem>>, vector<128x128xbf16>
    %cst_11 = arith.constant dense<0.000000e+00> : vector<16x128xf32>
    %16 = tpu.matmul %14, %15, %cst_11 {dimension_numbers = #tpu.dot_dimension_numbers<[1], [0], [0], [1], [0, 0, 1, 1], [], []>} : vector<16x128xbf16>, vector<128x128xbf16>, vector<16x128xf32> -> vector<16x128xf32>
    %c0_12 = arith.constant 0 : index
    %c0_13 = arith.constant 0 : index
    %17 = vector.load %arg7[%c0_12, %c0_13] : memref<1x128xf32, #tpu.memory_space<vmem>>, vector<1x128xf32>
    %18 = vector.broadcast %17 : vector<1x128xf32> to vector<16x128xf32>
    %19 = arith.addf %16, %18 : vector<16x128xf32>
    %20 = arith.truncf %19 : vector<16x128xf32> to vector<16x128xbf16>
    %c0_14 = arith.constant 0 : index
    %c0_15 = arith.constant 0 : index
    %21 = vector.load %arg8[%c0_14, %c0_15] : memref<128x64xbf16, #tpu.memory_space<vmem>>, vector<128x64xbf16>
    %cst_16 = arith.constant dense<0.000000e+00> : vector<16x64xf32>
    %22 = tpu.matmul %20, %21, %cst_16 {dimension_numbers = #tpu.dot_dimension_numbers<[1], [0], [0], [1], [0, 0, 1, 1], [], []>} : vector<16x128xbf16>, vector<128x64xbf16>, vector<16x64xf32> -> vector<16x64xf32>
    %c0_17 = arith.constant 0 : index
    %c0_18 = arith.constant 0 : index
    %23 = vector.load %arg9[%c0_17, %c0_18] : memref<1x64xf32, #tpu.memory_space<vmem>>, vector<1x64xf32>
    %24 = vector.broadcast %23 : vector<1x64xf32> to vector<16x64xf32>
    %25 = arith.addf %22, %24 : vector<16x64xf32>
    %26 = math.tanh %25 : vector<16x64xf32>
    %c0_19 = arith.constant 0 : index
    %c0_20 = arith.constant 0 : index
    %27 = vector.load %arg10[%c0_19, %c0_20] : memref<128x64xbf16, #tpu.memory_space<vmem>>, vector<128x64xbf16>
    %cst_21 = arith.constant dense<0.000000e+00> : vector<16x64xf32>
    %28 = tpu.matmul %20, %27, %cst_21 {dimension_numbers = #tpu.dot_dimension_numbers<[1], [0], [0], [1], [0, 0, 1, 1], [], []>} : vector<16x128xbf16>, vector<128x64xbf16>, vector<16x64xf32> -> vector<16x64xf32>
    %c0_22 = arith.constant 0 : index
    %c0_23 = arith.constant 0 : index
    %29 = vector.load %arg11[%c0_22, %c0_23] : memref<1x64xf32, #tpu.memory_space<vmem>>, vector<1x64xf32>
    %30 = vector.broadcast %29 : vector<1x64xf32> to vector<16x64xf32>
    %31 = arith.addf %28, %30 : vector<16x64xf32>
    %32 = arith.negf %31 : vector<16x64xf32>
    %33 = math.exp %32 : vector<16x64xf32>
    %cst_24 = arith.constant 1.000000e+00 : f32
    %34 = vector.broadcast %cst_24 : f32 to vector<16x64xf32>
    %35 = arith.addf %34, %33 : vector<16x64xf32>
    %36 = arith.divf %34, %35 : vector<16x64xf32>
    %37 = arith.mulf %26, %36 : vector<16x64xf32>
    %38 = arith.truncf %37 : vector<16x64xf32> to vector<16x64xbf16>
    %c0_25 = arith.constant 0 : index
    %c0_26 = arith.constant 0 : index
    %39 = vector.load %arg12[%c0_25, %c0_26] : memref<1x64xbf16, #tpu.memory_space<vmem>>, vector<1x64xbf16>
    %cst_27 = arith.constant dense<0.000000e+00> : vector<1x16xf32>
    %40 = tpu.matmul %39, %38, %cst_27 {dimension_numbers = #tpu.dot_dimension_numbers<[1], [1], [0], [0], [0, 0, 1, 0], [], []>} : vector<1x64xbf16>, vector<16x64xbf16>, vector<1x16xf32> -> vector<1x16xf32>
    %c0_28 = arith.constant 0 : index
    %c0_29 = arith.constant 0 : index
    %41 = vector.load %arg13[%c0_28, %c0_29] : memref<1x1xf32, #tpu.memory_space<vmem>>, vector<1x1xf32>
    %42 = vector.broadcast %41 : vector<1x1xf32> to vector<1x16xf32>
    %43 = arith.addf %40, %42 : vector<1x16xf32>
    %c0_30 = arith.constant 0 : index
    %c0_31 = arith.constant 0 : index
    %44 = vector.load %arg23[%c0_30, %c0_31] : memref<1x128xf32, #tpu.memory_space<vmem>>, vector<1x16xf32>
    tpu.vector_store %arg23[%c0_30, %c0_31], %43 {strides = array<i32>} : memref<1x128xf32, #tpu.memory_space<vmem>>, vector<1x16xf32>,
    %45 = tpu.iota {dimensions = array<i32: 1>} : vector<1x16xi32>
    %c16_i32 = arith.constant 16 : i32
    %46 = arith.muli %arg1, %c16_i32 : i32
    %47 = vector.broadcast %46 : i32 to vector<1x16xi32>
    %48 = arith.addi %45, %47 : vector<1x16xi32>
    %c8_i32 = arith.constant 8 : i32
    %49 = vector.broadcast %c8_i32 : i32 to vector<1x16xi32>
    %50 = arith.cmpi slt, %48, %49 : vector<1x16xi32>
    %cst_32 = arith.constant -1.000000e+30 : f32
    %51 = vector.broadcast %cst_32 : f32 to vector<1x16xf32>
    %52 = arith.select %50, %43, %51 : vector<1x16xi1>, vector<1x16xf32>
    %c0_33 = arith.constant 0 : index
    %c0_34 = arith.constant 0 : index
    %53 = vector.load %arg20[%c0_33, %c0_34] : memref<1x1xf32, #tpu.memory_space<vmem>>, vector<1x1xf32>
    %cst_35 = arith.constant dense<0xFF800000> : vector<1xf32>
    %54 = vector.multi_reduction <maximumf>, %52, %cst_35 [1] : vector<1x16xf32> to vector<1xf32>
    %55 = vector.shape_cast %54 : vector<1xf32> to vector<1x1xf32>
    %56 = arith.maximumf %53, %55 : vector<1x1xf32>
    %57 = arith.subf %53, %56 : vector<1x1xf32>
    %58 = math.exp %57 : vector<1x1xf32>
    %59 = vector.broadcast %56 : vector<1x1xf32> to vector<1x16xf32>
    %60 = arith.subf %52, %59 : vector<1x16xf32>
    %61 = math.exp %60 : vector<1x16xf32>
    %c0_36 = arith.constant 0 : index
    %c0_37 = arith.constant 0 : index
    %62 = vector.load %arg21[%c0_36, %c0_37] : memref<1x1xf32, #tpu.memory_space<vmem>>, vector<1x1xf32>
    %63 = arith.mulf %58, %62 : vector<1x1xf32>
    %cst_38 = arith.constant dense<0.000000e+00> : vector<1xf32>
    %64 = vector.multi_reduction <add>, %61, %cst_38 [1] : vector<1x16xf32> to vector<1xf32>
    %65 = vector.shape_cast %64 : vector<1xf32> to vector<1x1xf32>
    %66 = arith.addf %63, %65 : vector<1x1xf32>
    %c0_39 = arith.constant 0 : index
    %c0_40 = arith.constant 0 : index
    %67 = vector.load %arg21[%c0_39, %c0_40] : memref<1x1xf32, #tpu.memory_space<vmem>>, vector<1x1xf32>
    tpu.vector_store %arg21[%c0_39, %c0_40], %66 {strides = array<i32>} : memref<1x1xf32, #tpu.memory_space<vmem>>, vector<1x1xf32>,
    %c0_41 = arith.constant 0 : index
    %c0_42 = arith.constant 0 : index
    %68 = vector.load %arg22[%c0_41, %c0_42] : memref<1x128xf32, #tpu.memory_space<vmem>>, vector<1x128xf32>
    %69 = vector.broadcast %58 : vector<1x1xf32> to vector<1x128xf32>
    %70 = arith.mulf %69, %68 : vector<1x128xf32>
    %71 = arith.truncf %61 : vector<1x16xf32> to vector<1x16xbf16>
    %cst_43 = arith.constant dense<0.000000e+00> : vector<1x128xf32>
    %72 = tpu.matmul %71, %20, %cst_43 {dimension_numbers = #tpu.dot_dimension_numbers<[1], [0], [0], [1], [0, 0, 1, 1], [], []>} : vector<1x16xbf16>, vector<16x128xbf16>, vector<1x128xf32> -> vector<1x128xf32>
    %73 = arith.addf %70, %72 : vector<1x128xf32>
    %c0_44 = arith.constant 0 : index
    %c0_45 = arith.constant 0 : index
    %74 = vector.load %arg22[%c0_44, %c0_45] : memref<1x128xf32, #tpu.memory_space<vmem>>, vector<1x128xf32>
    tpu.vector_store %arg22[%c0_44, %c0_45], %73 {strides = array<i32>} : memref<1x128xf32, #tpu.memory_space<vmem>>, vector<1x128xf32>,
    %c0_46 = arith.constant 0 : index
    %c0_47 = arith.constant 0 : index
    %75 = vector.load %arg20[%c0_46, %c0_47] : memref<1x1xf32, #tpu.memory_space<vmem>>, vector<1x1xf32>
    tpu.vector_store %arg20[%c0_46, %c0_47], %56 {strides = array<i32>} : memref<1x1xf32, #tpu.memory_space<vmem>>, vector<1x1xf32>,
    %c0_i32_48 = arith.constant 0 : i32
    %76 = arith.cmpi eq, %arg1, %c0_i32_48 : i32
    %77 = arith.extui %76 : i1 to i32
    %c0_i32_49 = arith.constant 0 : i32
    %78 = arith.cmpi ne, %77, %c0_i32_49 : i32
    scf.if %78 {
      %c0_50 = arith.constant 0 : index
      %c0_51 = arith.constant 0 : index
      %79 = vector.load %arg22[%c0_50, %c0_51] : memref<1x128xf32, #tpu.memory_space<vmem>>, vector<1x128xf32>
      %c0_52 = arith.constant 0 : index
      %c0_53 = arith.constant 0 : index
      %80 = vector.load %arg21[%c0_52, %c0_53] : memref<1x1xf32, #tpu.memory_space<vmem>>, vector<1x1xf32>
      %81 = vector.broadcast %80 : vector<1x1xf32> to vector<1x128xf32>
      %82 = arith.divf %79, %81 : vector<1x128xf32>
      %83 = arith.truncf %82 : vector<1x128xf32> to vector<1x128xbf16>
      %c0_54 = arith.constant 0 : index
      %c0_55 = arith.constant 0 : index
      %84 = vector.load %arg14[%c0_54, %c0_55] : memref<128x2xbf16, #tpu.memory_space<vmem>>, vector<128x2xbf16>
      %cst_56 = arith.constant dense<0.000000e+00> : vector<1x2xf32>
      %85 = tpu.matmul %83, %84, %cst_56 {dimension_numbers = #tpu.dot_dimension_numbers<[1], [0], [0], [1], [0, 0, 1, 1], [], []>} : vector<1x128xbf16>, vector<128x2xbf16>, vector<1x2xf32> -> vector<1x2xf32>
      %c0_57 = arith.constant 0 : index
      %c0_58 = arith.constant 0 : index
      %86 = vector.load %arg15[%c0_57, %c0_58] : memref<1x2xf32, #tpu.memory_space<vmem>>, vector<1x2xf32>
      %87 = arith.addf %85, %86 : vector<1x2xf32>
      %c0_59 = arith.constant 0 : index
      %c0_60 = arith.constant 0 : index
      %c0_61 = arith.constant 0 : index
      %88 = vector.load %arg16[%c0_59, %c0_60, %c0_61] : memref<1x1x2xf32, #tpu.memory_space<vmem>>, vector<1x1x2xf32>
      %89 = vector.shape_cast %88 : vector<1x1x2xf32> to vector<1x2xf32>
      %90 = vector.shape_cast %87 : vector<1x2xf32> to vector<1x1x2xf32>
      tpu.vector_store %arg16[%c0_59, %c0_60, %c0_61], %90 {strides = array<i32>} : memref<1x1x2xf32, #tpu.memory_space<vmem>>, vector<1x1x2xf32>,
      %cst_62 = arith.constant dense<0xFF800000> : vector<1xf32>
      %91 = vector.multi_reduction <maximumf>, %87, %cst_62 [1] : vector<1x2xf32> to vector<1xf32>
      %92 = vector.shape_cast %91 : vector<1xf32> to vector<1x1xf32>
      %93 = vector.broadcast %92 : vector<1x1xf32> to vector<1x2xf32>
      %94 = arith.subf %87, %93 : vector<1x2xf32>
      %95 = math.exp %94 : vector<1x2xf32>
      %cst_63 = arith.constant dense<0.000000e+00> : vector<1xf32>
      %96 = vector.multi_reduction <add>, %95, %cst_63 [1] : vector<1x2xf32> to vector<1xf32>
      %97 = vector.shape_cast %96 : vector<1xf32> to vector<1x1xf32>
      %98 = vector.broadcast %97 : vector<1x1xf32> to vector<1x2xf32>
      %99 = arith.divf %95, %98 : vector<1x2xf32>
      %c0_64 = arith.constant 0 : index
      %c0_65 = arith.constant 0 : index
      %c0_66 = arith.constant 0 : index
      %100 = vector.load %arg17[%c0_64, %c0_65, %c0_66] : memref<1x1x2xf32, #tpu.memory_space<vmem>>, vector<1x1x2xf32>
      %101 = vector.shape_cast %100 : vector<1x1x2xf32> to vector<1x2xf32>
      %102 = vector.shape_cast %99 : vector<1x2xf32> to vector<1x1x2xf32>
      tpu.vector_store %arg17[%c0_64, %c0_65, %c0_66], %102 {strides = array<i32>} : memref<1x1x2xf32, #tpu.memory_space<vmem>>, vector<1x1x2xf32>,
      %c0_67 = arith.constant 0 : index
      %c0_68 = arith.constant 0 : index
      %103 = vector.load %arg23[%c0_67, %c0_68] : memref<1x128xf32, #tpu.memory_space<vmem>>, vector<1x128xf32>
      %c0_69 = arith.constant 0 : index
      %c0_70 = arith.constant 0 : index
      %c0_71 = arith.constant 0 : index
      %104 = vector.load %arg18[%c0_69, %c0_70, %c0_71] : memref<1x1x128xf32, #tpu.memory_space<vmem>>, vector<1x1x128xf32>
      %105 = vector.shape_cast %104 : vector<1x1x128xf32> to vector<1x128xf32>
      %106 = vector.shape_cast %103 : vector<1x128xf32> to vector<1x1x128xf32>
      tpu.vector_store %arg18[%c0_69, %c0_70, %c0_71], %106 {strides = array<i32>} : memref<1x1x128xf32, #tpu.memory_space<vmem>>, vector<1x1x128xf32>,
    } else {
    }
    return
  }
  func.func @transform_0(%arg0: i32, %arg1: i32, %arg2: i32) -> (i32, i32, i32) {
    %c0_i32 = arith.constant 0 : i32
    return %arg0, %arg1, %arg2 : i32, i32, i32
  }
  func.func @transform_1(%arg0: i32, %arg1: i32, %arg2: i32) -> (i32, i32) {
    %c0_i32 = arith.constant 0 : i32
    %c0_i32_0 = arith.constant 0 : i32
    %c0_i32_1 = arith.constant 0 : i32
    return %c0_i32, %c0_i32_0 : i32, i32
  }
  func.func @transform_2(%arg0: i32, %arg1: i32, %arg2: i32) -> (i32, i32) {
    %c0_i32 = arith.constant 0 : i32
    %c0_i32_0 = arith.constant 0 : i32
    %c0_i32_1 = arith.constant 0 : i32
    return %c0_i32, %c0_i32_0 : i32, i32
  }
  func.func @transform_3(%arg0: i32, %arg1: i32, %arg2: i32) -> (i32, i32) {
    %c0_i32 = arith.constant 0 : i32
    %c0_i32_0 = arith.constant 0 : i32
    %c0_i32_1 = arith.constant 0 : i32
    return %c0_i32, %c0_i32_0 : i32, i32
  }
  func.func @transform_4(%arg0: i32, %arg1: i32, %arg2: i32) -> (i32, i32) {
    %c0_i32 = arith.constant 0 : i32
    %c0_i32_0 = arith.constant 0 : i32
    %c0_i32_1 = arith.constant 0 : i32
    return %c0_i32, %c0_i32_0 : i32, i32
  }
  func.func @transform_5(%arg0: i32, %arg1: i32, %arg2: i32) -> (i32, i32) {
    %c0_i32 = arith.constant 0 : i32
    %c0_i32_0 = arith.constant 0 : i32
    %c0_i32_1 = arith.constant 0 : i32
    return %c0_i32, %c0_i32_0 : i32, i32
  }
  func.func @transform_6(%arg0: i32, %arg1: i32, %arg2: i32) -> (i32, i32) {
    %c0_i32 = arith.constant 0 : i32
    %c0_i32_0 = arith.constant 0 : i32
    %c0_i32_1 = arith.constant 0 : i32
    return %c0_i32, %c0_i32_0 : i32, i32
  }
  func.func @transform_7(%arg0: i32, %arg1: i32, %arg2: i32) -> (i32, i32) {
    %c0_i32 = arith.constant 0 : i32
    %c0_i32_0 = arith.constant 0 : i32
    %c0_i32_1 = arith.constant 0 : i32
    return %c0_i32, %c0_i32_0 : i32, i32
  }
  func.func @transform_8(%arg0: i32, %arg1: i32, %arg2: i32) -> (i32, i32) {
    %c0_i32 = arith.constant 0 : i32
    %c0_i32_0 = arith.constant 0 : i32
    %c0_i32_1 = arith.constant 0 : i32
    return %c0_i32, %c0_i32_0 : i32, i32
  }
  func.func @transform_9(%arg0: i32, %arg1: i32, %arg2: i32) -> (i32, i32) {
    %c0_i32 = arith.constant 0 : i32
    %c0_i32_0 = arith.constant 0 : i32
    %c0_i32_1 = arith.constant 0 : i32
    return %c0_i32, %c0_i32_0 : i32, i32
  }
  func.func @transform_10(%arg0: i32, %arg1: i32, %arg2: i32) -> (i32, i32) {
    %c0_i32 = arith.constant 0 : i32
    %c0_i32_0 = arith.constant 0 : i32
    %c0_i32_1 = arith.constant 0 : i32
    return %c0_i32, %c0_i32_0 : i32, i32
  }
  func.func @transform_11(%arg0: i32, %arg1: i32, %arg2: i32) -> (i32, i32) {
    %c0_i32 = arith.constant 0 : i32
    %c0_i32_0 = arith.constant 0 : i32
    %c0_i32_1 = arith.constant 0 : i32
    return %c0_i32, %c0_i32_0 : i32, i32
  }
  func.func @transform_12(%arg0: i32, %arg1: i32, %arg2: i32) -> (i32, i32) {
    %c0_i32 = arith.constant 0 : i32
    %c0_i32_0 = arith.constant 0 : i32
    %c0_i32_1 = arith.constant 0 : i32
    return %c0_i32, %c0_i32_0 : i32, i32
  }
  func.func @transform_13(%arg0: i32, %arg1: i32, %arg2: i32) -> (i32, i32, i32) {
    %c0_i32 = arith.constant 0 : i32
    %c0_i32_0 = arith.constant 0 : i32
    %c0_i32_1 = arith.constant 0 : i32
    return %arg0, %c0_i32, %c0_i32_0 : i32, i32, i32
  }
  func.func @transform_14(%arg0: i32, %arg1: i32, %arg2: i32) -> (i32, i32, i32) {
    %c0_i32 = arith.constant 0 : i32
    %c0_i32_0 = arith.constant 0 : i32
    %c0_i32_1 = arith.constant 0 : i32
    return %arg0, %c0_i32, %c0_i32_0 : i32, i32, i32
  }
  func.func @transform_15(%arg0: i32, %arg1: i32, %arg2: i32) -> (i32, i32, i32) {
    %c0_i32 = arith.constant 0 : i32
    %c0_i32_0 = arith.constant 0 : i32
    %c0_i32_1 = arith.constant 0 : i32
    return %arg0, %c0_i32, %c0_i32_0 : i32, i32, i32
  }
}

</mosaic_0001>

<llo_original>
// kernel: tpu_custom_call.1
$region0: #{tpu_custom_call.1}
  #allocation0 [shape = 'u32[]', space=smem, size = 0x4, offset = 0x4, fixed_abs, tag = 'smem constant byte address 0x4 - core index']
  #allocation1 [shape = 'u32[144,128]{1,0:T(1,128)}', space=vmem, size = 0x12000, scoped, tag = 'internal scratch']
  #allocation2 [shape = 'f32[8,128]{1,0:T(8,128)}', space=vmem, size = 0x1000, scoped, tag = 'scratch operand']
  #allocation3 [shape = 'f32[1,1]{1,0:T(1,128)}', space=vmem, size = 0x200, scoped, tag = 'scratch operand']
  #allocation4 [shape = 'f32[1,1]{1,0:T(1,128)}', space=vmem, size = 0x200, scoped, tag = 'scratch operand']
  #allocation5 [shape = 'f32[1,128]{1,0:T(1,128)}', space=vmem, size = 0x200, scoped, tag = 'scratch operand']
  #allocation6 [shape = 'f32[1,128]{1,0:T(1,128)}', space=vmem, size = 0x200, scoped, tag = 'scratch operand']
  #allocation7 [shape = 'f32[1,1]{1,0:T(1,128)S(1)}', space=vmem, size = 0x200, scoped, tag = 'scoped memory for tpu_custom_call.1']
  %s0 = inlined_call_operand.vmem [shape: bf16[2,16,1024], index: 0, kind: input, shape index: {}]
  %s1 = inlined_call_operand.hbm [shape: bf16[1024,128], index: 1, kind: input, shape index: {}]
  %s2 = inlined_call_operand.vmem [shape: f32[1,128], index: 2, kind: input, shape index: {}]
  %s3 = inlined_call_operand.vmem [shape: bf16[128,128], index: 3, kind: input, shape index: {}]
  %s4 = inlined_call_operand.vmem [shape: f32[1,128], index: 4, kind: input, shape index: {}]
  %s5 = inlined_call_operand.vmem [shape: bf16[128,64], index: 5, kind: input, shape index: {}]
  %s6 = inlined_call_operand.vmem [shape: f32[1,64], index: 6, kind: input, shape index: {}]
  %s7 = inlined_call_operand.vmem [shape: bf16[128,64], index: 7, kind: input, shape index: {}]
  %s8 = inlined_call_operand.vmem [shape: f32[1,64], index: 8, kind: input, shape index: {}]
  %s9 = inlined_call_operand.vmem [shape: bf16[1,64], index: 9, kind: input, shape index: {}]
  %s10 = inlined_call_operand.<no memory space> [shape: f32[1,1], index: 10, kind: input, shape index: {}]
  %s11 = inlined_call_operand.vmem [shape: bf16[128,2], index: 11, kind: input, shape index: {}]
  %s12 = inlined_call_operand.vmem [shape: f32[1,2], index: 12, kind: input, shape index: {}]
  %s13 = inlined_call_operand.hbm [shape: f32[2,1,2], index: 13, kind: output, shape index: {0}]
  %s14 = inlined_call_operand.hbm [shape: f32[2,1,2], index: 14, kind: output, shape index: {1}]
  %s15 = inlined_call_operand.hbm [shape: f32[2,1,128], index: 15, kind: output, shape index: {2}]
  %16 = xla_tuple %s13, %s14, %s15
  %s17 = sld [smem:[#allocation0]]
  $region113: #{tpu_custom_call.1} parent=0
    _
  %s19 = ssub.s32 1, %s17
  %s20 = scalar_select 0, %s19, %s17
  %v21 = vstv %s10
  %22 = vst [vmem:[#allocation7] sm:$0x1] %v21
  $region1: #{tpu_custom_call.1} parent=0
    #allocation8 [shape = 'u8[262144]{0}', space=vmem, size = 0x40000, scoped, tag = 'input window, operand 1, single buffered']
    #allocation9 [shape = 's32[2]{0}', space=sflag, size = 0x8, scoped, tag = 'scoped memory for tpu_custom_call.1']
    #allocation10 [shape = 's32[2]{0}', space=sflag, size = 0x8, scoped, tag = 'scoped memory for tpu_custom_call.1']
    #allocation11 [shape = 'u8[1024]{0}', space=vmem, size = 0x400, scoped, tag = 'output window, operand 0']
    #allocation12 [shape = 'u8[1024]{0}', space=vmem, size = 0x400, scoped, tag = 'output window, operand 1']
    #allocation13 [shape = 's32[2]{0}', space=sflag, size = 0x8, scoped, tag = 'scoped memory for tpu_custom_call.1']
    #allocation14 [shape = 'u8[1024]{0}', space=vmem, size = 0x400, scoped, tag = 'output window, operand 2']
    %23 = vsyncpa [#allocation9], 0
    %24 = vsyncpa [#allocation10], 0
    %s25 = scalar_lea.sflag [#allocation10], 1
    %26 = vsyncpa %s25, 0
    %27 = vsyncpa [#allocation13], 0
    %s28 = scalar_lea.sflag [#allocation13], 1
    %29 = vsyncpa %s28, 0
    loop: start=0, step=1, limit=4
    $region2: #{tpu_custom_call.1} parent=1 // loop_pre_header
      _
    $region3: #{tpu_custom_call.1} parent=1 // loop_header
      %s31 = sphi 0, %s35
      %p32 = scmp.ge.s32.totalorder %s31, 4
      %s38 = sphi 0, %s57
      %s39 = sphi 0, %s53
      %s40 = sphi 0, %s49
      %s41 = sphi 0, %s38
      %s42 = sphi 0, %s39
      %s43 = sphi 0, %s40
      %s44 = sphi 0, %s41
      %s45 = sphi 0, %s42
      %s46 = sphi 0, %s43
      %s64 = sphi 0, %s66
      %s67 = sphi 0, %s64
      %s68 = sphi 0, %s67
      %s84 = sphi 0, %s68
      %s88 = sphi 0, %s88
      %s90 = sphi 0, %s88
      %s91 = sphi 0, %s90
      %s105 = sphi 0, %s91
      %s109 = sphi 0, %s109
      %s111 = sphi 0, %s109
      %s112 = sphi 0, %s111
      %s126 = sphi 0, %s112
      %s130 = sphi 0, %s130
      %s132 = sphi 0, %s130
      %s133 = sphi 0, %s132
      %s147 = sphi 0, %s133
      %s151 = sphi 0, %s151
      %s153 = sphi 0, %s151
      %s154 = sphi 0, %s153
      %s168 = sphi 0, %s154
      %s172 = sphi 0, %s172
      %s174 = sphi 0, %s172
      %s175 = sphi 0, %s174
      %s189 = sphi 0, %s175
      %s193 = sphi 0, %s193
      %s195 = sphi 0, %s193
      %s196 = sphi 0, %s195
      %s210 = sphi 0, %s196
      %s214 = sphi 0, %s214
      %s216 = sphi 0, %s214
      %s217 = sphi 0, %s216
      %s231 = sphi 0, %s217
      %s235 = sphi 0, %s235
      %s237 = sphi 0, %s235
      %s238 = sphi 0, %s237
      %s252 = sphi 0, %s238
      %s256 = sphi 0, %s256
      %s258 = sphi 0, %s256
      %s259 = sphi 0, %s258
      %s273 = sphi 0, %s259
      %s277 = sphi 0, %s277
      %s279 = sphi 0, %s277
      %s280 = sphi 0, %s279
      %s294 = sphi 0, %s280
      %s298 = sphi 0, %s298
      %s300 = sphi 0, %s298
      %s301 = sphi 0, %s300
      %s315 = sphi 0, %s301
      %s319 = sphi 0, %s319
      %s321 = sphi 0, %s319
      %s322 = sphi 0, %s321
      %s336 = sphi 0, %s322
      %s342 = sphi 0, %s344
      %s345 = sphi 0, %s342
      %s346 = sphi 0, %s345
      %s362 = sphi 0, %s346
      %s368 = sphi 0, %s370
      %s371 = sphi 0, %s368
      %s372 = sphi 0, %s371
      %s388 = sphi 0, %s372
      %s394 = sphi 0, %s396
      %s397 = sphi 0, %s394
      %s398 = sphi 0, %s397
      %s414 = sphi 0, %s398
    $region4: #{tpu_custom_call.1} parent=1 // loop_header_branch
      %34 = sbr.rel (%p32) target = $region8
    $region5: #{tpu_custom_call.1} parent=1 // loop_body
      %s36 = ssub.s32 %s31, 1
      %s37 = ssub.s32 %s31, 2
      %s47 = sadd.s32 1, %s40
      %p48 = scmp.ge.s32.totalorder %s47, 1
      %s49 = scalar_select %p48, 0, %s47
      %s50 = sadd.s32 1, %s39
      %s51 = scalar_select %p48, %s50, %s39
      %p52 = scmp.ge.s32.totalorder %s51, 1
      %s53 = scalar_select %p52, 0, %s51
      %s54 = sadd.s32 1, %s38
      %s55 = scalar_select %p52, %s54, %s38
      %p56 = scmp.ge.s32.totalorder %s55, 2
      %s57 = scalar_select %p56, 0, %s55
      %s58 = ssub.s32 %s38, %s57
      %s59 = ssub.s32 %s39, %s53
      %s60 = sor.u32 %s58, %s59
      %s61 = ssub.s32 %s40, %s49
      %s62 = sor.u32 %s60, %s61
      %p63 = scmp.eq.s32.totalorder %s62, 0
      %s65 = sadd.s32 %s64, 1
      %s66 = scalar_select %p63, %s64, %s65
      %p69 = pneg %p63
      %p70 = scmp.eq.s32.totalorder %s31, 1
      %p71 = por %p69, %p70
      %p72 = scmp.ne.s32.totalorder %s64, %s67
      %p73 = scmp.eq.s32.totalorder %s31, 0
      %p74 = por %p72, %p73
      %p75 = scmp.ne.s32.totalorder %s64, %s67
      %p76 = scmp.eq.s32.totalorder %s36, 1
      %p77 = por %p75, %p76
      %p78 = scmp.ne.s32.totalorder %s67, %s68
      %p79 = scmp.eq.s32.totalorder %s36, 0
      %p80 = por %p78, %p79
      %p81 = scmp.ne.s32.totalorder %s67, %s68
      %p82 = scmp.eq.s32.totalorder %s37, 1
      %p83 = por %p81, %p82
      %p85 = scmp.ne.s32.totalorder %s68, %s84
      %p86 = scmp.eq.s32.totalorder %s37, 0
      %p87 = por %p85, %p86
      %s89 = sadd.s32 %s88, 1
      %p92 = scmp.eq.s32.totalorder %s31, 1
      %p93 = scmp.ne.s32.totalorder %s88, %s90
      %p94 = scmp.eq.s32.totalorder %s31, 0
      %p95 = por %p93, %p94
      %p96 = scmp.ne.s32.totalorder %s88, %s90
      %p97 = scmp.eq.s32.totalorder %s36, 1
      %p98 = por %p96, %p97
      %p99 = scmp.ne.s32.totalorder %s90, %s91
      %p100 = scmp.eq.s32.totalorder %s36, 0
      %p101 = por %p99, %p100
      %p102 = scmp.ne.s32.totalorder %s90, %s91
      %p103 = scmp.eq.s32.totalorder %s37, 1
      %p104 = por %p102, %p103
      %p106 = scmp.ne.s32.totalorder %s91, %s105
      %p107 = scmp.eq.s32.totalorder %s37, 0
      %p108 = por %p106, %p107
      %s110 = sadd.s32 %s109, 1
      %p113 = scmp.eq.s32.totalorder %s31, 1
      %p114 = scmp.ne.s32.totalorder %s109, %s111
      %p115 = scmp.eq.s32.totalorder %s31, 0
      %p116 = por %p114, %p115
      %p117 = scmp.ne.s32.totalorder %s109, %s111
      %p118 = scmp.eq.s32.totalorder %s36, 1
      %p119 = por %p117, %p118
      %p120 = scmp.ne.s32.totalorder %s111, %s112
      %p121 = scmp.eq.s32.totalorder %s36, 0
      %p122 = por %p120, %p121
      %p123 = scmp.ne.s32.totalorder %s111, %s112
      %p124 = scmp.eq.s32.totalorder %s37, 1
      %p125 = por %p123, %p124
      %p127 = scmp.ne.s32.totalorder %s112, %s126
      %p128 = scmp.eq.s32.totalorder %s37, 0
      %p129 = por %p127, %p128
      %s131 = sadd.s32 %s130, 1
      %p134 = scmp.eq.s32.totalorder %s31, 1
      %p135 = scmp.ne.s32.totalorder %s130, %s132
      %p136 = scmp.eq.s32.totalorder %s31, 0
      %p137 = por %p135, %p136
      %p138 = scmp.ne.s32.totalorder %s130, %s132
      %p139 = scmp.eq.s32.totalorder %s36, 1
      %p140 = por %p138, %p139
      %p141 = scmp.ne.s32.totalorder %s132, %s133
      %p142 = scmp.eq.s32.totalorder %s36, 0
      %p143 = por %p141, %p142
      %p144 = scmp.ne.s32.totalorder %s132, %s133
      %p145 = scmp.eq.s32.totalorder %s37, 1
      %p146 = por %p144, %p145
      %p148 = scmp.ne.s32.totalorder %s133, %s147
      %p149 = scmp.eq.s32.totalorder %s37, 0
      %p150 = por %p148, %p149
      %s152 = sadd.s32 %s151, 1
      %p155 = scmp.eq.s32.totalorder %s31, 1
      %p156 = scmp.ne.s32.totalorder %s151, %s153
      %p157 = scmp.eq.s32.totalorder %s31, 0
      %p158 = por %p156, %p157
      %p159 = scmp.ne.s32.totalorder %s151, %s153
      %p160 = scmp.eq.s32.totalorder %s36, 1
      %p161 = por %p159, %p160
      %p162 = scmp.ne.s32.totalorder %s153, %s154
      %p163 = scmp.eq.s32.totalorder %s36, 0
      %p164 = por %p162, %p163
      %p165 = scmp.ne.s32.totalorder %s153, %s154
      %p166 = scmp.eq.s32.totalorder %s37, 1
      %p167 = por %p165, %p166
      %p169 = scmp.ne.s32.totalorder %s154, %s168
      %p170 = scmp.eq.s32.totalorder %s37, 0
      %p171 = por %p169, %p170
      %s173 = sadd.s32 %s172, 1
      %p176 = scmp.eq.s32.totalorder %s31, 1
      %p177 = scmp.ne.s32.totalorder %s172, %s174
      %p178 = scmp.eq.s32.totalorder %s31, 0
      %p179 = por %p177, %p178
      %p180 = scmp.ne.s32.totalorder %s172, %s174
      %p181 = scmp.eq.s32.totalorder %s36, 1
      %p182 = por %p180, %p181
      %p183 = scmp.ne.s32.totalorder %s174, %s175
      %p184 = scmp.eq.s32.totalorder %s36, 0
      %p185 = por %p183, %p184
      %p186 = scmp.ne.s32.totalorder %s174, %s175
      %p187 = scmp.eq.s32.totalorder %s37, 1
      %p188 = por %p186, %p187
      %p190 = scmp.ne.s32.totalorder %s175, %s189
      %p191 = scmp.eq.s32.totalorder %s37, 0
      %p192 = por %p190, %p191
      %s194 = sadd.s32 %s193, 1
      %p197 = scmp.eq.s32.totalorder %s31, 1
      %p198 = scmp.ne.s32.totalorder %s193, %s195
      %p199 = scmp.eq.s32.totalorder %s31, 0
      %p200 = por %p198, %p199
      %p201 = scmp.ne.s32.totalorder %s193, %s195
      %p202 = scmp.eq.s32.totalorder %s36, 1
      %p203 = por %p201, %p202
      %p204 = scmp.ne.s32.totalorder %s195, %s196
      %p205 = scmp.eq.s32.totalorder %s36, 0
      %p206 = por %p204, %p205
      %p207 = scmp.ne.s32.totalorder %s195, %s196
      %p208 = scmp.eq.s32.totalorder %s37, 1
      %p209 = por %p207, %p208
      %p211 = scmp.ne.s32.totalorder %s196, %s210
      %p212 = scmp.eq.s32.totalorder %s37, 0
      %p213 = por %p211, %p212
      %s215 = sadd.s32 %s214, 1
      %p218 = scmp.eq.s32.totalorder %s31, 1
      %p219 = scmp.ne.s32.totalorder %s214, %s216
      %p220 = scmp.eq.s32.totalorder %s31, 0
      %p221 = por %p219, %p220
      %p222 = scmp.ne.s32.totalorder %s214, %s216
      %p223 = scmp.eq.s32.totalorder %s36, 1
      %p224 = por %p222, %p223
      %p225 = scmp.ne.s32.totalorder %s216, %s217
      %p226 = scmp.eq.s32.totalorder %s36, 0
      %p227 = por %p225, %p226
      %p228 = scmp.ne.s32.totalorder %s216, %s217
      %p229 = scmp.eq.s32.totalorder %s37, 1
      %p230 = por %p228, %p229
      %p232 = scmp.ne.s32.totalorder %s217, %s231
      %p233 = scmp.eq.s32.totalorder %s37, 0
      %p234 = por %p232, %p233
      %s236 = sadd.s32 %s235, 1
      %p239 = scmp.eq.s32.totalorder %s31, 1
      %p240 = scmp.ne.s32.totalorder %s235, %s237
      %p241 = scmp.eq.s32.totalorder %s31, 0
      %p242 = por %p240, %p241
      %p243 = scmp.ne.s32.totalorder %s235, %s237
      %p244 = scmp.eq.s32.totalorder %s36, 1
      %p245 = por %p243, %p244
      %p246 = scmp.ne.s32.totalorder %s237, %s238
      %p247 = scmp.eq.s32.totalorder %s36, 0
      %p248 = por %p246, %p247
      %p249 = scmp.ne.s32.totalorder %s237, %s238
      %p250 = scmp.eq.s32.totalorder %s37, 1
      %p251 = por %p249, %p250
      %p253 = scmp.ne.s32.totalorder %s238, %s252
      %p254 = scmp.eq.s32.totalorder %s37, 0
      %p255 = por %p253, %p254
      %s257 = sadd.s32 %s256, 1
      %p260 = scmp.eq.s32.totalorder %s31, 1
      %p261 = scmp.ne.s32.totalorder %s256, %s258
      %p262 = scmp.eq.s32.totalorder %s31, 0
      %p263 = por %p261, %p262
      %p264 = scmp.ne.s32.totalorder %s256, %s258
      %p265 = scmp.eq.s32.totalorder %s36, 1
      %p266 = por %p264, %p265
      %p267 = scmp.ne.s32.totalorder %s258, %s259
      %p268 = scmp.eq.s32.totalorder %s36, 0
      %p269 = por %p267, %p268
      %p270 = scmp.ne.s32.totalorder %s258, %s259
      %p271 = scmp.eq.s32.totalorder %s37, 1
      %p272 = por %p270, %p271
      %p274 = scmp.ne.s32.totalorder %s259, %s273
      %p275 = scmp.eq.s32.totalorder %s37, 0
      %p276 = por %p274, %p275
      %s278 = sadd.s32 %s277, 1
      %p281 = scmp.eq.s32.totalorder %s31, 1
      %p282 = scmp.ne.s32.totalorder %s277, %s279
      %p283 = scmp.eq.s32.totalorder %s31, 0
      %p284 = por %p282, %p283
      %p285 = scmp.ne.s32.totalorder %s277, %s279
      %p286 = scmp.eq.s32.totalorder %s36, 1
      %p287 = por %p285, %p286
      %p288 = scmp.ne.s32.totalorder %s279, %s280
      %p289 = scmp.eq.s32.totalorder %s36, 0
      %p290 = por %p288, %p289
      %p291 = scmp.ne.s32.totalorder %s279, %s280
      %p292 = scmp.eq.s32.totalorder %s37, 1
      %p293 = por %p291, %p292
      %p295 = scmp.ne.s32.totalorder %s280, %s294
      %p296 = scmp.eq.s32.totalorder %s37, 0
      %p297 = por %p295, %p296
      %s299 = sadd.s32 %s298, 1
      %p302 = scmp.eq.s32.totalorder %s31, 1
      %p303 = scmp.ne.s32.totalorder %s298, %s300
      %p304 = scmp.eq.s32.totalorder %s31, 0
      %p305 = por %p303, %p304
      %p306 = scmp.ne.s32.totalorder %s298, %s300
      %p307 = scmp.eq.s32.totalorder %s36, 1
      %p308 = por %p306, %p307
      %p309 = scmp.ne.s32.totalorder %s300, %s301
      %p310 = scmp.eq.s32.totalorder %s36, 0
      %p311 = por %p309, %p310
      %p312 = scmp.ne.s32.totalorder %s300, %s301
      %p313 = scmp.eq.s32.totalorder %s37, 1
      %p314 = por %p312, %p313
      %p316 = scmp.ne.s32.totalorder %s301, %s315
      %p317 = scmp.eq.s32.totalorder %s37, 0
      %p318 = por %p316, %p317
      %s320 = sadd.s32 %s319, 1
      %p323 = scmp.eq.s32.totalorder %s31, 1
      %p324 = scmp.ne.s32.totalorder %s319, %s321
      %p325 = scmp.eq.s32.totalorder %s31, 0
      %p326 = por %p324, %p325
      %p327 = scmp.ne.s32.totalorder %s319, %s321
      %p328 = scmp.eq.s32.totalorder %s36, 1
      %p329 = por %p327, %p328
      %p330 = scmp.ne.s32.totalorder %s321, %s322
      %p331 = scmp.eq.s32.totalorder %s36, 0
      %p332 = por %p330, %p331
      %p333 = scmp.ne.s32.totalorder %s321, %s322
      %p334 = scmp.eq.s32.totalorder %s37, 1
      %p335 = por %p333, %p334
      %p337 = scmp.ne.s32.totalorder %s322, %s336
      %p338 = scmp.eq.s32.totalorder %s37, 0
      %p339 = por %p337, %p338
      %s340 = ssub.s32 %s38, %s57
      %p341 = scmp.eq.s32.totalorder %s340, 0
      %s343 = sadd.s32 %s342, 1
      %s344 = scalar_select %p341, %s342, %s343
      %p347 = pneg %p341
      %p348 = scmp.eq.s32.totalorder %s31, 1
      %p349 = por %p347, %p348
      %p350 = scmp.ne.s32.totalorder %s342, %s345
      %p351 = scmp.eq.s32.totalorder %s31, 0
      %p352 = por %p350, %p351
      %p353 = scmp.ne.s32.totalorder %s342, %s345
      %p354 = scmp.eq.s32.totalorder %s36, 1
      %p355 = por %p353, %p354
      %p356 = scmp.ne.s32.totalorder %s345, %s346
      %p357 = scmp.eq.s32.totalorder %s36, 0
      %p358 = por %p356, %p357
      %p359 = scmp.ne.s32.totalorder %s345, %s346
      %p360 = scmp.eq.s32.totalorder %s37, 1
      %p361 = por %p359, %p360
      %p363 = scmp.ne.s32.totalorder %s346, %s362
      %p364 = scmp.eq.s32.totalorder %s37, 0
      %p365 = por %p363, %p364
      %s366 = ssub.s32 %s38, %s57
      %p367 = scmp.eq.s32.totalorder %s366, 0
      %s369 = sadd.s32 %s368, 1
      %s370 = scalar_select %p367, %s368, %s369
      %p373 = pneg %p367
      %p374 = scmp.eq.s32.totalorder %s31, 1
      %p375 = por %p373, %p374
      %p376 = scmp.ne.s32.totalorder %s368, %s371
      %p377 = scmp.eq.s32.totalorder %s31, 0
      %p378 = por %p376, %p377
      %p379 = scmp.ne.s32.totalorder %s368, %s371
      %p380 = scmp.eq.s32.totalorder %s36, 1
      %p381 = por %p379, %p380
      %p382 = scmp.ne.s32.totalorder %s371, %s372
      %p383 = scmp.eq.s32.totalorder %s36, 0
      %p384 = por %p382, %p383
      %p385 = scmp.ne.s32.totalorder %s371, %s372
      %p386 = scmp.eq.s32.totalorder %s37, 1
      %p387 = por %p385, %p386
      %p389 = scmp.ne.s32.totalorder %s372, %s388
      %p390 = scmp.eq.s32.totalorder %s37, 0
      %p391 = por %p389, %p390
      %s392 = ssub.s32 %s38, %s57
      %p393 = scmp.eq.s32.totalorder %s392, 0
      %s395 = sadd.s32 %s394, 1
      %s396 = scalar_select %p393, %s394, %s395
      %p399 = pneg %p393
      %p400 = scmp.eq.s32.totalorder %s31, 1
      %p401 = por %p399, %p400
      %p402 = scmp.ne.s32.totalorder %s394, %s397
      %p403 = scmp.eq.s32.totalorder %s31, 0
      %p404 = por %p402, %p403
      %p405 = scmp.ne.s32.totalorder %s394, %s397
      %p406 = scmp.eq.s32.totalorder %s36, 1
      %p407 = por %p405, %p406
      %p408 = scmp.ne.s32.totalorder %s397, %s398
      %p409 = scmp.eq.s32.totalorder %s36, 0
      %p410 = por %p408, %p409
      %p411 = scmp.ne.s32.totalorder %s397, %s398
      %p412 = scmp.eq.s32.totalorder %s37, 1
      %p413 = por %p411, %p412
      %p415 = scmp.ne.s32.totalorder %s398, %s414
      %p416 = scmp.eq.s32.totalorder %s37, 0
      %p417 = por %p415, %p416
      %p418 = scmp.le.s32.totalorder 1, %s31
      %p419 = scmp.lt.s32.totalorder %s31, 3
      %p420 = pnand %p418, %p419
      %p421 = pneg %p420
      // Predicated region
      $region9: #{tpu_custom_call.1} parent=5 // pred_check
        _
      $region10: #{tpu_custom_call.1} parent=5 // pred_check_branch
        %423 = sbr.rel (%p420) target = $region12
      $region11: #{tpu_custom_call.1} parent=5 // pred_region
        %s424 = ssub.s32 %s31, 1
        // Predicated region
        $region13: #{tpu_custom_call.1} parent=11 // pred_check
          %p425 = pneg %p101
        $region14: #{tpu_custom_call.1} parent=11 // pred_check_branch
          %427 = sbr.rel (%p425) target = $region16
        $region15: #{tpu_custom_call.1} parent=11 // pred_region
          %s429 = ssub.s32 8192, 8192
          %430 = vsyncadd [#allocation9], %s429
          %s431 = sshll.u32 [#allocation8], 4
          %s432 = int_to_ptr.vmem [resolvable:$true] %s431
          %437 = dma.hbm_to_vmem [thread:$0]  %s1, 8192, %s432, [#allocation9], 64, 64, 4
        $region16: #{tpu_custom_call.1} parent=11 // pred_fallthru
          _
        // Predicated region
        $region17: #{tpu_custom_call.1} parent=11 // pred_check
          %p438 = pneg %p122
        $region18: #{tpu_custom_call.1} parent=11 // pred_check_branch
          %440 = sbr.rel (%p438) target = $region20
        $region19: #{tpu_custom_call.1} parent=11 // pred_region
          _
        $region20: #{tpu_custom_call.1} parent=11 // pred_fallthru
          _
        // Predicated region
        $region21: #{tpu_custom_call.1} parent=11 // pred_check
          %p441 = pneg %p143
        $region22: #{tpu_custom_call.1} parent=11 // pred_check_branch
          %443 = sbr.rel (%p441) target = $region24
        $region23: #{tpu_custom_call.1} parent=11 // pred_region
          _
        $region24: #{tpu_custom_call.1} parent=11 // pred_fallthru
          _
        // Predicated region
        $region25: #{tpu_custom_call.1} parent=11 // pred_check
          %p444 = pneg %p164
        $region26: #{tpu_custom_call.1} parent=11 // pred_check_branch
          %446 = sbr.rel (%p444) target = $region28
        $region27: #{tpu_custom_call.1} parent=11 // pred_region
          _
        $region28: #{tpu_custom_call.1} parent=11 // pred_fallthru
          _
        // Predicated region
        $region29: #{tpu_custom_call.1} parent=11 // pred_check
          %p447 = pneg %p185
        $region30: #{tpu_custom_call.1} parent=11 // pred_check_branch
          %449 = sbr.rel (%p447) target = $region32
        $region31: #{tpu_custom_call.1} parent=11 // pred_region
          _
        $region32: #{tpu_custom_call.1} parent=11 // pred_fallthru
          _
        // Predicated region
        $region33: #{tpu_custom_call.1} parent=11 // pred_check
          %p450 = pneg %p206
        $region34: #{tpu_custom_call.1} parent=11 // pred_check_branch
          %452 = sbr.rel (%p450) target = $region36
        $region35: #{tpu_custom_call.1} parent=11 // pred_region
          _
        $region36: #{tpu_custom_call.1} parent=11 // pred_fallthru
          _
        // Predicated region
        $region37: #{tpu_custom_call.1} parent=11 // pred_check
          %p453 = pneg %p227
        $region38: #{tpu_custom_call.1} parent=11 // pred_check_branch
          %455 = sbr.rel (%p453) target = $region40
        $region39: #{tpu_custom_call.1} parent=11 // pred_region
          _
        $region40: #{tpu_custom_call.1} parent=11 // pred_fallthru
          _
        // Predicated region
        $region41: #{tpu_custom_call.1} parent=11 // pred_check
          %p456 = pneg %p248
        $region42: #{tpu_custom_call.1} parent=11 // pred_check_branch
          %458 = sbr.rel (%p456) target = $region44
        $region43: #{tpu_custom_call.1} parent=11 // pred_region
          _
        $region44: #{tpu_custom_call.1} parent=11 // pred_fallthru
          _
        // Predicated region
        $region45: #{tpu_custom_call.1} parent=11 // pred_check
          %p459 = pneg %p269
        $region46: #{tpu_custom_call.1} parent=11 // pred_check_branch
          %461 = sbr.rel (%p459) target = $region48
        $region47: #{tpu_custom_call.1} parent=11 // pred_region
          _
        $region48: #{tpu_custom_call.1} parent=11 // pred_fallthru
          _
        // Predicated region
        $region49: #{tpu_custom_call.1} parent=11 // pred_check
          %p462 = pneg %p290
        $region50: #{tpu_custom_call.1} parent=11 // pred_check_branch
          %464 = sbr.rel (%p462) target = $region52
        $region51: #{tpu_custom_call.1} parent=11 // pred_region
          _
        $region52: #{tpu_custom_call.1} parent=11 // pred_fallthru
          _
        // Predicated region
        $region53: #{tpu_custom_call.1} parent=11 // pred_check
          %p465 = pneg %p311
        $region54: #{tpu_custom_call.1} parent=11 // pred_check_branch
          %467 = sbr.rel (%p465) target = $region56
        $region55: #{tpu_custom_call.1} parent=11 // pred_region
          _
        $region56: #{tpu_custom_call.1} parent=11 // pred_fallthru
          _
        // Predicated region
        $region57: #{tpu_custom_call.1} parent=11 // pred_check
          %p468 = pneg %p332
        $region58: #{tpu_custom_call.1} parent=11 // pred_check_branch
          %470 = sbr.rel (%p468) target = $region60
        $region59: #{tpu_custom_call.1} parent=11 // pred_region
          _
        $region60: #{tpu_custom_call.1} parent=11 // pred_fallthru
          _
      $region12: #{tpu_custom_call.1} parent=5 // pred_fallthru
        _
      %p471 = scmp.lt.s32.totalorder %s31, 2
      // Predicated region
      $region61: #{tpu_custom_call.1} parent=5 // pred_check
        %p472 = pneg %p471
      $region62: #{tpu_custom_call.1} parent=5 // pred_check_branch
        %474 = sbr.rel (%p472) target = $region64
      $region63: #{tpu_custom_call.1} parent=5 // pred_region
        // Predicated region
        $region65: #{tpu_custom_call.1} parent=63 // pred_check
          %p475 = pneg %p74
        $region66: #{tpu_custom_call.1} parent=63 // pred_check_branch
          %477 = sbr.rel (%p475) target = $region68
        $region67: #{tpu_custom_call.1} parent=63 // pred_region
          %s478 = smul.u32 2, %s39
          %s479 = smul.u32 8, %s40
          %p480 = scmp.lt.s32.totalorder %s38, 1
          %s481 = scalar_select %p480, %s38, 1
          %p482 = scmp.lt.s32.totalorder %s478, 1
          %s483 = scalar_select %p482, %s478, 1
          %p484 = scmp.lt.s32.totalorder %s479, 7
          %s485 = scalar_select %p484, %s479, 7
          %s486 = smul.addr %s483, 8
          %s487 = sadd.s32 %s485, %s486
          %s488 = smul.addr %s481, 16
          %s489 = sadd.s32 %s487, %s488
          %s490 = smul.addr %s489, 4
          %s491 = scalar_lea.vmem %s0, %s490
          %s492 = smul.u32 2, %s39
          %s493 = smul.u32 8, %s40
        $region68: #{tpu_custom_call.1} parent=63 // pred_fallthru
          _
      $region64: #{tpu_custom_call.1} parent=5 // pred_fallthru
        _
      %p494 = scmp.le.s32.totalorder 1, %s31
      %p495 = scmp.lt.s32.totalorder %s31, 3
      %p496 = pnand %p494, %p495
      %p497 = pneg %p496
      // Predicated region
      $region69: #{tpu_custom_call.1} parent=5 // pred_check
        _
      $region70: #{tpu_custom_call.1} parent=5 // pred_check_branch
        %499 = sbr.rel (%p496) target = $region72
      $region71: #{tpu_custom_call.1} parent=5 // pred_region
        %s500 = ssub.s32 %s31, 1
        // Predicated region
        $region73: #{tpu_custom_call.1} parent=71 // pred_check
          %p501 = pneg %p101
        $region74: #{tpu_custom_call.1} parent=71 // pred_check_branch
          %503 = sbr.rel (%p501) target = $region76
        $region75: #{tpu_custom_call.1} parent=71 // pred_region
          %504 = dma.done [#allocation9], 8192
        $region76: #{tpu_custom_call.1} parent=71 // pred_fallthru
          _
        %s505 = smul.u32 2, %s42
        %s506 = smul.u32 8, %s43
        %p507 = scmp.lt.s32.totalorder %s41, 1
        %s508 = scalar_select %p507, %s41, 1
        %p509 = scmp.lt.s32.totalorder %s505, 1
        %s510 = scalar_select %p509, %s505, 1
        %p511 = scmp.lt.s32.totalorder %s506, 7
        %s512 = scalar_select %p511, %s506, 7
        %s513 = smul.addr %s510, 8
        %s514 = sadd.s32 %s512, %s513
        %s515 = smul.addr %s508, 16
        %s516 = sadd.s32 %s514, %s515
        %s517 = smul.addr %s516, 4
        %s518 = scalar_lea.vmem %s0, %s517
        %p519 = pneg %p80
        %p520 = pneg %p77
        %p521 = pneg %p101
        %p522 = pneg %p98
        %p523 = pneg %p122
        %p524 = pneg %p119
        %p525 = pneg %p143
        %p526 = pneg %p140
        %p527 = pneg %p164
        %p528 = pneg %p161
        %p529 = pneg %p185
        %p530 = pneg %p182
        %p531 = pneg %p206
        %p532 = pneg %p203
        %p533 = pneg %p227
        %p534 = pneg %p224
        %p535 = pneg %p248
        %p536 = pneg %p245
        %p537 = pneg %p269
        %p538 = pneg %p266
        %p539 = pneg %p290
        %p540 = pneg %p287
        %p541 = pneg %p311
        %p542 = pneg %p308
        %p543 = pneg %p332
        %p544 = pneg %p329
        %p545 = pneg %p358
        %p546 = pneg %p355
        %s547 = sand.u32 %s345, 1
        %s548 = scalar_lea.sflag [#allocation10], %s547
        %s549 = sand.u32 %s345, 1
        %s550 = scalar_lea.vmem [#allocation11], %s549
        %p551 = pneg %p384
        %p552 = pneg %p381
        %s553 = sand.u32 %s36, 1
        %s554 = scalar_lea.sflag [#allocation13], %s553
        %s555 = sand.u32 %s371, 1
        %s556 = scalar_lea.vmem [#allocation12], %s555
        %p557 = pneg %p410
        %p558 = pneg %p407
        %s559 = sand.u32 %s36, 1
        %s560 = scalar_lea.sflag [#allocation13], %s559
        %s561 = sand.u32 %s397, 1
        %s562 = scalar_lea.vmem [#allocation14], %s561
        %s563 = smul.u32 2, %s42
        %s564 = smul.u32 8, %s43
        %p565 = scmp.lt.s32.totalorder %s41, 1
        %s566 = scalar_select %p565, %s41, 1
        %p567 = scmp.lt.s32.totalorder %s563, 1
        %s568 = scalar_select %p567, %s563, 1
        %p569 = scmp.lt.s32.totalorder %s564, 7
        %s570 = scalar_select %p569, %s564, 7
        %s571 = smul.addr %s568, 8
        %s572 = sadd.s32 %s570, %s571
        %s573 = smul.addr %s566, 16
        %s574 = sadd.s32 %s572, %s573
        %s575 = smul.addr %s574, 4
        %s576 = scalar_lea.vmem %s0, %s575
        %s577 = smul.u32 2, %s42
        %s578 = smul.u32 8, %s43
        %p580 = scmp.eq.s32.totalorder %s42, 0
        %p581 = scmp.eq.s32.totalorder %s43, 0
        %p582 = pnand %p580, %p581
        %p583 = pneg %p582
        // Predicated region
        $region77: #{tpu_custom_call.1} parent=71 // pred_check
          _
        $region78: #{tpu_custom_call.1} parent=71 // pred_check_branch
          %585 = sbr.rel (%p582) target = $region80
        $region79: #{tpu_custom_call.1} parent=71 // pred_region
          %vm586 = vcmask 0
          %587 = vst.msk [vmem:[#allocation3] sm:$0x1] %vm586, -inf
          %588 = vst.msk [vmem:[#allocation4] sm:$0x1] %vm586, 0.0
          %589 = vst [vmem:[#allocation5] sm:$0x1] 0.0
          %590 = vst [vmem:[#allocation6] sm:$0x1] 0.0
        $region80: #{tpu_custom_call.1} parent=71 // pred_fallthru
          _
        %v591 = vld [vmem:[%s576] sm:$0xff]
        %v592 = vld [vmem:[%s576 + $0x8] sm:$0xff]
        %v593 = vld [vmem:[%s576 + $0x10] sm:$0xff]
        %v594 = vld [vmem:[%s576 + $0x18] sm:$0xff]
        %v595 = vld [vmem:[%s576 + $0x20] sm:$0xff]
        %v596 = vld [vmem:[%s576 + $0x28] sm:$0xff]
        %v597 = vld [vmem:[%s576 + $0x30] sm:$0xff]
        %v598 = vld [vmem:[%s576 + $0x38] sm:$0xff]
        %v599 = vld [vmem:[#allocation8] sm:$0xf]
        %v600 = vld [vmem:[#allocation8 + $0x4] sm:$0xf]
        %v601 = vld [vmem:[#allocation8 + $0x8] sm:$0xf]
        %v602 = vld [vmem:[#allocation8 + $0xc] sm:$0xf]
        %v603 = vld [vmem:[#allocation8 + $0x10] sm:$0xf]
        %v604 = vld [vmem:[#allocation8 + $0x14] sm:$0xf]
        %v605 = vld [vmem:[#allocation8 + $0x18] sm:$0xf]
        %v606 = vld [vmem:[#allocation8 + $0x1c] sm:$0xf]
        %v607 = vld [vmem:[#allocation8 + $0x20] sm:$0xf]
        %v608 = vld [vmem:[#allocation8 + $0x24] sm:$0xf]
        %v609 = vld [vmem:[#allocation8 + $0x28] sm:$0xf]
        %v610 = vld [vmem:[#allocation8 + $0x2c] sm:$0xf]
        %v611 = vld [vmem:[#allocation8 + $0x30] sm:$0xf]
        %v612 = vld [vmem:[#allocation8 + $0x34] sm:$0xf]
        %v613 = vld [vmem:[#allocation8 + $0x38] sm:$0xf]
        %v614 = vld [vmem:[#allocation8 + $0x3c] sm:$0xf]
        %v615 = vld [vmem:[#allocation8 + $0x40] sm:$0xf]
        %v616 = vld [vmem:[#allocation8 + $0x44] sm:$0xf]
        %v617 = vld [vmem:[#allocation8 + $0x48] sm:$0xf]
        %v618 = vld [vmem:[#allocation8 + $0x4c] sm:$0xf]
        %v619 = vld [vmem:[#allocation8 + $0x50] sm:$0xf]
        %v620 = vld [vmem:[#allocation8 + $0x54] sm:$0xf]
        %v621 = vld [vmem:[#allocation8 + $0x58] sm:$0xf]
        %v622 = vld [vmem:[#allocation8 + $0x5c] sm:$0xf]
        %v623 = vld [vmem:[#allocation8 + $0x60] sm:$0xf]
        %v624 = vld [vmem:[#allocation8 + $0x64] sm:$0xf]
        %v625 = vld [vmem:[#allocation8 + $0x68] sm:$0xf]
        %v626 = vld [vmem:[#allocation8 + $0x6c] sm:$0xf]
        %v627 = vld [vmem:[#allocation8 + $0x70] sm:$0xf]
        %v628 = vld [vmem:[#allocation8 + $0x74] sm:$0xf]
        %v629 = vld [vmem:[#allocation8 + $0x78] sm:$0xf]
        %v630 = vld [vmem:[#allocation8 + $0x7c] sm:$0xf]
        %v631 = vld [vmem:[#allocation8 + $0x80] sm:$0xf]
        %v632 = vld [vmem:[#allocation8 + $0x84] sm:$0xf]
        %v633 = vld [vmem:[#allocation8 + $0x88] sm:$0xf]
        %v634 = vld [vmem:[#allocation8 + $0x8c] sm:$0xf]
        %v635 = vld [vmem:[#allocation8 + $0x90] sm:$0xf]
        %v636 = vld [vmem:[#allocation8 + $0x94] sm:$0xf]
        %v637 = vld [vmem:[#allocation8 + $0x98] sm:$0xf]
        %v638 = vld [vmem:[#allocation8 + $0x9c] sm:$0xf]
        %v639 = vld [vmem:[#allocation8 + $0xa0] sm:$0xf]
        %v640 = vld [vmem:[#allocation8 + $0xa4] sm:$0xf]
        %v641 = vld [vmem:[#allocation8 + $0xa8] sm:$0xf]
        %v642 = vld [vmem:[#allocation8 + $0xac] sm:$0xf]
        %v643 = vld [vmem:[#allocation8 + $0xb0] sm:$0xf]
        %v644 = vld [vmem:[#allocation8 + $0xb4] sm:$0xf]
        %v645 = vld [vmem:[#allocation8 + $0xb8] sm:$0xf]
        %v646 = vld [vmem:[#allocation8 + $0xbc] sm:$0xf]
        %v647 = vld [vmem:[#allocation8 + $0xc0] sm:$0xf]
        %v648 = vld [vmem:[#allocation8 + $0xc4] sm:$0xf]
        %v649 = vld [vmem:[#allocation8 + $0xc8] sm:$0xf]
        %v650 = vld [vmem:[#allocation8 + $0xcc] sm:$0xf]
        %v651 = vld [vmem:[#allocation8 + $0xd0] sm:$0xf]
        %v652 = vld [vmem:[#allocation8 + $0xd4] sm:$0xf]
        %v653 = vld [vmem:[#allocation8 + $0xd8] sm:$0xf]
        %v654 = vld [vmem:[#allocation8 + $0xdc] sm:$0xf]
        %v655 = vld [vmem:[#allocation8 + $0xe0] sm:$0xf]
        %v656 = vld [vmem:[#allocation8 + $0xe4] sm:$0xf]
        %v657 = vld [vmem:[#allocation8 + $0xe8] sm:$0xf]
        %v658 = vld [vmem:[#allocation8 + $0xec] sm:$0xf]
        %v659 = vld [vmem:[#allocation8 + $0xf0] sm:$0xf]
        %v660 = vld [vmem:[#allocation8 + $0xf4] sm:$0xf]
        %v661 = vld [vmem:[#allocation8 + $0xf8] sm:$0xf]
        %v662 = vld [vmem:[#allocation8 + $0xfc] sm:$0xf]
        %v663 = vld [vmem:[#allocation8 + $0x100] sm:$0xf]
        %v664 = vld [vmem:[#allocation8 + $0x104] sm:$0xf]
        %v665 = vld [vmem:[#allocation8 + $0x108] sm:$0xf]
        %v666 = vld [vmem:[#allocation8 + $0x10c] sm:$0xf]
        %v667 = vld [vmem:[#allocation8 + $0x110] sm:$0xf]
        %v668 = vld [vmem:[#allocation8 + $0x114] sm:$0xf]
        %v669 = vld [vmem:[#allocation8 + $0x118] sm:$0xf]
        %v670 = vld [vmem:[#allocation8 + $0x11c] sm:$0xf]
        %v671 = vld [vmem:[#allocation8 + $0x120] sm:$0xf]
        %v672 = vld [vmem:[#allocation8 + $0x124] sm:$0xf]
        %v673 = vld [vmem:[#allocation8 + $0x128] sm:$0xf]
        %v674 = vld [vmem:[#allocation8 + $0x12c] sm:$0xf]
        %v675 = vld [vmem:[#allocation8 + $0x130] sm:$0xf]
        %v676 = vld [vmem:[#allocation8 + $0x134] sm:$0xf]
        %v677 = vld [vmem:[#allocation8 + $0x138] sm:$0xf]
        %v678 = vld [vmem:[#allocation8 + $0x13c] sm:$0xf]
        %v679 = vld [vmem:[#allocation8 + $0x140] sm:$0xf]
        %v680 = vld [vmem:[#allocation8 + $0x144] sm:$0xf]
        %v681 = vld [vmem:[#allocation8 + $0x148] sm:$0xf]
        %v682 = vld [vmem:[#allocation8 + $0x14c] sm:$0xf]
        %v683 = vld [vmem:[#allocation8 + $0x150] sm:$0xf]
        %v684 = vld [vmem:[#allocation8 + $0x154] sm:$0xf]
        %v685 = vld [vmem:[#allocation8 + $0x158] sm:$0xf]
        %v686 = vld [vmem:[#allocation8 + $0x15c] sm:$0xf]
        %v687 = vld [vmem:[#allocation8 + $0x160] sm:$0xf]
        %v688 = vld [vmem:[#allocation8 + $0x164] sm:$0xf]
        %v689 = vld [vmem:[#allocation8 + $0x168] sm:$0xf]
        %v690 = vld [vmem:[#allocation8 + $0x16c] sm:$0xf]
        %v691 = vld [vmem:[#allocation8 + $0x170] sm:$0xf]
        %v692 = vld [vmem:[#allocation8 + $0x174] sm:$0xf]
        %v693 = vld [vmem:[#allocation8 + $0x178] sm:$0xf]
        %v694 = vld [vmem:[#allocation8 + $0x17c] sm:$0xf]
        %v695 = vld [vmem:[#allocation8 + $0x180] sm:$0xf]
        %v696 = vld [vmem:[#allocation8 + $0x184] sm:$0xf]
        %v697 = vld [vmem:[#allocation8 + $0x188] sm:$0xf]
        %v698 = vld [vmem:[#allocation8 + $0x18c] sm:$0xf]
        %v699 = vld [vmem:[#allocation8 + $0x190] sm:$0xf]
        %v700 = vld [vmem:[#allocation8 + $0x194] sm:$0xf]
        %v701 = vld [vmem:[#allocation8 + $0x198] sm:$0xf]
        %v702 = vld [vmem:[#allocation8 + $0x19c] sm:$0xf]
        %v703 = vld [vmem:[#allocation8 + $0x1a0] sm:$0xf]
        %v704 = vld [vmem:[#allocation8 + $0x1a4] sm:$0xf]
        %v705 = vld [vmem:[#allocation8 + $0x1a8] sm:$0xf]
        %v706 = vld [vmem:[#allocation8 + $0x1ac] sm:$0xf]
        %v707 = vld [vmem:[#allocation8 + $0x1b0] sm:$0xf]
        %v708 = vld [vmem:[#allocation8 + $0x1b4] sm:$0xf]
        %v709 = vld [vmem:[#allocation8 + $0x1b8] sm:$0xf]
        %v710 = vld [vmem:[#allocation8 + $0x1bc] sm:$0xf]
        %v711 = vld [vmem:[#allocation8 + $0x1c0] sm:$0xf]
        %v712 = vld [vmem:[#allocation8 + $0x1c4] sm:$0xf]
        %v713 = vld [vmem:[#allocation8 + $0x1c8] sm:$0xf]
        %v714 = vld [vmem:[#allocation8 + $0x1cc] sm:$0xf]
        %v715 = vld [vmem:[#allocation8 + $0x1d0] sm:$0xf]
        %v716 = vld [vmem:[#allocation8 + $0x1d4] sm:$0xf]
        %v717 = vld [vmem:[#allocation8 + $0x1d8] sm:$0xf]
        %v718 = vld [vmem:[#allocation8 + $0x1dc] sm:$0xf]
        %v719 = vld [vmem:[#allocation8 + $0x1e0] sm:$0xf]
        %v720 = vld [vmem:[#allocation8 + $0x1e4] sm:$0xf]
        %v721 = vld [vmem:[#allocation8 + $0x1e8] sm:$0xf]
        %v722 = vld [vmem:[#allocation8 + $0x1ec] sm:$0xf]
        %v723 = vld [vmem:[#allocation8 + $0x1f0] sm:$0xf]
        %v724 = vld [vmem:[#allocation8 + $0x1f4] sm:$0xf]
        %v725 = vld [vmem:[#allocation8 + $0x1f8] sm:$0xf]
        %v726 = vld [vmem:[#allocation8 + $0x1fc] sm:$0xf]
        %v727 = vld [vmem:[%s2] sm:$0x1]
        %v729 = vlaneseq
        %v730 = vshrl.u32 %v729, 7
        %v731 = vsub.s32 0, %v730
        %v732 = vrot.slane %v727, %v731
        %v742 = vunpack.c.l.b16 %v591
        %v743 = vunpack.c.h.b16 %v591
        %v744 = vunpack.c.l.b16 %v592
        %v745 = vunpack.c.h.b16 %v592
        %v746 = vunpack.c.l.b16 %v593
        %v747 = vunpack.c.h.b16 %v593
        %v748 = vunpack.c.l.b16 %v594
        %v749 = vunpack.c.h.b16 %v594
        %v750 = vunpack.c.l.b16 %v595
        %v751 = vunpack.c.h.b16 %v595
        %v752 = vunpack.c.l.b16 %v596
        %v753 = vunpack.c.h.b16 %v596
        %v754 = vunpack.c.l.b16 %v597
        %v755 = vunpack.c.h.b16 %v597
        %v756 = vunpack.c.l.b16 %v598
        %v757 = vunpack.c.h.b16 %v598
        %v758 = vpack.c.b16 %v750, %v742
        %v759 = vpack.c.b16 %v751, %v743
        %v760 = vpack.c.b16 %v752, %v744
        %v761 = vpack.c.b16 %v753, %v745
        %v762 = vpack.c.b16 %v754, %v746
        %v763 = vpack.c.b16 %v755, %v747
        %v764 = vpack.c.b16 %v756, %v748
        %v765 = vpack.c.b16 %v757, %v749
        %v902 = vunpack.c.l.b16 %v599
        %v903 = vunpack.c.l.b16 %v600
        %v904 = vunpack.c.l.b16 %v601
        %v905 = vunpack.c.l.b16 %v602
        %v906 = vunpack.c.l.b16 %v603
        %v907 = vunpack.c.l.b16 %v604
        %v908 = vunpack.c.l.b16 %v605
        %v909 = vunpack.c.l.b16 %v606
        %v910 = vunpack.c.l.b16 %v607
        %v911 = vunpack.c.l.b16 %v608
        %v912 = vunpack.c.l.b16 %v609
        %v913 = vunpack.c.l.b16 %v610
        %v914 = vunpack.c.l.b16 %v611
        %v915 = vunpack.c.l.b16 %v612
        %v916 = vunpack.c.l.b16 %v613
        %v917 = vunpack.c.l.b16 %v614
        %v918 = vunpack.c.l.b16 %v615
        %v919 = vunpack.c.l.b16 %v616
        %v920 = vunpack.c.l.b16 %v617
        %v921 = vunpack.c.l.b16 %v618
        %v922 = vunpack.c.l.b16 %v619
        %v923 = vunpack.c.l.b16 %v620
        %v924 = vunpack.c.l.b16 %v621
        %v925 = vunpack.c.l.b16 %v622
        %v926 = vunpack.c.l.b16 %v623
        %v927 = vunpack.c.l.b16 %v624
        %v928 = vunpack.c.l.b16 %v625
        %v929 = vunpack.c.l.b16 %v626
        %v930 = vunpack.c.l.b16 %v627
        %v931 = vunpack.c.l.b16 %v628
        %v932 = vunpack.c.l.b16 %v629
        %v933 = vunpack.c.l.b16 %v630
        %v934 = vunpack.c.l.b16 %v631
        %v935 = vunpack.c.l.b16 %v632
        %v936 = vunpack.c.l.b16 %v633
        %v937 = vunpack.c.l.b16 %v634
        %v938 = vunpack.c.l.b16 %v635
        %v939 = vunpack.c.l.b16 %v636
        %v940 = vunpack.c.l.b16 %v637
        %v941 = vunpack.c.l.b16 %v638
        %v942 = vunpack.c.l.b16 %v639
        %v943 = vunpack.c.l.b16 %v640
        %v944 = vunpack.c.l.b16 %v641
        %v945 = vunpack.c.l.b16 %v642
        %v946 = vunpack.c.l.b16 %v643
        %v947 = vunpack.c.l.b16 %v644
        %v948 = vunpack.c.l.b16 %v645
        %v949 = vunpack.c.l.b16 %v646
        %v950 = vunpack.c.l.b16 %v647
        %v951 = vunpack.c.l.b16 %v648
        %v952 = vunpack.c.l.b16 %v649
        %v953 = vunpack.c.l.b16 %v650
        %v954 = vunpack.c.l.b16 %v651
        %v955 = vunpack.c.l.b16 %v652
        %v956 = vunpack.c.l.b16 %v653
        %v957 = vunpack.c.l.b16 %v654
        %v958 = vunpack.c.l.b16 %v655
        %v959 = vunpack.c.l.b16 %v656
        %v960 = vunpack.c.l.b16 %v657
        %v961 = vunpack.c.l.b16 %v658
        %v962 = vunpack.c.l.b16 %v659
        %v963 = vunpack.c.l.b16 %v660
        %v964 = vunpack.c.l.b16 %v661
        %v965 = vunpack.c.l.b16 %v662
        %v966 = vunpack.c.l.b16 %v663
        %v967 = vunpack.c.l.b16 %v664
        %v968 = vunpack.c.l.b16 %v665
        %v969 = vunpack.c.l.b16 %v666
        %v970 = vunpack.c.l.b16 %v667
        %v971 = vunpack.c.l.b16 %v668
        %v972 = vunpack.c.l.b16 %v669
        %v973 = vunpack.c.l.b16 %v670
        %v974 = vunpack.c.l.b16 %v671
        %v975 = vunpack.c.l.b16 %v672
        %v976 = vunpack.c.l.b16 %v673
        %v977 = vunpack.c.l.b16 %v674
        %v978 = vunpack.c.l.b16 %v675
        %v979 = vunpack.c.l.b16 %v676
        %v980 = vunpack.c.l.b16 %v677
        %v981 = vunpack.c.l.b16 %v678
        %v982 = vunpack.c.l.b16 %v679
        %v983 = vunpack.c.l.b16 %v680
        %v984 = vunpack.c.l.b16 %v681
        %v985 = vunpack.c.l.b16 %v682
        %v986 = vunpack.c.l.b16 %v683
        %v987 = vunpack.c.l.b16 %v684
        %v988 = vunpack.c.l.b16 %v685
        %v989 = vunpack.c.l.b16 %v686
        %v990 = vunpack.c.l.b16 %v687
        %v991 = vunpack.c.l.b16 %v688
        %v992 = vunpack.c.l.b16 %v689
        %v993 = vunpack.c.l.b16 %v690
        %v994 = vunpack.c.l.b16 %v691
        %v995 = vunpack.c.l.b16 %v692
        %v996 = vunpack.c.l.b16 %v693
        %v997 = vunpack.c.l.b16 %v694
        %v998 = vunpack.c.l.b16 %v695
        %v999 = vunpack.c.l.b16 %v696
        %v1000 = vunpack.c.l.b16 %v697
        %v1001 = vunpack.c.l.b16 %v698
        %v1002 = vunpack.c.l.b16 %v699
        %v1003 = vunpack.c.l.b16 %v700
        %v1004 = vunpack.c.l.b16 %v701
        %v1005 = vunpack.c.l.b16 %v702
        %v1006 = vunpack.c.l.b16 %v703
        %v1007 = vunpack.c.l.b16 %v704
        %v1008 = vunpack.c.l.b16 %v705
        %v1009 = vunpack.c.l.b16 %v706
        %v1010 = vunpack.c.l.b16 %v707
        %v1011 = vunpack.c.l.b16 %v708
        %v1012 = vunpack.c.l.b16 %v709
        %v1013 = vunpack.c.l.b16 %v710
        %v1014 = vunpack.c.l.b16 %v711
        %v1015 = vunpack.c.l.b16 %v712
        %v1016 = vunpack.c.l.b16 %v713
        %v1017 = vunpack.c.l.b16 %v714
        %v1018 = vunpack.c.l.b16 %v715
        %v1019 = vunpack.c.l.b16 %v716
        %v1020 = vunpack.c.l.b16 %v717
        %v1021 = vunpack.c.l.b16 %v718
        %v1022 = vunpack.c.l.b16 %v719
        %v1023 = vunpack.c.l.b16 %v720
        %v1024 = vunpack.c.l.b16 %v721
        %v1025 = vunpack.c.l.b16 %v722
        %v1026 = vunpack.c.l.b16 %v723
        %v1027 = vunpack.c.l.b16 %v724
        %v1028 = vunpack.c.l.b16 %v725
        %v1029 = vunpack.c.l.b16 %v726
        %v1030 = vpack.c.b16 %v903, %v902
        %v1031 = vpack.c.b16 %v905, %v904
        %v1032 = vpack.c.b16 %v907, %v906
        %v1033 = vpack.c.b16 %v909, %v908
        %v1034 = vpack.c.b16 %v911, %v910
        %v1035 = vpack.c.b16 %v913, %v912
        %v1036 = vpack.c.b16 %v915, %v914
        %v1037 = vpack.c.b16 %v917, %v916
        %v1038 = vpack.c.b16 %v919, %v918
        %v1039 = vpack.c.b16 %v921, %v920
        %v1040 = vpack.c.b16 %v923, %v922
        %v1041 = vpack.c.b16 %v925, %v924
        %v1042 = vpack.c.b16 %v927, %v926
        %v1043 = vpack.c.b16 %v929, %v928
        %v1044 = vpack.c.b16 %v931, %v930
        %v1045 = vpack.c.b16 %v933, %v932
        %v1046 = vpack.c.b16 %v935, %v934
        %v1047 = vpack.c.b16 %v937, %v936
        %v1048 = vpack.c.b16 %v939, %v938
        %v1049 = vpack.c.b16 %v941, %v940
        %v1050 = vpack.c.b16 %v943, %v942
        %v1051 = vpack.c.b16 %v945, %v944
        %v1052 = vpack.c.b16 %v947, %v946
        %v1053 = vpack.c.b16 %v949, %v948
        %v1054 = vpack.c.b16 %v951, %v950
        %v1055 = vpack.c.b16 %v953, %v952
        %v1056 = vpack.c.b16 %v955, %v954
        %v1057 = vpack.c.b16 %v957, %v956
        %v1058 = vpack.c.b16 %v959, %v958
        %v1059 = vpack.c.b16 %v961, %v960
        %v1060 = vpack.c.b16 %v963, %v962
        %v1061 = vpack.c.b16 %v965, %v964
        %v1062 = vpack.c.b16 %v967, %v966
        %v1063 = vpack.c.b16 %v969, %v968
        %v1064 = vpack.c.b16 %v971, %v970
        %v1065 = vpack.c.b16 %v973, %v972
        %v1066 = vpack.c.b16 %v975, %v974
        %v1067 = vpack.c.b16 %v977, %v976
        %v1068 = vpack.c.b16 %v979, %v978
        %v1069 = vpack.c.b16 %v981, %v980
        %v1070 = vpack.c.b16 %v983, %v982
        %v1071 = vpack.c.b16 %v985, %v984
        %v1072 = vpack.c.b16 %v987, %v986
        %v1073 = vpack.c.b16 %v989, %v988
        %v1074 = vpack.c.b16 %v991, %v990
        %v1075 = vpack.c.b16 %v993, %v992
        %v1076 = vpack.c.b16 %v995, %v994
        %v1077 = vpack.c.b16 %v997, %v996
        %v1078 = vpack.c.b16 %v999, %v998
        %v1079 = vpack.c.b16 %v1001, %v1000
        %v1080 = vpack.c.b16 %v1003, %v1002
        %v1081 = vpack.c.b16 %v1005, %v1004
        %v1082 = vpack.c.b16 %v1007, %v1006
        %v1083 = vpack.c.b16 %v1009, %v1008
        %v1084 = vpack.c.b16 %v1011, %v1010
        %v1085 = vpack.c.b16 %v1013, %v1012
        %v1086 = vpack.c.b16 %v1015, %v1014
        %v1087 = vpack.c.b16 %v1017, %v1016
        %v1088 = vpack.c.b16 %v1019, %v1018
        %v1089 = vpack.c.b16 %v1021, %v1020
        %v1090 = vpack.c.b16 %v1023, %v1022
        %v1091 = vpack.c.b16 %v1025, %v1024
        %v1092 = vpack.c.b16 %v1027, %v1026
        %v1093 = vpack.c.b16 %v1029, %v1028
        %1158 = vmatprep.subr.bf16.mxu0 0
        %1159 = vmatpush1.bf16.msra.mxu0 %v1037
        %1160 = vmatprep.subr.bf16.mxu0 0
        %1161 = vmatpush1.bf16.msra.mxu0 %v1036
        %1162 = vmatprep.subr.bf16.mxu0 0
        %1163 = vmatpush1.bf16.msra.mxu0 %v1035
        %1164 = vmatprep.subr.bf16.mxu0 0
        %1165 = vmatpush1.bf16.msra.mxu0 %v1034
        %1166 = vmatprep.subr.bf16.mxu0 0
        %1167 = vmatpush1.bf16.msra.mxu0 %v1033
        %1168 = vmatprep.subr.bf16.mxu0 0
        %1169 = vmatpush1.bf16.msra.mxu0 %v1032
        %1170 = vmatprep.subr.bf16.mxu0 0
        %1171 = vmatpush1.bf16.msra.mxu0 %v1031
        %1172 = vmatprep.subr.bf16.mxu0 0
        %1173 = vmatpush1.bf16.msra.mxu0 %v1030
        %1174 = vmatprep.subr.bf16.mxu0 0
        %1175 = vmatpush2.bf16.msra.mxu0 %v1045
        %1176 = vmatprep.subr.bf16.mxu0 0
        %1177 = vmatpush2.bf16.msra.mxu0 %v1044
        %1178 = vmatprep.subr.bf16.mxu0 0
        %1179 = vmatpush2.bf16.msra.mxu0 %v1043
        %1180 = vmatprep.subr.bf16.mxu0 0
        %1181 = vmatpush2.bf16.msra.mxu0 %v1042
        %1182 = vmatprep.subr.bf16.mxu0 0
        %1183 = vmatpush2.bf16.msra.mxu0 %v1041
        %1184 = vmatprep.subr.bf16.mxu0 0
        %1185 = vmatpush2.bf16.msra.mxu0 %v1040
        %1186 = vmatprep.subr.bf16.mxu0 0
        %1187 = vmatpush2.bf16.msra.mxu0 %v1039
        %1188 = vmatprep.subr.bf16.mxu0 0
        %1189 = vmatpush2.bf16.msra.mxu0 %v1038
        %1190 = vmatprep.mubr.bf16.mxu0 %v759
        %1191 = vmatmul.mubr.bf16.gmra.mxu0 %v758
        %v1192 = vpop.f32.mrf.mxu0
        %v1193 = vadd.f32 %v732, %v1192
        %v1194 = vpop.f32.mrf.mxu0
        %v1195 = vpop.f32.mrf.mxu0
        %v1196 = vadd.f32 %v732, %v1195
        %v1197 = vpop.f32.mrf.mxu0
        %1198 = vdwg.mxu0
        %1199 = vmatprep.subr.bf16.mxu0 0
        %1200 = vmatpush1.bf16.msra.mxu0 %v1053
        %1201 = vmatprep.subr.bf16.mxu0 0
        %1202 = vmatpush1.bf16.msra.mxu0 %v1052
        %1203 = vmatprep.subr.bf16.mxu0 0
        %1204 = vmatpush1.bf16.msra.mxu0 %v1051
        %1205 = vmatprep.subr.bf16.mxu0 0
        %1206 = vmatpush1.bf16.msra.mxu0 %v1050
        %1207 = vmatprep.subr.bf16.mxu0 0
        %1208 = vmatpush1.bf16.msra.mxu0 %v1049
        %1209 = vmatprep.subr.bf16.mxu0 0
        %1210 = vmatpush1.bf16.msra.mxu0 %v1048
        %1211 = vmatprep.subr.bf16.mxu0 0
        %1212 = vmatpush1.bf16.msra.mxu0 %v1047
        %1213 = vmatprep.subr.bf16.mxu0 0
        %1214 = vmatpush1.bf16.msra.mxu0 %v1046
        %1215 = vmatprep.subr.bf16.mxu0 0
        %1216 = vmatpush2.bf16.msra.mxu0 %v1061
        %1217 = vmatprep.subr.bf16.mxu0 0
        %1218 = vmatpush2.bf16.msra.mxu0 %v1060
        %1219 = vmatprep.subr.bf16.mxu0 0
        %1220 = vmatpush2.bf16.msra.mxu0 %v1059
        %1221 = vmatprep.subr.bf16.mxu0 0
        %1222 = vmatpush2.bf16.msra.mxu0 %v1058
        %1223 = vmatprep.subr.bf16.mxu0 0
        %1224 = vmatpush2.bf16.msra.mxu0 %v1057
        %1225 = vmatprep.subr.bf16.mxu0 0
        %1226 = vmatpush2.bf16.msra.mxu0 %v1056
        %1227 = vmatprep.subr.bf16.mxu0 0
        %1228 = vmatpush2.bf16.msra.mxu0 %v1055
        %1229 = vmatprep.subr.bf16.mxu0 0
        %1230 = vmatpush2.bf16.msra.mxu0 %v1054
        %1231 = vmatprep.mubr.bf16.mxu0 %v761
        %1232 = vmatmul.mubr.bf16.gmra.mxu0 %v760
        %v1233 = vpop.f32.mrf.mxu0
        %v1234 = vadd.f32 %v1193, %v1233
        %v1235 = vpop.f32.mrf.mxu0
        %v1236 = vpop.f32.mrf.mxu0
        %v1237 = vadd.f32 %v1196, %v1236
        %v1238 = vpop.f32.mrf.mxu0
        %1239 = vdwg.mxu0
        %1240 = vmatprep.subr.bf16.mxu0 0
        %1241 = vmatpush1.bf16.msra.mxu0 %v1069
        %1242 = vmatprep.subr.bf16.mxu0 0
        %1243 = vmatpush1.bf16.msra.mxu0 %v1068
        %1244 = vmatprep.subr.bf16.mxu0 0
        %1245 = vmatpush1.bf16.msra.mxu0 %v1067
        %1246 = vmatprep.subr.bf16.mxu0 0
        %1247 = vmatpush1.bf16.msra.mxu0 %v1066
        %1248 = vmatprep.subr.bf16.mxu0 0
        %1249 = vmatpush1.bf16.msra.mxu0 %v1065
        %1250 = vmatprep.subr.bf16.mxu0 0
        %1251 = vmatpush1.bf16.msra.mxu0 %v1064
        %1252 = vmatprep.subr.bf16.mxu0 0
        %1253 = vmatpush1.bf16.msra.mxu0 %v1063
        %1254 = vmatprep.subr.bf16.mxu0 0
        %1255 = vmatpush1.bf16.msra.mxu0 %v1062
        %1256 = vmatprep.subr.bf16.mxu0 0
        %1257 = vmatpush2.bf16.msra.mxu0 %v1077
        %1258 = vmatprep.subr.bf16.mxu0 0
        %1259 = vmatpush2.bf16.msra.mxu0 %v1076
        %1260 = vmatprep.subr.bf16.mxu0 0
        %1261 = vmatpush2.bf16.msra.mxu0 %v1075
        %1262 = vmatprep.subr.bf16.mxu0 0
        %1263 = vmatpush2.bf16.msra.mxu0 %v1074
        %1264 = vmatprep.subr.bf16.mxu0 0
        %1265 = vmatpush2.bf16.msra.mxu0 %v1073
        %1266 = vmatprep.subr.bf16.mxu0 0
        %1267 = vmatpush2.bf16.msra.mxu0 %v1072
        %1268 = vmatprep.subr.bf16.mxu0 0
        %1269 = vmatpush2.bf16.msra.mxu0 %v1071
        %1270 = vmatprep.subr.bf16.mxu0 0
        %1271 = vmatpush2.bf16.msra.mxu0 %v1070
        %1272 = vmatprep.mubr.bf16.mxu0 %v763
        %1273 = vmatmul.mubr.bf16.gmra.mxu0 %v762
        %v1274 = vpop.f32.mrf.mxu0
        %v1275 = vadd.f32 %v1234, %v1274
        %v1276 = vpop.f32.mrf.mxu0
        %v1277 = vpop.f32.mrf.mxu0
        %v1278 = vadd.f32 %v1237, %v1277
        %v1279 = vpop.f32.mrf.mxu0
        %1280 = vdwg.mxu0
        %1281 = vmatprep.subr.bf16.mxu0 0
        %1282 = vmatpush1.bf16.msra.mxu0 %v1085
        %1283 = vmatprep.subr.bf16.mxu0 0
        %1284 = vmatpush1.bf16.msra.mxu0 %v1084
        %1285 = vmatprep.subr.bf16.mxu0 0
        %1286 = vmatpush1.bf16.msra.mxu0 %v1083
        %1287 = vmatprep.subr.bf16.mxu0 0
        %1288 = vmatpush1.bf16.msra.mxu0 %v1082
        %1289 = vmatprep.subr.bf16.mxu0 0
        %1290 = vmatpush1.bf16.msra.mxu0 %v1081
        %1291 = vmatprep.subr.bf16.mxu0 0
        %1292 = vmatpush1.bf16.msra.mxu0 %v1080
        %1293 = vmatprep.subr.bf16.mxu0 0
        %1294 = vmatpush1.bf16.msra.mxu0 %v1079
        %1295 = vmatprep.subr.bf16.mxu0 0
        %1296 = vmatpush1.bf16.msra.mxu0 %v1078
        %1297 = vmatprep.subr.bf16.mxu0 0
        %1298 = vmatpush2.bf16.msra.mxu0 %v1093
        %1299 = vmatprep.subr.bf16.mxu0 0
        %1300 = vmatpush2.bf16.msra.mxu0 %v1092
        %1301 = vmatprep.subr.bf16.mxu0 0
        %1302 = vmatpush2.bf16.msra.mxu0 %v1091
        %1303 = vmatprep.subr.bf16.mxu0 0
        %1304 = vmatpush2.bf16.msra.mxu0 %v1090
        %1305 = vmatprep.subr.bf16.mxu0 0
        %1306 = vmatpush2.bf16.msra.mxu0 %v1089
        %1307 = vmatprep.subr.bf16.mxu0 0
        %1308 = vmatpush2.bf16.msra.mxu0 %v1088
        %1309 = vmatprep.subr.bf16.mxu0 0
        %1310 = vmatpush2.bf16.msra.mxu0 %v1087
        %1311 = vmatprep.subr.bf16.mxu0 0
        %1312 = vmatpush2.bf16.msra.mxu0 %v1086
        %1313 = vmatprep.mubr.bf16.mxu0 %v765
        %1314 = vmatmul.mubr.bf16.gmra.mxu0 %v764
        %v1315 = vpop.f32.mrf.mxu0
        %v1316 = vadd.f32 %v1275, %v1315
        %v1317 = vpop.f32.mrf.mxu0
        %v1318 = vpop.f32.mrf.mxu0
        %v1319 = vadd.f32 %v1278, %v1318
        %v1320 = vpop.f32.mrf.mxu0
        %1321 = vdwg.mxu0
        %v1322 = vmax.f32 %v1316, 0.0
        %v1323 = vmax.f32 %v1319, 0.0
        %v1324 = vpack.c.bf16 %v1323, %v1322
        %v1325 = vld [vmem:[%s3] sm:$0xf]
        %v1326 = vld [vmem:[%s3 + $0x4] sm:$0xf]
        %v1327 = vld [vmem:[%s3 + $0x8] sm:$0xf]
        %v1328 = vld [vmem:[%s3 + $0xc] sm:$0xf]
        %v1329 = vld [vmem:[%s3 + $0x10] sm:$0xf]
        %v1330 = vld [vmem:[%s3 + $0x14] sm:$0xf]
        %v1331 = vld [vmem:[%s3 + $0x18] sm:$0xf]
        %v1332 = vld [vmem:[%s3 + $0x1c] sm:$0xf]
        %v1333 = vld [vmem:[%s3 + $0x20] sm:$0xf]
        %v1334 = vld [vmem:[%s3 + $0x24] sm:$0xf]
        %v1335 = vld [vmem:[%s3 + $0x28] sm:$0xf]
        %v1336 = vld [vmem:[%s3 + $0x2c] sm:$0xf]
        %v1337 = vld [vmem:[%s3 + $0x30] sm:$0xf]
        %v1338 = vld [vmem:[%s3 + $0x34] sm:$0xf]
        %v1339 = vld [vmem:[%s3 + $0x38] sm:$0xf]
        %v1340 = vld [vmem:[%s3 + $0x3c] sm:$0xf]
        %v1341 = vld [vmem:[%s4] sm:$0x1]
        %v1343 = vlaneseq
        %v1344 = vshrl.u32 %v1343, 7
        %v1345 = vsub.s32 0, %v1344
        %v1346 = vrot.slane %v1341, %v1345
        %v1364 = vunpack.c.l.b16 %v1325
        %v1365 = vunpack.c.l.b16 %v1326
        %v1366 = vunpack.c.l.b16 %v1327
        %v1367 = vunpack.c.l.b16 %v1328
        %v1368 = vunpack.c.l.b16 %v1329
        %v1369 = vunpack.c.l.b16 %v1330
        %v1370 = vunpack.c.l.b16 %v1331
        %v1371 = vunpack.c.l.b16 %v1332
        %v1372 = vunpack.c.l.b16 %v1333
        %v1373 = vunpack.c.l.b16 %v1334
        %v1374 = vunpack.c.l.b16 %v1335
        %v1375 = vunpack.c.l.b16 %v1336
        %v1376 = vunpack.c.l.b16 %v1337
        %v1377 = vunpack.c.l.b16 %v1338
        %v1378 = vunpack.c.l.b16 %v1339
        %v1379 = vunpack.c.l.b16 %v1340
        %v1380 = vpack.c.b16 %v1365, %v1364
        %v1381 = vpack.c.b16 %v1367, %v1366
        %v1382 = vpack.c.b16 %v1369, %v1368
        %v1383 = vpack.c.b16 %v1371, %v1370
        %v1384 = vpack.c.b16 %v1373, %v1372
        %v1385 = vpack.c.b16 %v1375, %v1374
        %v1386 = vpack.c.b16 %v1377, %v1376
        %v1387 = vpack.c.b16 %v1379, %v1378
        %1396 = vmatprep.subr.bf16.mxu0 0
        %1397 = vmatpush1.bf16.msra.mxu0 %v1387
        %1398 = vmatprep.subr.bf16.mxu0 0
        %1399 = vmatpush1.bf16.msra.mxu0 %v1386
        %1400 = vmatprep.subr.bf16.mxu0 0
        %1401 = vmatpush1.bf16.msra.mxu0 %v1385
        %1402 = vmatprep.subr.bf16.mxu0 0
        %1403 = vmatpush1.bf16.msra.mxu0 %v1384
        %1404 = vmatprep.subr.bf16.mxu0 0
        %1405 = vmatpush1.bf16.msra.mxu0 %v1383
        %1406 = vmatprep.subr.bf16.mxu0 0
        %1407 = vmatpush1.bf16.msra.mxu0 %v1382
        %1408 = vmatprep.subr.bf16.mxu0 0
        %1409 = vmatpush1.bf16.msra.mxu0 %v1381
        %1410 = vmatprep.subr.bf16.mxu0 0
        %1411 = vmatpush1.bf16.msra.mxu0 %v1380
        %1412 = vmatprep.subr.bf16.mxu0 0
        %1413 = vmatpush2.bf16.msra.mxu0 0
        %1414 = vmatprep.subr.bf16.mxu0 0
        %1415 = vmatpush2.bf16.msra.mxu0 0
        %1416 = vmatprep.subr.bf16.mxu0 0
        %1417 = vmatpush2.bf16.msra.mxu0 0
        %1418 = vmatprep.subr.bf16.mxu0 0
        %1419 = vmatpush2.bf16.msra.mxu0 0
        %1420 = vmatprep.subr.bf16.mxu0 0
        %1421 = vmatpush2.bf16.msra.mxu0 0
        %1422 = vmatprep.subr.bf16.mxu0 0
        %1423 = vmatpush2.bf16.msra.mxu0 0
        %1424 = vmatprep.subr.bf16.mxu0 0
        %1425 = vmatpush2.bf16.msra.mxu0 0
        %1426 = vmatprep.subr.bf16.mxu0 0
        %1427 = vmatpush2.bf16.msra.mxu0 0
        %1428 = vmatprep.mubr.bf16.mxu0 0
        %1429 = vmatmul.mubr.bf16.gmra.mxu0 %v1324
        %v1430 = vpop.f32.mrf.mxu0
        %v1431 = vadd.f32 %v1346, %v1430
        %v1432 = vpop.f32.mrf.mxu0
        %v1433 = vpop.f32.mrf.mxu0
        %v1434 = vadd.f32 %v1346, %v1433
        %v1435 = vpop.f32.mrf.mxu0
        %1436 = vdwg.mxu0
        %v1437 = vpack.c.bf16 %v1434, %v1431
        %v1438 = vld [vmem:[%s5] sm:$0xf]
        %v1439 = vld [vmem:[%s5 + $0x4] sm:$0xf]
        %v1440 = vld [vmem:[%s5 + $0x8] sm:$0xf]
        %v1441 = vld [vmem:[%s5 + $0xc] sm:$0xf]
        %v1442 = vld [vmem:[%s5 + $0x10] sm:$0xf]
        %v1443 = vld [vmem:[%s5 + $0x14] sm:$0xf]
        %v1444 = vld [vmem:[%s5 + $0x18] sm:$0xf]
        %v1445 = vld [vmem:[%s5 + $0x1c] sm:$0xf]
        %v1446 = vld [vmem:[%s5 + $0x20] sm:$0xf]
        %v1447 = vld [vmem:[%s5 + $0x24] sm:$0xf]
        %v1448 = vld [vmem:[%s5 + $0x28] sm:$0xf]
        %v1449 = vld [vmem:[%s5 + $0x2c] sm:$0xf]
        %v1450 = vld [vmem:[%s5 + $0x30] sm:$0xf]
        %v1451 = vld [vmem:[%s5 + $0x34] sm:$0xf]
        %v1452 = vld [vmem:[%s5 + $0x38] sm:$0xf]
        %v1453 = vld [vmem:[%s5 + $0x3c] sm:$0xf]
        %v1454 = vld [vmem:[%s6] sm:$0x1]
        %v1456 = vlaneseq
        %v1457 = vshrl.u32 %v1456, 7
        %v1458 = vsub.s32 0, %v1457
        %v1459 = vrot.slane %v1454, %v1458
        %v1477 = vunpack.c.l.b16 %v1438
        %v1478 = vunpack.c.l.b16 %v1439
        %v1479 = vunpack.c.l.b16 %v1440
        %v1480 = vunpack.c.l.b16 %v1441
        %v1481 = vunpack.c.l.b16 %v1442
        %v1482 = vunpack.c.l.b16 %v1443
        %v1483 = vunpack.c.l.b16 %v1444
        %v1484 = vunpack.c.l.b16 %v1445
        %v1485 = vunpack.c.l.b16 %v1446
        %v1486 = vunpack.c.l.b16 %v1447
        %v1487 = vunpack.c.l.b16 %v1448
        %v1488 = vunpack.c.l.b16 %v1449
        %v1489 = vunpack.c.l.b16 %v1450
        %v1490 = vunpack.c.l.b16 %v1451
        %v1491 = vunpack.c.l.b16 %v1452
        %v1492 = vunpack.c.l.b16 %v1453
        %v1493 = vpack.c.b16 %v1478, %v1477
        %v1494 = vpack.c.b16 %v1480, %v1479
        %v1495 = vpack.c.b16 %v1482, %v1481
        %v1496 = vpack.c.b16 %v1484, %v1483
        %v1497 = vpack.c.b16 %v1486, %v1485
        %v1498 = vpack.c.b16 %v1488, %v1487
        %v1499 = vpack.c.b16 %v1490, %v1489
        %v1500 = vpack.c.b16 %v1492, %v1491
        %1509 = vmatprep.subr.bf16.mxu0 0
        %1510 = vmatpush1.bf16.msra.mxu0 %v1500
        %1511 = vmatprep.subr.bf16.mxu0 0
        %1512 = vmatpush1.bf16.msra.mxu0 %v1499
        %1513 = vmatprep.subr.bf16.mxu0 0
        %1514 = vmatpush1.bf16.msra.mxu0 %v1498
        %1515 = vmatprep.subr.bf16.mxu0 0
        %1516 = vmatpush1.bf16.msra.mxu0 %v1497
        %1517 = vmatprep.subr.bf16.mxu0 0
        %1518 = vmatpush1.bf16.msra.mxu0 %v1496
        %1519 = vmatprep.subr.bf16.mxu0 0
        %1520 = vmatpush1.bf16.msra.mxu0 %v1495
        %1521 = vmatprep.subr.bf16.mxu0 0
        %1522 = vmatpush1.bf16.msra.mxu0 %v1494
        %1523 = vmatprep.subr.bf16.mxu0 0
        %1524 = vmatpush1.bf16.msra.mxu0 %v1493
        %1525 = vmatprep.subr.bf16.mxu0 0
        %1526 = vmatpush2.bf16.msra.mxu0 0
        %1527 = vmatprep.subr.bf16.mxu0 0
        %1528 = vmatpush2.bf16.msra.mxu0 0
        %1529 = vmatprep.subr.bf16.mxu0 0
        %1530 = vmatpush2.bf16.msra.mxu0 0
        %1531 = vmatprep.subr.bf16.mxu0 0
        %1532 = vmatpush2.bf16.msra.mxu0 0
        %1533 = vmatprep.subr.bf16.mxu0 0
        %1534 = vmatpush2.bf16.msra.mxu0 0
        %1535 = vmatprep.subr.bf16.mxu0 0
        %1536 = vmatpush2.bf16.msra.mxu0 0
        %1537 = vmatprep.subr.bf16.mxu0 0
        %1538 = vmatpush2.bf16.msra.mxu0 0
        %1539 = vmatprep.subr.bf16.mxu0 0
        %1540 = vmatpush2.bf16.msra.mxu0 0
        %1541 = vmatprep.mubr.bf16.mxu0 0
        %1542 = vmatmul.mubr.bf16.gmra.mxu0 %v1437
        %v1543 = vpop.f32.mrf.mxu0
        %v1544 = vadd.f32 %v1459, %v1543
        %v1545 = vpop.f32.mrf.mxu0
        %v1546 = vpop.f32.mrf.mxu0
        %v1547 = vadd.f32 %v1459, %v1546
        %v1548 = vpop.f32.mrf.mxu0
        %1549 = vdwg.mxu0
        %v1550 = vtanh.pop %v1544
        %v1551 = vtanh.pop %v1547
        %v1552 = vld [vmem:[%s7] sm:$0xf]
        %v1553 = vld [vmem:[%s7 + $0x4] sm:$0xf]
        %v1554 = vld [vmem:[%s7 + $0x8] sm:$0xf]
        %v1555 = vld [vmem:[%s7 + $0xc] sm:$0xf]
        %v1556 = vld [vmem:[%s7 + $0x10] sm:$0xf]
        %v1557 = vld [vmem:[%s7 + $0x14] sm:$0xf]
        %v1558 = vld [vmem:[%s7 + $0x18] sm:$0xf]
        %v1559 = vld [vmem:[%s7 + $0x1c] sm:$0xf]
        %v1560 = vld [vmem:[%s7 + $0x20] sm:$0xf]
        %v1561 = vld [vmem:[%s7 + $0x24] sm:$0xf]
        %v1562 = vld [vmem:[%s7 + $0x28] sm:$0xf]
        %v1563 = vld [vmem:[%s7 + $0x2c] sm:$0xf]
        %v1564 = vld [vmem:[%s7 + $0x30] sm:$0xf]
        %v1565 = vld [vmem:[%s7 + $0x34] sm:$0xf]
        %v1566 = vld [vmem:[%s7 + $0x38] sm:$0xf]
        %v1567 = vld [vmem:[%s7 + $0x3c] sm:$0xf]
        %v1568 = vld [vmem:[%s8] sm:$0x1]
        %v1570 = vlaneseq
        %v1571 = vshrl.u32 %v1570, 7
        %v1572 = vsub.s32 0, %v1571
        %v1573 = vrot.slane %v1568, %v1572
        %v1591 = vunpack.c.l.b16 %v1552
        %v1592 = vunpack.c.l.b16 %v1553
        %v1593 = vunpack.c.l.b16 %v1554
        %v1594 = vunpack.c.l.b16 %v1555
        %v1595 = vunpack.c.l.b16 %v1556
        %v1596 = vunpack.c.l.b16 %v1557
        %v1597 = vunpack.c.l.b16 %v1558
        %v1598 = vunpack.c.l.b16 %v1559
        %v1599 = vunpack.c.l.b16 %v1560
        %v1600 = vunpack.c.l.b16 %v1561
        %v1601 = vunpack.c.l.b16 %v1562
        %v1602 = vunpack.c.l.b16 %v1563
        %v1603 = vunpack.c.l.b16 %v1564
        %v1604 = vunpack.c.l.b16 %v1565
        %v1605 = vunpack.c.l.b16 %v1566
        %v1606 = vunpack.c.l.b16 %v1567
        %v1607 = vpack.c.b16 %v1592, %v1591
        %v1608 = vpack.c.b16 %v1594, %v1593
        %v1609 = vpack.c.b16 %v1596, %v1595
        %v1610 = vpack.c.b16 %v1598, %v1597
        %v1611 = vpack.c.b16 %v1600, %v1599
        %v1612 = vpack.c.b16 %v1602, %v1601
        %v1613 = vpack.c.b16 %v1604, %v1603
        %v1614 = vpack.c.b16 %v1606, %v1605
        %1623 = vmatprep.subr.bf16.mxu0 0
        %1624 = vmatpush1.bf16.msra.mxu0 %v1614
        %1625 = vmatprep.subr.bf16.mxu0 0
        %1626 = vmatpush1.bf16.msra.mxu0 %v1613
        %1627 = vmatprep.subr.bf16.mxu0 0
        %1628 = vmatpush1.bf16.msra.mxu0 %v1612
        %1629 = vmatprep.subr.bf16.mxu0 0
        %1630 = vmatpush1.bf16.msra.mxu0 %v1611
        %1631 = vmatprep.subr.bf16.mxu0 0
        %1632 = vmatpush1.bf16.msra.mxu0 %v1610
        %1633 = vmatprep.subr.bf16.mxu0 0
        %1634 = vmatpush1.bf16.msra.mxu0 %v1609
        %1635 = vmatprep.subr.bf16.mxu0 0
        %1636 = vmatpush1.bf16.msra.mxu0 %v1608
        %1637 = vmatprep.subr.bf16.mxu0 0
        %1638 = vmatpush1.bf16.msra.mxu0 %v1607
        %1639 = vmatprep.subr.bf16.mxu0 0
        %1640 = vmatpush2.bf16.msra.mxu0 0
        %1641 = vmatprep.subr.bf16.mxu0 0
        %1642 = vmatpush2.bf16.msra.mxu0 0
        %1643 = vmatprep.subr.bf16.mxu0 0
        %1644 = vmatpush2.bf16.msra.mxu0 0
        %1645 = vmatprep.subr.bf16.mxu0 0
        %1646 = vmatpush2.bf16.msra.mxu0 0
        %1647 = vmatprep.subr.bf16.mxu0 0
        %1648 = vmatpush2.bf16.msra.mxu0 0
        %1649 = vmatprep.subr.bf16.mxu0 0
        %1650 = vmatpush2.bf16.msra.mxu0 0
        %1651 = vmatprep.subr.bf16.mxu0 0
        %1652 = vmatpush2.bf16.msra.mxu0 0
        %1653 = vmatprep.subr.bf16.mxu0 0
        %1654 = vmatpush2.bf16.msra.mxu0 0
        %1655 = vmatprep.mubr.bf16.mxu0 0
        %1656 = vmatmul.mubr.bf16.gmra.mxu0 %v1437
        %v1657 = vpop.f32.mrf.mxu0
        %v1658 = vadd.f32 %v1573, %v1657
        %v1659 = vpop.f32.mrf.mxu0
        %v1660 = vpop.f32.mrf.mxu0
        %v1661 = vadd.f32 %v1573, %v1660
        %v1662 = vpop.f32.mrf.mxu0
        %1663 = vdwg.mxu0
        %v1664 = vxor.u32 %v1658, 2147483648
        %v1665 = vxor.u32 %v1661, 2147483648
        %v1666 = vmul.f32 %v1664, 1.442695
        %v1667 = vpow.pop %v1666
        %v1668 = vmul.f32 %v1665, 1.442695
        %v1669 = vpow.pop %v1668
        %v1670 = vadd.f32 %v1667, 1.0
        %v1671 = vadd.f32 %v1669, 1.0
        %v1672 = vrcp.pop %v1670
        %v1673 = vmul.f32 1.0, %v1672
        %v1674 = vrcp.pop %v1671
        %v1675 = vmul.f32 1.0, %v1674
        %v1676 = vmul.f32 %v1550, %v1673
        %v1677 = vmul.f32 %v1551, %v1675
        %v1678 = vpack.c.bf16 %v1677, %v1676
        %v1679 = vld [vmem:[%s9] sm:$0x1]
        %v1680 = vld [vmem:[#allocation7] sm:$0x1]
        %1682 = vset.pattern.permute.xlu0 0
        %1683 = vperm.xlu0 %1682, %v1680
        %v1684 = vpop.permute.xlu0 %1683
        %v1686 = vlaneseq
        %v1687 = vshrl.u32 %v1686, 7
        %v1688 = vsub.s32 0, %v1687
        %v1689 = vrot.slane %v1684, %v1688
        %vm1690 = vcmask 523264
        %v1692 = vsel %vm1690, %v1679, 0
        %v1695 = vsel %vm1690, %v1678, 0
        %1697 = vmatprep.subr.bf16.mxu0 0
        %1698 = vmatpush1.bf16.xpose.msra.mxu0 0
        %1699 = vmatprep.subr.bf16.mxu0 0
        %1700 = vmatpush1.bf16.xpose.msra.mxu0 0
        %1701 = vmatprep.subr.bf16.mxu0 0
        %1702 = vmatpush1.bf16.xpose.msra.mxu0 0
        %1703 = vmatprep.subr.bf16.mxu0 0
        %1704 = vmatpush1.bf16.xpose.msra.mxu0 0
        %1705 = vmatprep.subr.bf16.mxu0 0
        %1706 = vmatpush1.bf16.xpose.msra.mxu0 0
        %1707 = vmatprep.subr.bf16.mxu0 0
        %1708 = vmatpush1.bf16.xpose.msra.mxu0 0
        %1709 = vmatprep.subr.bf16.mxu0 0
        %1710 = vmatpush1.bf16.xpose.msra.mxu0 0
        %1711 = vmatprep.subr.bf16.mxu0 0
        %1712 = vmatpush1.bf16.xpose.msra.mxu0 %v1695
        %1713 = vmatprep.subr.bf16.mxu0 0
        %1714 = vmatpush2.bf16.xpose.msra.mxu0 0
        %1715 = vmatprep.subr.bf16.mxu0 0
        %1716 = vmatpush2.bf16.xpose.msra.mxu0 0
        %1717 = vmatprep.subr.bf16.mxu0 0
        %1718 = vmatpush2.bf16.xpose.msra.mxu0 0
        %1719 = vmatprep.subr.bf16.mxu0 0
        %1720 = vmatpush2.bf16.xpose.msra.mxu0 0
        %1721 = vmatprep.subr.bf16.mxu0 0
        %1722 = vmatpush2.bf16.xpose.msra.mxu0 0
        %1723 = vmatprep.subr.bf16.mxu0 0
        %1724 = vmatpush2.bf16.xpose.msra.mxu0 0
        %1725 = vmatprep.subr.bf16.mxu0 0
        %1726 = vmatpush2.bf16.xpose.msra.mxu0 0
        %1727 = vmatprep.subr.bf16.mxu0 0
        %1728 = vmatpush2.bf16.xpose.msra.mxu0 0
        %1729 = vmatprep.mubr.bf16.mxu0 0
        %1730 = vmatmul.mubr.bf16.gmra.mxu0 %v1692
        %v1731 = vpop.f32.mrf.mxu0
        %v1732 = vadd.f32 %v1689, %v1731
        %v1733 = vpop.f32.mrf.mxu0
        %v1734 = vpop.f32.mrf.mxu0
        %v1735 = vpop.f32.mrf.mxu0
        %1736 = vdwg.mxu0
        %vm1737 = vcmask 122880
        %1738 = vst.msk [vmem:[#allocation6] sm:$0x1] %vm1737, %v1732
        %v1739 = vlaneseq
        %v1740 = vand.u32 %v1739, 127
        %s1741 = smul.u32 %s42, 16
        %v1742 = vstv %s1741
        %v1743 = vadd.s32 %v1740, %v1742
        %vm1744 = vcmp.lt.s32.totalorder %v1743, 8
        %v1745 = vsel %vm1744, %v1732, -1e+30
        %v1746 = vld [vmem:[#allocation3] sm:$0x1]
        %v1747 = vsel %vm1737, %v1745, -inf
        %1748 = vmax.xlane.f32.xlu0 %v1747
        %v1749 = vpop.xlane.xlu0 %1748
        %v1750 = vmax.f32 %v1746, %v1749
        %v1751 = vsub.f32 %v1746, %v1750
        %v1752 = vmul.f32 %v1751, 1.442695
        %v1753 = vpow.pop %v1752
        %1755 = vset.pattern.permute.xlu0 0
        %1756 = vperm.xlu0 %1755, %v1750
        %v1757 = vpop.permute.xlu0 %1756
        %v1759 = vlaneseq
        %v1760 = vshrl.u32 %v1759, 7
        %v1761 = vsub.s32 0, %v1760
        %v1762 = vrot.slane %v1757, %v1761
        %v1763 = vsub.f32 %v1745, %v1762
        %v1764 = vmul.f32 %v1763, 1.442695
        %v1765 = vpow.pop %v1764
        %v1766 = vld [vmem:[#allocation4] sm:$0x1]
        %v1767 = vmul.f32 %v1753, %v1766
        %v1768 = vsel %vm1737, %v1765, 0.0
        %1769 = vadd.xlane.f32.xlu0 %v1768
        %v1770 = vpop.xlane.xlu0 %1769
        %v1771 = vadd.f32 %v1767, %v1770
        %vm1772 = vcmask 0
        %1773 = vst.msk [vmem:[#allocation4] sm:$0x1] %vm1772, %v1771
        %v1774 = vld [vmem:[#allocation5] sm:$0x1]
        %1776 = vset.pattern.permute.xlu0 0
        %1777 = vperm.xlu0 %1776, %v1753
        %v1778 = vpop.permute.xlu0 %1777
        %v1780 = vlaneseq
        %v1781 = vshrl.u32 %v1780, 7
        %v1782 = vsub.s32 0, %v1781
        %v1783 = vrot.slane %v1778, %v1782
        %v1784 = vmul.f32 %v1783, %v1774
        %v1785 = vpack.c.bf16 %v1765, %v1765
        %vm1786 = vcmask 130048
        %v1788 = vsel %vm1786, %v1785, 0
        %1790 = vmatprep.subr.bf16.mxu0 0
        %1791 = vmatpush1.bf16.msra.mxu0 0
        %1792 = vmatprep.subr.bf16.mxu0 0
        %1793 = vmatpush1.bf16.msra.mxu0 0
        %1794 = vmatprep.subr.bf16.mxu0 0
        %1795 = vmatpush1.bf16.msra.mxu0 0
        %1796 = vmatprep.subr.bf16.mxu0 0
        %1797 = vmatpush1.bf16.msra.mxu0 0
        %1798 = vmatprep.subr.bf16.mxu0 0
        %1799 = vmatpush1.bf16.msra.mxu0 0
        %1800 = vmatprep.subr.bf16.mxu0 0
        %1801 = vmatpush1.bf16.msra.mxu0 0
        %1802 = vmatprep.subr.bf16.mxu0 0
        %1803 = vmatpush1.bf16.msra.mxu0 0
        %1804 = vmatprep.subr.bf16.mxu0 0
        %1805 = vmatpush1.bf16.msra.mxu0 %v1437
        %1806 = vmatprep.subr.bf16.mxu0 0
        %1807 = vmatpush2.bf16.msra.mxu0 0
        %1808 = vmatprep.subr.bf16.mxu0 0
        %1809 = vmatpush2.bf16.msra.mxu0 0
        %1810 = vmatprep.subr.bf16.mxu0 0
        %1811 = vmatpush2.bf16.msra.mxu0 0
        %1812 = vmatprep.subr.bf16.mxu0 0
        %1813 = vmatpush2.bf16.msra.mxu0 0
        %1814 = vmatprep.subr.bf16.mxu0 0
        %1815 = vmatpush2.bf16.msra.mxu0 0
        %1816 = vmatprep.subr.bf16.mxu0 0
        %1817 = vmatpush2.bf16.msra.mxu0 0
        %1818 = vmatprep.subr.bf16.mxu0 0
        %1819 = vmatpush2.bf16.msra.mxu0 0
        %1820 = vmatprep.subr.bf16.mxu0 0
        %1821 = vmatpush2.bf16.msra.mxu0 0
        %1822 = vmatprep.mubr.bf16.mxu0 0
        %1823 = vmatmul.mubr.bf16.gmra.mxu0 %v1788
        %v1824 = vpop.f32.mrf.mxu0
        %v1825 = vadd.f32 0.0, %v1824
        %v1826 = vpop.f32.mrf.mxu0
        %v1827 = vpop.f32.mrf.mxu0
        %v1828 = vpop.f32.mrf.mxu0
        %1829 = vdwg.mxu0
        %v1830 = vadd.f32 %v1784, %v1825
        %1831 = vst [vmem:[#allocation5] sm:$0x1] %v1830
        %1832 = vst.msk [vmem:[#allocation3] sm:$0x1] %vm1772, %v1750
        // Predicated region
        $region81: #{tpu_custom_call.1} parent=71 // pred_check
          %p1833 = pneg %p580
        $region82: #{tpu_custom_call.1} parent=71 // pred_check_branch
          %1835 = sbr.rel (%p1833) target = $region84
        $region83: #{tpu_custom_call.1} parent=71 // pred_region
          %v1836 = vld [vmem:[#allocation5] sm:$0x1]
          %v1837 = vld [vmem:[#allocation4] sm:$0x1]
          %1839 = vset.pattern.permute.xlu0 0
          %1840 = vperm.xlu0 %1839, %v1837
          %v1841 = vpop.permute.xlu0 %1840
          %v1843 = vlaneseq
          %v1844 = vshrl.u32 %v1843, 7
          %v1845 = vsub.s32 0, %v1844
          %v1846 = vrot.slane %v1841, %v1845
          %v1847 = vrcp.pop %v1846
          %v1848 = vmul.f32 %v1836, %v1847
          %v1849 = vpack.c.bf16 %v1848, %v1848
          %v1850 = vld [vmem:[%s11] sm:$0xf]
          %v1851 = vld [vmem:[%s11 + $0x4] sm:$0xf]
          %v1852 = vld [vmem:[%s11 + $0x8] sm:$0xf]
          %v1853 = vld [vmem:[%s11 + $0xc] sm:$0xf]
          %v1854 = vld [vmem:[%s11 + $0x10] sm:$0xf]
          %v1855 = vld [vmem:[%s11 + $0x14] sm:$0xf]
          %v1856 = vld [vmem:[%s11 + $0x18] sm:$0xf]
          %v1857 = vld [vmem:[%s11 + $0x1c] sm:$0xf]
          %v1858 = vld [vmem:[%s11 + $0x20] sm:$0xf]
          %v1859 = vld [vmem:[%s11 + $0x24] sm:$0xf]
          %v1860 = vld [vmem:[%s11 + $0x28] sm:$0xf]
          %v1861 = vld [vmem:[%s11 + $0x2c] sm:$0xf]
          %v1862 = vld [vmem:[%s11 + $0x30] sm:$0xf]
          %v1863 = vld [vmem:[%s11 + $0x34] sm:$0xf]
          %v1864 = vld [vmem:[%s11 + $0x38] sm:$0xf]
          %v1865 = vld [vmem:[%s11 + $0x3c] sm:$0xf]
          %v1866 = vld [vmem:[%s12] sm:$0x1]
          %v1883 = vunpack.c.l.b16 %v1850
          %v1884 = vunpack.c.l.b16 %v1851
          %v1885 = vunpack.c.l.b16 %v1852
          %v1886 = vunpack.c.l.b16 %v1853
          %v1887 = vunpack.c.l.b16 %v1854
          %v1888 = vunpack.c.l.b16 %v1855
          %v1889 = vunpack.c.l.b16 %v1856
          %v1890 = vunpack.c.l.b16 %v1857
          %v1891 = vunpack.c.l.b16 %v1858
          %v1892 = vunpack.c.l.b16 %v1859
          %v1893 = vunpack.c.l.b16 %v1860
          %v1894 = vunpack.c.l.b16 %v1861
          %v1895 = vunpack.c.l.b16 %v1862
          %v1896 = vunpack.c.l.b16 %v1863
          %v1897 = vunpack.c.l.b16 %v1864
          %v1898 = vunpack.c.l.b16 %v1865
          %v1899 = vpack.c.b16 %v1884, %v1883
          %v1900 = vpack.c.b16 %v1886, %v1885
          %v1901 = vpack.c.b16 %v1888, %v1887
          %v1902 = vpack.c.b16 %v1890, %v1889
          %v1903 = vpack.c.b16 %v1892, %v1891
          %v1904 = vpack.c.b16 %v1894, %v1893
          %v1905 = vpack.c.b16 %v1896, %v1895
          %v1906 = vpack.c.b16 %v1898, %v1897
          %1915 = vmatprep.subr.bf16.mxu0 0
          %1916 = vmatpush1.bf16.msra.mxu0 %v1906
          %1917 = vmatprep.subr.bf16.mxu0 0
          %1918 = vmatpush1.bf16.msra.mxu0 %v1905
          %1919 = vmatprep.subr.bf16.mxu0 0
          %1920 = vmatpush1.bf16.msra.mxu0 %v1904
          %1921 = vmatprep.subr.bf16.mxu0 0
          %1922 = vmatpush1.bf16.msra.mxu0 %v1903
          %1923 = vmatprep.subr.bf16.mxu0 0
          %1924 = vmatpush1.bf16.msra.mxu0 %v1902
          %1925 = vmatprep.subr.bf16.mxu0 0
          %1926 = vmatpush1.bf16.msra.mxu0 %v1901
          %1927 = vmatprep.subr.bf16.mxu0 0
          %1928 = vmatpush1.bf16.msra.mxu0 %v1900
          %1929 = vmatprep.subr.bf16.mxu0 0
          %1930 = vmatpush1.bf16.msra.mxu0 %v1899
          %1931 = vmatprep.subr.bf16.mxu0 0
          %1932 = vmatpush2.bf16.msra.mxu0 0
          %1933 = vmatprep.subr.bf16.mxu0 0
          %1934 = vmatpush2.bf16.msra.mxu0 0
          %1935 = vmatprep.subr.bf16.mxu0 0
          %1936 = vmatpush2.bf16.msra.mxu0 0
          %1937 = vmatprep.subr.bf16.mxu0 0
          %1938 = vmatpush2.bf16.msra.mxu0 0
          %1939 = vmatprep.subr.bf16.mxu0 0
          %1940 = vmatpush2.bf16.msra.mxu0 0
          %1941 = vmatprep.subr.bf16.mxu0 0
          %1942 = vmatpush2.bf16.msra.mxu0 0
          %1943 = vmatprep.subr.bf16.mxu0 0
          %1944 = vmatpush2.bf16.msra.mxu0 0
          %1945 = vmatprep.subr.bf16.mxu0 0
          %1946 = vmatpush2.bf16.msra.mxu0 0
          %1947 = vmatprep.mubr.bf16.mxu0 0
          %1948 = vmatmul.mubr.bf16.gmra.mxu0 %v1849
          %v1949 = vpop.f32.mrf.mxu0
          %v1950 = vadd.f32 %v1866, %v1949
          %v1951 = vpop.f32.mrf.mxu0
          %v1952 = vpop.f32.mrf.mxu0
          %v1953 = vpop.f32.mrf.mxu0
          %1954 = vdwg.mxu0
          %vm1955 = vcmask 8192
          %1956 = vst.msk [vmem:[%s550] sm:$0x1] %vm1955, %v1950
          %v1957 = vsel %vm1955, %v1950, -inf
          %1958 = vmax.xlane.f32.xlu0 %v1957
          %v1959 = vpop.xlane.xlu0 %1958
          %v1960 = vsub.f32 %v1950, %v1959
          %v1961 = vmul.f32 %v1960, 1.442695
          %v1962 = vpow.pop %v1961
          %v1963 = vsel %vm1955, %v1962, 0.0
          %1964 = vadd.xlane.f32.xlu0 %v1963
          %v1965 = vpop.xlane.xlu0 %1964
          %v1966 = vrcp.pop %v1965
          %v1967 = vmul.f32 %v1962, %v1966
          %1968 = vst.msk [vmem:[%s556] sm:$0x1] %vm1955, %v1967
          %v1969 = vld [vmem:[#allocation6] sm:$0x1]
          %1970 = vst [vmem:[%s562] sm:$0x1] %v1969
        $region84: #{tpu_custom_call.1} parent=71 // pred_fallthru
          _
        %s1971 = sand.u32 %s345, 1
        %s1972 = scalar_lea.sflag [#allocation10], %s1971
        %s1973 = sand.u32 %s345, 1
        %s1974 = scalar_lea.vmem [#allocation11], %s1973
        %s1975 = sand.u32 %s36, 1
        %s1976 = scalar_lea.sflag [#allocation13], %s1975
        %s1977 = sand.u32 %s371, 1
        %s1978 = scalar_lea.vmem [#allocation12], %s1977
        %s1979 = sand.u32 %s36, 1
        %s1980 = scalar_lea.sflag [#allocation13], %s1979
        %s1981 = sand.u32 %s397, 1
        %s1982 = scalar_lea.vmem [#allocation14], %s1981
        // Predicated region
        $region85: #{tpu_custom_call.1} parent=71 // pred_check
          %p1983 = pneg %p355
        $region86: #{tpu_custom_call.1} parent=71 // pred_check_branch
          %1985 = sbr.rel (%p1983) target = $region88
        $region87: #{tpu_custom_call.1} parent=71 // pred_region
          %s1987 = ssub.s32 16, 16
          %1988 = vsyncadd %s1972, %s1987
          %s1989 = smul.addr %s41, 16
          %s1990 = scalar_lea.hbm %s13, %s1989
          %s1992 = sshll.u32 %s1974, 4
          %s1993 = int_to_ptr.vmem [resolvable:$true] %s1992
          %1995 = dma.vmem_to_hbm [thread:$0]  %s1993, 16, %s1990, %s1972
        $region88: #{tpu_custom_call.1} parent=71 // pred_fallthru
          _
        // Predicated region
        $region89: #{tpu_custom_call.1} parent=71 // pred_check
          %p1996 = pneg %p381
        $region90: #{tpu_custom_call.1} parent=71 // pred_check_branch
          %1998 = sbr.rel (%p1996) target = $region92
        $region91: #{tpu_custom_call.1} parent=71 // pred_region
          %s2000 = ssub.s32 16, 16
          %2001 = vsyncadd %s1976, %s2000
          %s2002 = smul.addr %s41, 16
          %s2003 = scalar_lea.hbm %s14, %s2002
          %s2005 = sshll.u32 %s1978, 4
          %s2006 = int_to_ptr.vmem [resolvable:$true] %s2005
          %2008 = dma.vmem_to_hbm [thread:$0]  %s2006, 16, %s2003, %s1976
        $region92: #{tpu_custom_call.1} parent=71 // pred_fallthru
          _
        // Predicated region
        $region93: #{tpu_custom_call.1} parent=71 // pred_check
          %p2009 = pneg %p407
        $region94: #{tpu_custom_call.1} parent=71 // pred_check_branch
          %2011 = sbr.rel (%p2009) target = $region96
        $region95: #{tpu_custom_call.1} parent=71 // pred_region
          %s2013 = ssub.s32 16, 16
          %2014 = vsyncadd %s1980, %s2013
          %s2015 = smul.addr %s41, 16
          %s2016 = scalar_lea.hbm %s15, %s2015
          %s2018 = sshll.u32 %s1982, 4
          %s2019 = int_to_ptr.vmem [resolvable:$true] %s2018
          %2021 = dma.vmem_to_hbm [thread:$0]  %s2019, 16, %s2016, %s1980
        $region96: #{tpu_custom_call.1} parent=71 // pred_fallthru
          _
      $region72: #{tpu_custom_call.1} parent=5 // pred_fallthru
        _
      %p2022 = scmp.le.s32.totalorder 2, %s31
      // Predicated region
      $region97: #{tpu_custom_call.1} parent=5 // pred_check
        %p2023 = pneg %p2022
      $region98: #{tpu_custom_call.1} parent=5 // pred_check_branch
        %2025 = sbr.rel (%p2023) target = $region100
      $region99: #{tpu_custom_call.1} parent=5 // pred_region
        %s2026 = ssub.s32 %s31, 2
        // Predicated region
        $region101: #{tpu_custom_call.1} parent=99 // pred_check
          %p2027 = pneg %p361
        $region102: #{tpu_custom_call.1} parent=99 // pred_check_branch
          %2029 = sbr.rel (%p2027) target = $region104
        $region103: #{tpu_custom_call.1} parent=99 // pred_region
          %s2030 = sand.u32 %s346, 1
          %s2031 = scalar_lea.sflag [#allocation10], %s2030
          %s2032 = sand.u32 %s346, 1
          %s2033 = scalar_lea.vmem [#allocation11], %s2032
          %2034 = dma.done %s2031, 16
        $region104: #{tpu_custom_call.1} parent=99 // pred_fallthru
          _
        // Predicated region
        $region105: #{tpu_custom_call.1} parent=99 // pred_check
          %p2035 = pneg %p387
        $region106: #{tpu_custom_call.1} parent=99 // pred_check_branch
          %2037 = sbr.rel (%p2035) target = $region108
        $region107: #{tpu_custom_call.1} parent=99 // pred_region
          %s2038 = sand.u32 %s37, 1
          %s2039 = scalar_lea.sflag [#allocation13], %s2038
          %s2040 = sand.u32 %s372, 1
          %s2041 = scalar_lea.vmem [#allocation12], %s2040
          %2042 = dma.done %s2039, 16
        $region108: #{tpu_custom_call.1} parent=99 // pred_fallthru
          _
        // Predicated region
        $region109: #{tpu_custom_call.1} parent=99 // pred_check
          %p2043 = pneg %p413
        $region110: #{tpu_custom_call.1} parent=99 // pred_check_branch
          %2045 = sbr.rel (%p2043) target = $region112
        $region111: #{tpu_custom_call.1} parent=99 // pred_region
          %s2046 = sand.u32 %s37, 1
          %s2047 = scalar_lea.sflag [#allocation13], %s2046
          %s2048 = sand.u32 %s398, 1
          %s2049 = scalar_lea.vmem [#allocation14], %s2048
          %2050 = dma.done %s2047, 16
        $region112: #{tpu_custom_call.1} parent=99 // pred_fallthru
          _
      $region100: #{tpu_custom_call.1} parent=5 // pred_fallthru
        _
    $region6: #{tpu_custom_call.1} parent=1 // loop_footer
      %s35 = sadd.s32 1, %s31
    $region7: #{tpu_custom_call.1} parent=1 // loop_footer_branch
      %30 = sbr.rel target = $region3
    $region8: #{tpu_custom_call.1} parent=1 // loop_exit
      _
    %2051 = vsyncpa [#allocation9], 1
    %s2052 = scalar_lea.sflag [#allocation9], 1
    %2053 = vsyncpa %s2052, 1
    %2054 = vsyncpa [#allocation10], 1
    %s2055 = scalar_lea.sflag [#allocation10], 1
    %2056 = vsyncpa %s2055, 1
    %2057 = vsyncpa [#allocation13], 1
    %s2058 = scalar_lea.sflag [#allocation13], 1
    %2059 = vsyncpa %s2058, 1

// kernel: tpu_custom_call.1
$region0: #{tpu_custom_call.1}
  #allocation0 [shape = 'u32[]', space=smem, size = 0x4, offset = 0x4, fixed_abs, tag = 'smem constant byte address 0x4 - core index']
  #allocation1 [shape = 'u32[144,128]{1,0:T(1,128)}', space=vmem, size = 0x12000, scoped, tag = 'internal scratch']
  #allocation2 [shape = 'f32[8,128]{1,0:T(8,128)}', space=vmem, size = 0x1000, scoped, tag = 'scratch operand']
  #allocation3 [shape = 'f32[1,1]{1,0:T(1,128)}', space=vmem, size = 0x200, scoped, tag = 'scratch operand']
  #allocation4 [shape = 'f32[1,1]{1,0:T(1,128)}', space=vmem, size = 0x200, scoped, tag = 'scratch operand']
  #allocation5 [shape = 'f32[1,128]{1,0:T(1,128)}', space=vmem, size = 0x200, scoped, tag = 'scratch operand']
  #allocation6 [shape = 'f32[1,128]{1,0:T(1,128)}', space=vmem, size = 0x200, scoped, tag = 'scratch operand']
  #allocation7 [shape = 'f32[1,1]{1,0:T(1,128)S(1)}', space=vmem, size = 0x200, scoped, tag = 'scoped memory for tpu_custom_call.1']
  %s0 = inlined_call_operand.vmem [shape: bf16[2,16,1024], index: 0, kind: input, shape index: {}]
  %s1 = inlined_call_operand.hbm [shape: bf16[1024,128], index: 1, kind: input, shape index: {}]
  %s2 = inlined_call_operand.vmem [shape: f32[1,128], index: 2, kind: input, shape index: {}]
  %s3 = inlined_call_operand.vmem [shape: bf16[128,128], index: 3, kind: input, shape index: {}]
  %s4 = inlined_call_operand.vmem [shape: f32[1,128], index: 4, kind: input, shape index: {}]
  %s5 = inlined_call_operand.vmem [shape: bf16[128,64], index: 5, kind: input, shape index: {}]
  %s6 = inlined_call_operand.vmem [shape: f32[1,64], index: 6, kind: input, shape index: {}]
  %s7 = inlined_call_operand.vmem [shape: bf16[128,64], index: 7, kind: input, shape index: {}]
  %s8 = inlined_call_operand.vmem [shape: f32[1,64], index: 8, kind: input, shape index: {}]
  %s9 = inlined_call_operand.vmem [shape: bf16[1,64], index: 9, kind: input, shape index: {}]
  %s10 = inlined_call_operand.<no memory space> [shape: f32[1,1], index: 10, kind: input, shape index: {}]
  %s11 = inlined_call_operand.vmem [shape: bf16[128,2], index: 11, kind: input, shape index: {}]
  %s12 = inlined_call_operand.vmem [shape: f32[1,2], index: 12, kind: input, shape index: {}]
  %s13 = inlined_call_operand.hbm [shape: f32[2,1,2], index: 13, kind: output, shape index: {0}]
  %s14 = inlined_call_operand.hbm [shape: f32[2,1,2], index: 14, kind: output, shape index: {1}]
  %s15 = inlined_call_operand.hbm [shape: f32[2,1,128], index: 15, kind: output, shape index: {2}]
  %16 = xla_tuple %s13, %s14, %s15
  %s17 = sld [smem:[#allocation0]]
  $region113: #{tpu_custom_call.1} parent=0
    _
  %s19 = ssub.s32 1, %s17
  %s20 = scalar_select 0, %s19, %s17
  %v21 = vstv %s10
  %22 = vst [vmem:[#allocation7] sm:$0x1] %v21
  $region1: #{tpu_custom_call.1} parent=0
    #allocation8 [shape = 'u8[262144]{0}', space=vmem, size = 0x40000, scoped, tag = 'input window, operand 1, single buffered']
    #allocation9 [shape = 's32[2]{0}', space=sflag, size = 0x8, scoped, tag = 'scoped memory for tpu_custom_call.1']
    #allocation10 [shape = 's32[2]{0}', space=sflag, size = 0x8, scoped, tag = 'scoped memory for tpu_custom_call.1']
    #allocation11 [shape = 'u8[1024]{0}', space=vmem, size = 0x400, scoped, tag = 'output window, operand 0']
    #allocation12 [shape = 'u8[1024]{0}', space=vmem, size = 0x400, scoped, tag = 'output window, operand 1']
    #allocation13 [shape = 's32[2]{0}', space=sflag, size = 0x8, scoped, tag = 'scoped memory for tpu_custom_call.1']
    #allocation14 [shape = 'u8[1024]{0}', space=vmem, size = 0x400, scoped, tag = 'output window, operand 2']
    %23 = vsyncpa [#allocation9], 0
    %24 = vsyncpa [#allocation10], 0
    %s25 = scalar_lea.sflag [#allocation10], 1
    %26 = vsyncpa %s25, 0
    %27 = vsyncpa [#allocation13], 0
    %s28 = scalar_lea.sflag [#allocation13], 1
    %29 = vsyncpa %s28, 0
    loop: start=0, step=1, limit=4
    $region2: #{tpu_custom_call.1} parent=1 // loop_pre_header
      _
    $region3: #{tpu_custom_call.1} parent=1 // loop_header
      %s31 = sphi 0, %s35
      %p32 = scmp.ge.s32.totalorder %s31, 4
      %s38 = sphi 0, %s57
      %s39 = sphi 0, %s53
      %s40 = sphi 0, %s49
      %s41 = sphi 0, %s38
      %s42 = sphi 0, %s39
      %s43 = sphi 0, %s40
      %s44 = sphi 0, %s41
      %s45 = sphi 0, %s42
      %s46 = sphi 0, %s43
      %s64 = sphi 0, %s66
      %s67 = sphi 0, %s64
      %s68 = sphi 0, %s67
      %s84 = sphi 0, %s68
      %s88 = sphi 0, %s88
      %s90 = sphi 0, %s88
      %s91 = sphi 0, %s90
      %s105 = sphi 0, %s91
      %s109 = sphi 0, %s109
      %s111 = sphi 0, %s109
      %s112 = sphi 0, %s111
      %s126 = sphi 0, %s112
      %s130 = sphi 0, %s130
      %s132 = sphi 0, %s130
      %s133 = sphi 0, %s132
      %s147 = sphi 0, %s133
      %s151 = sphi 0, %s151
      %s153 = sphi 0, %s151
      %s154 = sphi 0, %s153
      %s168 = sphi 0, %s154
      %s172 = sphi 0, %s172
      %s174 = sphi 0, %s172
      %s175 = sphi 0, %s174
      %s189 = sphi 0, %s175
      %s193 = sphi 0, %s193
      %s195 = sphi 0, %s193
      %s196 = sphi 0, %s195
      %s210 = sphi 0, %s196
      %s214 = sphi 0, %s214
      %s216 = sphi 0, %s214
      %s217 = sphi 0, %s216
      %s231 = sphi 0, %s217
      %s235 = sphi 0, %s235
      %s237 = sphi 0, %s235
      %s238 = sphi 0, %s237
      %s252 = sphi 0, %s238
      %s256 = sphi 0, %s256
      %s258 = sphi 0, %s256
      %s259 = sphi 0, %s258
      %s273 = sphi 0, %s259
      %s277 = sphi 0, %s277
      %s279 = sphi 0, %s277
      %s280 = sphi 0, %s279
      %s294 = sphi 0, %s280
      %s298 = sphi 0, %s298
      %s300 = sphi 0, %s298
      %s301 = sphi 0, %s300
      %s315 = sphi 0, %s301
      %s319 = sphi 0, %s319
      %s321 = sphi 0, %s319
      %s322 = sphi 0, %s321
      %s336 = sphi 0, %s322
      %s342 = sphi 0, %s344
      %s345 = sphi 0, %s342
      %s346 = sphi 0, %s345
      %s362 = sphi 0, %s346
      %s368 = sphi 0, %s370
      %s371 = sphi 0, %s368
      %s372 = sphi 0, %s371
      %s388 = sphi 0, %s372
      %s394 = sphi 0, %s396
      %s397 = sphi 0, %s394
      %s398 = sphi 0, %s397
      %s414 = sphi 0, %s398
    $region4: #{tpu_custom_call.1} parent=1 // loop_header_branch
      %34 = sbr.rel (%p32) target = $region8
    $region5: #{tpu_custom_call.1} parent=1 // loop_body
      %s36 = ssub.s32 %s31, 1
      %s37 = ssub.s32 %s31, 2
      %s47 = sadd.s32 1, %s40
      %p48 = scmp.ge.s32.totalorder %s47, 1
      %s49 = scalar_select %p48, 0, %s47
      %s50 = sadd.s32 1, %s39
      %s51 = scalar_select %p48, %s50, %s39
      %p52 = scmp.ge.s32.totalorder %s51, 1
      %s53 = scalar_select %p52, 0, %s51
      %s54 = sadd.s32 1, %s38
      %s55 = scalar_select %p52, %s54, %s38
      %p56 = scmp.ge.s32.totalorder %s55, 2
      %s57 = scalar_select %p56, 0, %s55
      %s58 = ssub.s32 %s38, %s57
      %s59 = ssub.s32 %s39, %s53
      %s60 = sor.u32 %s58, %s59
      %s61 = ssub.s32 %s40, %s49
      %s62 = sor.u32 %s60, %s61
      %p63 = scmp.eq.s32.totalorder %s62, 0
      %s65 = sadd.s32 %s64, 1
      %s66 = scalar_select %p63, %s64, %s65
      %p69 = pneg %p63
      %p70 = scmp.eq.s32.totalorder %s31, 1
      %p71 = por %p69, %p70
      %p72 = scmp.ne.s32.totalorder %s64, %s67
      %p73 = scmp.eq.s32.totalorder %s31, 0
      %p74 = por %p72, %p73
      %p75 = scmp.ne.s32.totalorder %s64, %s67
      %p76 = scmp.eq.s32.totalorder %s36, 1
      %p77 = por %p75, %p76
      %p78 = scmp.ne.s32.totalorder %s67, %s68
      %p79 = scmp.eq.s32.totalorder %s36, 0
      %p80 = por %p78, %p79
      %p81 = scmp.ne.s32.totalorder %s67, %s68
      %p82 = scmp.eq.s32.totalorder %s37, 1
      %p83 = por %p81, %p82
      %p85 = scmp.ne.s32.totalorder %s68, %s84
      %p86 = scmp.eq.s32.totalorder %s37, 0
      %p87 = por %p85, %p86
      %s89 = sadd.s32 %s88, 1
      %p92 = scmp.eq.s32.totalorder %s31, 1
      %p93 = scmp.ne.s32.totalorder %s88, %s90
      %p94 = scmp.eq.s32.totalorder %s31, 0
      %p95 = por %p93, %p94
      %p96 = scmp.ne.s32.totalorder %s88, %s90
      %p97 = scmp.eq.s32.totalorder %s36, 1
      %p98 = por %p96, %p97
      %p99 = scmp.ne.s32.totalorder %s90, %s91
      %p100 = scmp.eq.s32.totalorder %s36, 0
      %p101 = por %p99, %p100
      %p102 = scmp.ne.s32.totalorder %s90, %s91
      %p103 = scmp.eq.s32.totalorder %s37, 1
      %p104 = por %p102, %p103
      %p106 = scmp.ne.s32.totalorder %s91, %s105
      %p107 = scmp.eq.s32.totalorder %s37, 0
      %p108 = por %p106, %p107
      %s110 = sadd.s32 %s109, 1
      %p113 = scmp.eq.s32.totalorder %s31, 1
      %p114 = scmp.ne.s32.totalorder %s109, %s111
      %p115 = scmp.eq.s32.totalorder %s31, 0
      %p116 = por %p114, %p115
      %p117 = scmp.ne.s32.totalorder %s109, %s111
      %p118 = scmp.eq.s32.totalorder %s36, 1
      %p119 = por %p117, %p118
      %p120 = scmp.ne.s32.totalorder %s111, %s112
      %p121 = scmp.eq.s32.totalorder %s36, 0
      %p122 = por %p120, %p121
      %p123 = scmp.ne.s32.totalorder %s111, %s112
      %p124 = scmp.eq.s32.totalorder %s37, 1
      %p125 = por %p123, %p124
      %p127 = scmp.ne.s32.totalorder %s112, %s126
      %p128 = scmp.eq.s32.totalorder %s37, 0
      %p129 = por %p127, %p128
      %s131 = sadd.s32 %s130, 1
      %p134 = scmp.eq.s32.totalorder %s31, 1
      %p135 = scmp.ne.s32.totalorder %s130, %s132
      %p136 = scmp.eq.s32.totalorder %s31, 0
      %p137 = por %p135, %p136
      %p138 = scmp.ne.s32.totalorder %s130, %s132
      %p139 = scmp.eq.s32.totalorder %s36, 1
      %p140 = por %p138, %p139
      %p141 = scmp.ne.s32.totalorder %s132, %s133
      %p142 = scmp.eq.s32.totalorder %s36, 0
      %p143 = por %p141, %p142
      %p144 = scmp.ne.s32.totalorder %s132, %s133
      %p145 = scmp.eq.s32.totalorder %s37, 1
      %p146 = por %p144, %p145
      %p148 = scmp.ne.s32.totalorder %s133, %s147
      %p149 = scmp.eq.s32.totalorder %s37, 0
      %p150 = por %p148, %p149
      %s152 = sadd.s32 %s151, 1
      %p155 = scmp.eq.s32.totalorder %s31, 1
      %p156 = scmp.ne.s32.totalorder %s151, %s153
      %p157 = scmp.eq.s32.totalorder %s31, 0
      %p158 = por %p156, %p157
      %p159 = scmp.ne.s32.totalorder %s151, %s153
      %p160 = scmp.eq.s32.totalorder %s36, 1
      %p161 = por %p159, %p160
      %p162 = scmp.ne.s32.totalorder %s153, %s154
      %p163 = scmp.eq.s32.totalorder %s36, 0
      %p164 = por %p162, %p163
      %p165 = scmp.ne.s32.totalorder %s153, %s154
      %p166 = scmp.eq.s32.totalorder %s37, 1
      %p167 = por %p165, %p166
      %p169 = scmp.ne.s32.totalorder %s154, %s168
      %p170 = scmp.eq.s32.totalorder %s37, 0
      %p171 = por %p169, %p170
      %s173 = sadd.s32 %s172, 1
      %p176 = scmp.eq.s32.totalorder %s31, 1
      %p177 = scmp.ne.s32.totalorder %s172, %s174
      %p178 = scmp.eq.s32.totalorder %s31, 0
      %p179 = por %p177, %p178
      %p180 = scmp.ne.s32.totalorder %s172, %s174
      %p181 = scmp.eq.s32.totalorder %s36, 1
      %p182 = por %p180, %p181
      %p183 = scmp.ne.s32.totalorder %s174, %s175
      %p184 = scmp.eq.s32.totalorder %s36, 0
      %p185 = por %p183, %p184
      %p186 = scmp.ne.s32.totalorder %s174, %s175
      %p187 = scmp.eq.s32.totalorder %s37, 1
      %p188 = por %p186, %p187
      %p190 = scmp.ne.s32.totalorder %s175, %s189
      %p191 = scmp.eq.s32.totalorder %s37, 0
      %p192 = por %p190, %p191
      %s194 = sadd.s32 %s193, 1
      %p197 = scmp.eq.s32.totalorder %s31, 1
      %p198 = scmp.ne.s32.totalorder %s193, %s195
      %p199 = scmp.eq.s32.totalorder %s31, 0
      %p200 = por %p198, %p199
      %p201 = scmp.ne.s32.totalorder %s193, %s195
      %p202 = scmp.eq.s32.totalorder %s36, 1
      %p203 = por %p201, %p202
      %p204 = scmp.ne.s32.totalorder %s195, %s196
      %p205 = scmp.eq.s32.totalorder %s36, 0
      %p206 = por %p204, %p205
      %p207 = scmp.ne.s32.totalorder %s195, %s196
      %p208 = scmp.eq.s32.totalorder %s37, 1
      %p209 = por %p207, %p208
      %p211 = scmp.ne.s32.totalorder %s196, %s210
      %p212 = scmp.eq.s32.totalorder %s37, 0
      %p213 = por %p211, %p212
      %s215 = sadd.s32 %s214, 1
      %p218 = scmp.eq.s32.totalorder %s31, 1
      %p219 = scmp.ne.s32.totalorder %s214, %s216
      %p220 = scmp.eq.s32.totalorder %s31, 0
      %p221 = por %p219, %p220
      %p222 = scmp.ne.s32.totalorder %s214, %s216
      %p223 = scmp.eq.s32.totalorder %s36, 1
      %p224 = por %p222, %p223
      %p225 = scmp.ne.s32.totalorder %s216, %s217
      %p226 = scmp.eq.s32.totalorder %s36, 0
      %p227 = por %p225, %p226
      %p228 = scmp.ne.s32.totalorder %s216, %s217
      %p229 = scmp.eq.s32.totalorder %s37, 1
      %p230 = por %p228, %p229
      %p232 = scmp.ne.s32.totalorder %s217, %s231
      %p233 = scmp.eq.s32.totalorder %s37, 0
      %p234 = por %p232, %p233
      %s236 = sadd.s32 %s235, 1
      %p239 = scmp.eq.s32.totalorder %s31, 1
      %p240 = scmp.ne.s32.totalorder %s235, %s237
      %p241 = scmp.eq.s32.totalorder %s31, 0
      %p242 = por %p240, %p241
      %p243 = scmp.ne.s32.totalorder %s235, %s237
      %p244 = scmp.eq.s32.totalorder %s36, 1
      %p245 = por %p243, %p244
      %p246 = scmp.ne.s32.totalorder %s237, %s238
      %p247 = scmp.eq.s32.totalorder %s36, 0
      %p248 = por %p246, %p247
      %p249 = scmp.ne.s32.totalorder %s237, %s238
      %p250 = scmp.eq.s32.totalorder %s37, 1
      %p251 = por %p249, %p250
      %p253 = scmp.ne.s32.totalorder %s238, %s252
      %p254 = scmp.eq.s32.totalorder %s37, 0
      %p255 = por %p253, %p254
      %s257 = sadd.s32 %s256, 1
      %p260 = scmp.eq.s32.totalorder %s31, 1
      %p261 = scmp.ne.s32.totalorder %s256, %s258
      %p262 = scmp.eq.s32.totalorder %s31, 0
      %p263 = por %p261, %p262
      %p264 = scmp.ne.s32.totalorder %s256, %s258
      %p265 = scmp.eq.s32.totalorder %s36, 1
      %p266 = por %p264, %p265
      %p267 = scmp.ne.s32.totalorder %s258, %s259
      %p268 = scmp.eq.s32.totalorder %s36, 0
      %p269 = por %p267, %p268
      %p270 = scmp.ne.s32.totalorder %s258, %s259
      %p271 = scmp.eq.s32.totalorder %s37, 1
      %p272 = por %p270, %p271
      %p274 = scmp.ne.s32.totalorder %s259, %s273
      %p275 = scmp.eq.s32.totalorder %s37, 0
      %p276 = por %p274, %p275
      %s278 = sadd.s32 %s277, 1
      %p281 = scmp.eq.s32.totalorder %s31, 1
      %p282 = scmp.ne.s32.totalorder %s277, %s279
      %p283 = scmp.eq.s32.totalorder %s31, 0
      %p284 = por %p282, %p283
      %p285 = scmp.ne.s32.totalorder %s277, %s279
      %p286 = scmp.eq.s32.totalorder %s36, 1
      %p287 = por %p285, %p286
      %p288 = scmp.ne.s32.totalorder %s279, %s280
      %p289 = scmp.eq.s32.totalorder %s36, 0
      %p290 = por %p288, %p289
      %p291 = scmp.ne.s32.totalorder %s279, %s280
      %p292 = scmp.eq.s32.totalorder %s37, 1
      %p293 = por %p291, %p292
      %p295 = scmp.ne.s32.totalorder %s280, %s294
      %p296 = scmp.eq.s32.totalorder %s37, 0
      %p297 = por %p295, %p296
      %s299 = sadd.s32 %s298, 1
      %p302 = scmp.eq.s32.totalorder %s31, 1
      %p303 = scmp.ne.s32.totalorder %s298, %s300
      %p304 = scmp.eq.s32.totalorder %s31, 0
      %p305 = por %p303, %p304
      %p306 = scmp.ne.s32.totalorder %s298, %s300
      %p307 = scmp.eq.s32.totalorder %s36, 1
      %p308 = por %p306, %p307
      %p309 = scmp.ne.s32.totalorder %s300, %s301
      %p310 = scmp.eq.s32.totalorder %s36, 0
      %p311 = por %p309, %p310
      %p312 = scmp.ne.s32.totalorder %s300, %s301
      %p313 = scmp.eq.s32.totalorder %s37, 1
      %p314 = por %p312, %p313
      %p316 = scmp.ne.s32.totalorder %s301, %s315
      %p317 = scmp.eq.s32.totalorder %s37, 0
      %p318 = por %p316, %p317
      %s320 = sadd.s32 %s319, 1
      %p323 = scmp.eq.s32.totalorder %s31, 1
      %p324 = scmp.ne.s32.totalorder %s319, %s321
      %p325 = scmp.eq.s32.totalorder %s31, 0
      %p326 = por %p324, %p325
      %p327 = scmp.ne.s32.totalorder %s319, %s321
      %p328 = scmp.eq.s32.totalorder %s36, 1
      %p329 = por %p327, %p328
      %p330 = scmp.ne.s32.totalorder %s321, %s322
      %p331 = scmp.eq.s32.totalorder %s36, 0
      %p332 = por %p330, %p331
      %p333 = scmp.ne.s32.totalorder %s321, %s322
      %p334 = scmp.eq.s32.totalorder %s37, 1
      %p335 = por %p333, %p334
      %p337 = scmp.ne.s32.totalorder %s322, %s336
      %p338 = scmp.eq.s32.totalorder %s37, 0
      %p339 = por %p337, %p338
      %s340 = ssub.s32 %s38, %s57
      %p341 = scmp.eq.s32.totalorder %s340, 0
      %s343 = sadd.s32 %s342, 1
      %s344 = scalar_select %p341, %s342, %s343
      %p347 = pneg %p341
      %p348 = scmp.eq.s32.totalorder %s31, 1
      %p349 = por %p347, %p348
      %p350 = scmp.ne.s32.totalorder %s342, %s345
      %p351 = scmp.eq.s32.totalorder %s31, 0
      %p352 = por %p350, %p351
      %p353 = scmp.ne.s32.totalorder %s342, %s345
      %p354 = scmp.eq.s32.totalorder %s36, 1
      %p355 = por %p353, %p354
      %p356 = scmp.ne.s32.totalorder %s345, %s346
      %p357 = scmp.eq.s32.totalorder %s36, 0
      %p358 = por %p356, %p357
      %p359 = scmp.ne.s32.totalorder %s345, %s346
      %p360 = scmp.eq.s32.totalorder %s37, 1
      %p361 = por %p359, %p360
      %p363 = scmp.ne.s32.totalorder %s346, %s362
      %p364 = scmp.eq.s32.totalorder %s37, 0
      %p365 = por %p363, %p364
      %s366 = ssub.s32 %s38, %s57
      %p367 = scmp.eq.s32.totalorder %s366, 0
      %s369 = sadd.s32 %s368, 1
      %s370 = scalar_select %p367, %s368, %s369
      %p373 = pneg %p367
      %p374 = scmp.eq.s32.totalorder %s31, 1
      %p375 = por %p373, %p374
      %p376 = scmp.ne.s32.totalorder %s368, %s371
      %p377 = scmp.eq.s32.totalorder %s31, 0
      %p378 = por %p376, %p377
      %p379 = scmp.ne.s32.totalorder %s368, %s371
      %p380 = scmp.eq.s32.totalorder %s36, 1
      %p381 = por %p379, %p380
      %p382 = scmp.ne.s32.totalorder %s371, %s372
      %p383 = scmp.eq.s32.totalorder %s36, 0
      %p384 = por %p382, %p383
      %p385 = scmp.ne.s32.totalorder %s371, %s372
      %p386 = scmp.eq.s32.totalorder %s37, 1
      %p387 = por %p385, %p386
      %p389 = scmp.ne.s32.totalorder %s372, %s388
      %p390 = scmp.eq.s32.totalorder %s37, 0
      %p391 = por %p389, %p390
      %s392 = ssub.s32 %s38, %s57
      %p393 = scmp.eq.s32.totalorder %s392, 0
      %s395 = sadd.s32 %s394, 1
      %s396 = scalar_select %p393, %s394, %s395
      %p399 = pneg %p393
      %p400 = scmp.eq.s32.totalorder %s31, 1
      %p401 = por %p399, %p400
      %p402 = scmp.ne.s32.totalorder %s394, %s397
      %p403 = scmp.eq.s32.totalorder %s31, 0
      %p404 = por %p402, %p403
      %p405 = scmp.ne.s32.totalorder %s394, %s397
      %p406 = scmp.eq.s32.totalorder %s36, 1
      %p407 = por %p405, %p406
      %p408 = scmp.ne.s32.totalorder %s397, %s398
      %p409 = scmp.eq.s32.totalorder %s36, 0
      %p410 = por %p408, %p409
      %p411 = scmp.ne.s32.totalorder %s397, %s398
      %p412 = scmp.eq.s32.totalorder %s37, 1
      %p413 = por %p411, %p412
      %p415 = scmp.ne.s32.totalorder %s398, %s414
      %p416 = scmp.eq.s32.totalorder %s37, 0
      %p417 = por %p415, %p416
      %p418 = scmp.le.s32.totalorder 1, %s31
      %p419 = scmp.lt.s32.totalorder %s31, 3
      %p420 = pnand %p418, %p419
      %p421 = pneg %p420
      // Predicated region
      $region9: #{tpu_custom_call.1} parent=5 // pred_check
        _
      $region10: #{tpu_custom_call.1} parent=5 // pred_check_branch
        %423 = sbr.rel (%p420) target = $region12
      $region11: #{tpu_custom_call.1} parent=5 // pred_region
        %s424 = ssub.s32 %s31, 1
        // Predicated region
        $region13: #{tpu_custom_call.1} parent=11 // pred_check
          %p425 = pneg %p101
        $region14: #{tpu_custom_call.1} parent=11 // pred_check_branch
          %427 = sbr.rel (%p425) target = $region16
        $region15: #{tpu_custom_call.1} parent=11 // pred_region
          %s429 = ssub.s32 8192, 8192
          %430 = vsyncadd [#allocation9], %s429
          %s431 = sshll.u32 [#allocation8], 4
          %s432 = int_to_ptr.vmem [resolvable:$true] %s431
          %437 = dma.hbm_to_vmem [thread:$0]  %s1, 8192, %s432, [#allocation9], 64, 64, 4
        $region16: #{tpu_custom_call.1} parent=11 // pred_fallthru
          _
        // Predicated region
        $region17: #{tpu_custom_call.1} parent=11 // pred_check
          %p438 = pneg %p122
        $region18: #{tpu_custom_call.1} parent=11 // pred_check_branch
          %440 = sbr.rel (%p438) target = $region20
        $region19: #{tpu_custom_call.1} parent=11 // pred_region
          _
        $region20: #{tpu_custom_call.1} parent=11 // pred_fallthru
          _
        // Predicated region
        $region21: #{tpu_custom_call.1} parent=11 // pred_check
          %p441 = pneg %p143
        $region22: #{tpu_custom_call.1} parent=11 // pred_check_branch
          %443 = sbr.rel (%p441) target = $region24
        $region23: #{tpu_custom_call.1} parent=11 // pred_region
          _
        $region24: #{tpu_custom_call.1} parent=11 // pred_fallthru
          _
        // Predicated region
        $region25: #{tpu_custom_call.1} parent=11 // pred_check
          %p444 = pneg %p164
        $region26: #{tpu_custom_call.1} parent=11 // pred_check_branch
          %446 = sbr.rel (%p444) target = $region28
        $region27: #{tpu_custom_call.1} parent=11 // pred_region
          _
        $region28: #{tpu_custom_call.1} parent=11 // pred_fallthru
          _
        // Predicated region
        $region29: #{tpu_custom_call.1} parent=11 // pred_check
          %p447 = pneg %p185
        $region30: #{tpu_custom_call.1} parent=11 // pred_check_branch
          %449 = sbr.rel (%p447) target = $region32
        $region31: #{tpu_custom_call.1} parent=11 // pred_region
          _
        $region32: #{tpu_custom_call.1} parent=11 // pred_fallthru
          _
        // Predicated region
        $region33: #{tpu_custom_call.1} parent=11 // pred_check
          %p450 = pneg %p206
        $region34: #{tpu_custom_call.1} parent=11 // pred_check_branch
          %452 = sbr.rel (%p450) target = $region36
        $region35: #{tpu_custom_call.1} parent=11 // pred_region
          _
        $region36: #{tpu_custom_call.1} parent=11 // pred_fallthru
          _
        // Predicated region
        $region37: #{tpu_custom_call.1} parent=11 // pred_check
          %p453 = pneg %p227
        $region38: #{tpu_custom_call.1} parent=11 // pred_check_branch
          %455 = sbr.rel (%p453) target = $region40
        $region39: #{tpu_custom_call.1} parent=11 // pred_region
          _
        $region40: #{tpu_custom_call.1} parent=11 // pred_fallthru
          _
        // Predicated region
        $region41: #{tpu_custom_call.1} parent=11 // pred_check
          %p456 = pneg %p248
        $region42: #{tpu_custom_call.1} parent=11 // pred_check_branch
          %458 = sbr.rel (%p456) target = $region44
        $region43: #{tpu_custom_call.1} parent=11 // pred_region
          _
        $region44: #{tpu_custom_call.1} parent=11 // pred_fallthru
          _
        // Predicated region
        $region45: #{tpu_custom_call.1} parent=11 // pred_check
          %p459 = pneg %p269
        $region46: #{tpu_custom_call.1} parent=11 // pred_check_branch
          %461 = sbr.rel (%p459) target = $region48
        $region47: #{tpu_custom_call.1} parent=11 // pred_region
          _
        $region48: #{tpu_custom_call.1} parent=11 // pred_fallthru
          _
        // Predicated region
        $region49: #{tpu_custom_call.1} parent=11 // pred_check
          %p462 = pneg %p290
        $region50: #{tpu_custom_call.1} parent=11 // pred_check_branch
          %464 = sbr.rel (%p462) target = $region52
        $region51: #{tpu_custom_call.1} parent=11 // pred_region
          _
        $region52: #{tpu_custom_call.1} parent=11 // pred_fallthru
          _
        // Predicated region
        $region53: #{tpu_custom_call.1} parent=11 // pred_check
          %p465 = pneg %p311
        $region54: #{tpu_custom_call.1} parent=11 // pred_check_branch
          %467 = sbr.rel (%p465) target = $region56
        $region55: #{tpu_custom_call.1} parent=11 // pred_region
          _
        $region56: #{tpu_custom_call.1} parent=11 // pred_fallthru
          _
        // Predicated region
        $region57: #{tpu_custom_call.1} parent=11 // pred_check
          %p468 = pneg %p332
        $region58: #{tpu_custom_call.1} parent=11 // pred_check_branch
          %470 = sbr.rel (%p468) target = $region60
        $region59: #{tpu_custom_call.1} parent=11 // pred_region
          _
        $region60: #{tpu_custom_call.1} parent=11 // pred_fallthru
          _
      $region12: #{tpu_custom_call.1} parent=5 // pred_fallthru
        _
      %p471 = scmp.lt.s32.totalorder %s31, 2
      // Predicated region
      $region61: #{tpu_custom_call.1} parent=5 // pred_check
        %p472 = pneg %p471
      $region62: #{tpu_custom_call.1} parent=5 // pred_check_branch
        %474 = sbr.rel (%p472) target = $region64
      $region63: #{tpu_custom_call.1} parent=5 // pred_region
        // Predicated region
        $region65: #{tpu_custom_call.1} parent=63 // pred_check
          %p475 = pneg %p74
        $region66: #{tpu_custom_call.1} parent=63 // pred_check_branch
          %477 = sbr.rel (%p475) target = $region68
        $region67: #{tpu_custom_call.1} parent=63 // pred_region
          %s478 = smul.u32 2, %s39
          %s479 = smul.u32 8, %s40
          %p480 = scmp.lt.s32.totalorder %s38, 1
          %s481 = scalar_select %p480, %s38, 1
          %p482 = scmp.lt.s32.totalorder %s478, 1
          %s483 = scalar_select %p482, %s478, 1
          %p484 = scmp.lt.s32.totalorder %s479, 7
          %s485 = scalar_select %p484, %s479, 7
          %s486 = smul.addr %s483, 8
          %s487 = sadd.s32 %s485, %s486
          %s488 = smul.addr %s481, 16
          %s489 = sadd.s32 %s487, %s488
          %s490 = smul.addr %s489, 4
          %s491 = scalar_lea.vmem %s0, %s490
          %s492 = smul.u32 2, %s39
          %s493 = smul.u32 8, %s40
        $region68: #{tpu_custom_call.1} parent=63 // pred_fallthru
          _
      $region64: #{tpu_custom_call.1} parent=5 // pred_fallthru
        _
      %p494 = scmp.le.s32.totalorder 1, %s31
      %p495 = scmp.lt.s32.totalorder %s31, 3
      %p496 = pnand %p494, %p495
      %p497 = pneg %p496
      // Predicated region
      $region69: #{tpu_custom_call.1} parent=5 // pred_check
        _
      $region70: #{tpu_custom_call.1} parent=5 // pred_check_branch
        %499 = sbr.rel (%p496) target = $region72
      $region71: #{tpu_custom_call.1} parent=5 // pred_region
        %s500 = ssub.s32 %s31, 1
        // Predicated region
        $region73: #{tpu_custom_call.1} parent=71 // pred_check
          %p501 = pneg %p101
        $region74: #{tpu_custom_call.1} parent=71 // pred_check_branch
          %503 = sbr.rel (%p501) target = $region76
        $region75: #{tpu_custom_call.1} parent=71 // pred_region
          %504 = dma.done [#allocation9], 8192
        $region76: #{tpu_custom_call.1} parent=71 // pred_fallthru
          _
        %s505 = smul.u32 2, %s42
        %s506 = smul.u32 8, %s43
        %p507 = scmp.lt.s32.totalorder %s41, 1
        %s508 = scalar_select %p507, %s41, 1
        %p509 = scmp.lt.s32.totalorder %s505, 1
        %s510 = scalar_select %p509, %s505, 1
        %p511 = scmp.lt.s32.totalorder %s506, 7
        %s512 = scalar_select %p511, %s506, 7
        %s513 = smul.addr %s510, 8
        %s514 = sadd.s32 %s512, %s513
        %s515 = smul.addr %s508, 16
        %s516 = sadd.s32 %s514, %s515
        %s517 = smul.addr %s516, 4
        %s518 = scalar_lea.vmem %s0, %s517
        %p519 = pneg %p80
        %p520 = pneg %p77
        %p521 = pneg %p101
        %p522 = pneg %p98
        %p523 = pneg %p122
        %p524 = pneg %p119
        %p525 = pneg %p143
        %p526 = pneg %p140
        %p527 = pneg %p164
        %p528 = pneg %p161
        %p529 = pneg %p185
        %p530 = pneg %p182
        %p531 = pneg %p206
        %p532 = pneg %p203
        %p533 = pneg %p227
        %p534 = pneg %p224
        %p535 = pneg %p248
        %p536 = pneg %p245
        %p537 = pneg %p269
        %p538 = pneg %p266
        %p539 = pneg %p290
        %p540 = pneg %p287
        %p541 = pneg %p311
        %p542 = pneg %p308
        %p543 = pneg %p332
        %p544 = pneg %p329
        %p545 = pneg %p358
        %p546 = pneg %p355
        %s547 = sand.u32 %s345, 1
        %s548 = scalar_lea.sflag [#allocation10], %s547
        %s549 = sand.u32 %s345, 1
        %s550 = scalar_lea.vmem [#allocation11], %s549
        %p551 = pneg %p384
        %p552 = pneg %p381
        %s553 = sand.u32 %s36, 1
        %s554 = scalar_lea.sflag [#allocation13], %s553
        %s555 = sand.u32 %s371, 1
        %s556 = scalar_lea.vmem [#allocation12], %s555
        %p557 = pneg %p410
        %p558 = pneg %p407
        %s559 = sand.u32 %s36, 1
        %s560 = scalar_lea.sflag [#allocation13], %s559
        %s561 = sand.u32 %s397, 1
        %s562 = scalar_lea.vmem [#allocation14], %s561
        %s563 = smul.u32 2, %s42
        %s564 = smul.u32 8, %s43
        %p565 = scmp.lt.s32.totalorder %s41, 1
        %s566 = scalar_select %p565, %s41, 1
        %p567 = scmp.lt.s32.totalorder %s563, 1
        %s568 = scalar_select %p567, %s563, 1
        %p569 = scmp.lt.s32.totalorder %s564, 7
        %s570 = scalar_select %p569, %s564, 7
        %s571 = smul.addr %s568, 8
        %s572 = sadd.s32 %s570, %s571
        %s573 = smul.addr %s566, 16
        %s574 = sadd.s32 %s572, %s573
        %s575 = smul.addr %s574, 4
        %s576 = scalar_lea.vmem %s0, %s575
        %s577 = smul.u32 2, %s42
        %s578 = smul.u32 8, %s43
        %p580 = scmp.eq.s32.totalorder %s42, 0
        %p581 = scmp.eq.s32.totalorder %s43, 0
        %p582 = pnand %p580, %p581
        %p583 = pneg %p582
        // Predicated region
        $region77: #{tpu_custom_call.1} parent=71 // pred_check
          _
        $region78: #{tpu_custom_call.1} parent=71 // pred_check_branch
          %585 = sbr.rel (%p582) target = $region80
        $region79: #{tpu_custom_call.1} parent=71 // pred_region
          %vm586 = vcmask 0
          %587 = vst.msk [vmem:[#allocation3] sm:$0x1] %vm586, -inf
          %588 = vst.msk [vmem:[#allocation4] sm:$0x1] %vm586, 0.0
          %589 = vst [vmem:[#allocation5] sm:$0x1] 0.0
          %590 = vst [vmem:[#allocation6] sm:$0x1] 0.0
        $region80: #{tpu_custom_call.1} parent=71 // pred_fallthru
          _
        %v591 = vld [vmem:[%s576] sm:$0xff]
        %v592 = vld [vmem:[%s576 + $0x8] sm:$0xff]
        %v593 = vld [vmem:[%s576 + $0x10] sm:$0xff]
        %v594 = vld [vmem:[%s576 + $0x18] sm:$0xff]
        %v595 = vld [vmem:[%s576 + $0x20] sm:$0xff]
        %v596 = vld [vmem:[%s576 + $0x28] sm:$0xff]
        %v597 = vld [vmem:[%s576 + $0x30] sm:$0xff]
        %v598 = vld [vmem:[%s576 + $0x38] sm:$0xff]
        %v599 = vld [vmem:[#allocation8] sm:$0xf]
        %v600 = vld [vmem:[#allocation8 + $0x4] sm:$0xf]
        %v601 = vld [vmem:[#allocation8 + $0x8] sm:$0xf]
        %v602 = vld [vmem:[#allocation8 + $0xc] sm:$0xf]
        %v603 = vld [vmem:[#allocation8 + $0x10] sm:$0xf]
        %v604 = vld [vmem:[#allocation8 + $0x14] sm:$0xf]
        %v605 = vld [vmem:[#allocation8 + $0x18] sm:$0xf]
        %v606 = vld [vmem:[#allocation8 + $0x1c] sm:$0xf]
        %v607 = vld [vmem:[#allocation8 + $0x20] sm:$0xf]
        %v608 = vld [vmem:[#allocation8 + $0x24] sm:$0xf]
        %v609 = vld [vmem:[#allocation8 + $0x28] sm:$0xf]
        %v610 = vld [vmem:[#allocation8 + $0x2c] sm:$0xf]
        %v611 = vld [vmem:[#allocation8 + $0x30] sm:$0xf]
        %v612 = vld [vmem:[#allocation8 + $0x34] sm:$0xf]
        %v613 = vld [vmem:[#allocation8 + $0x38] sm:$0xf]
        %v614 = vld [vmem:[#allocation8 + $0x3c] sm:$0xf]
        %v615 = vld [vmem:[#allocation8 + $0x40] sm:$0xf]
        %v616 = vld [vmem:[#allocation8 + $0x44] sm:$0xf]
        %v617 = vld [vmem:[#allocation8 + $0x48] sm:$0xf]
        %v618 = vld [vmem:[#allocation8 + $0x4c] sm:$0xf]
        %v619 = vld [vmem:[#allocation8 + $0x50] sm:$0xf]
        %v620 = vld [vmem:[#allocation8 + $0x54] sm:$0xf]
        %v621 = vld [vmem:[#allocation8 + $0x58] sm:$0xf]
        %v622 = vld [vmem:[#allocation8 + $0x5c] sm:$0xf]
        %v623 = vld [vmem:[#allocation8 + $0x60] sm:$0xf]
        %v624 = vld [vmem:[#allocation8 + $0x64] sm:$0xf]
        %v625 = vld [vmem:[#allocation8 + $0x68] sm:$0xf]
        %v626 = vld [vmem:[#allocation8 + $0x6c] sm:$0xf]
        %v627 = vld [vmem:[#allocation8 + $0x70] sm:$0xf]
        %v628 = vld [vmem:[#allocation8 + $0x74] sm:$0xf]
        %v629 = vld [vmem:[#allocation8 + $0x78] sm:$0xf]
        %v630 = vld [vmem:[#allocation8 + $0x7c] sm:$0xf]
        %v631 = vld [vmem:[#allocation8 + $0x80] sm:$0xf]
        %v632 = vld [vmem:[#allocation8 + $0x84] sm:$0xf]
        %v633 = vld [vmem:[#allocation8 + $0x88] sm:$0xf]
        %v634 = vld [vmem:[#allocation8 + $0x8c] sm:$0xf]
        %v635 = vld [vmem:[#allocation8 + $0x90] sm:$0xf]
        %v636 = vld [vmem:[#allocation8 + $0x94] sm:$0xf]
        %v637 = vld [vmem:[#allocation8 + $0x98] sm:$0xf]
        %v638 = vld [vmem:[#allocation8 + $0x9c] sm:$0xf]
        %v639 = vld [vmem:[#allocation8 + $0xa0] sm:$0xf]
        %v640 = vld [vmem:[#allocation8 + $0xa4] sm:$0xf]
        %v641 = vld [vmem:[#allocation8 + $0xa8] sm:$0xf]
        %v642 = vld [vmem:[#allocation8 + $0xac] sm:$0xf]
        %v643 = vld [vmem:[#allocation8 + $0xb0] sm:$0xf]
        %v644 = vld [vmem:[#allocation8 + $0xb4] sm:$0xf]
        %v645 = vld [vmem:[#allocation8 + $0xb8] sm:$0xf]
        %v646 = vld [vmem:[#allocation8 + $0xbc] sm:$0xf]
        %v647 = vld [vmem:[#allocation8 + $0xc0] sm:$0xf]
        %v648 = vld [vmem:[#allocation8 + $0xc4] sm:$0xf]
        %v649 = vld [vmem:[#allocation8 + $0xc8] sm:$0xf]
        %v650 = vld [vmem:[#allocation8 + $0xcc] sm:$0xf]
        %v651 = vld [vmem:[#allocation8 + $0xd0] sm:$0xf]
        %v652 = vld [vmem:[#allocation8 + $0xd4] sm:$0xf]
        %v653 = vld [vmem:[#allocation8 + $0xd8] sm:$0xf]
        %v654 = vld [vmem:[#allocation8 + $0xdc] sm:$0xf]
        %v655 = vld [vmem:[#allocation8 + $0xe0] sm:$0xf]
        %v656 = vld [vmem:[#allocation8 + $0xe4] sm:$0xf]
        %v657 = vld [vmem:[#allocation8 + $0xe8] sm:$0xf]
        %v658 = vld [vmem:[#allocation8 + $0xec] sm:$0xf]
        %v659 = vld [vmem:[#allocation8 + $0xf0] sm:$0xf]
        %v660 = vld [vmem:[#allocation8 + $0xf4] sm:$0xf]
        %v661 = vld [vmem:[#allocation8 + $0xf8] sm:$0xf]
        %v662 = vld [vmem:[#allocation8 + $0xfc] sm:$0xf]
        %v663 = vld [vmem:[#allocation8 + $0x100] sm:$0xf]
        %v664 = vld [vmem:[#allocation8 + $0x104] sm:$0xf]
        %v665 = vld [vmem:[#allocation8 + $0x108] sm:$0xf]
        %v666 = vld [vmem:[#allocation8 + $0x10c] sm:$0xf]
        %v667 = vld [vmem:[#allocation8 + $0x110] sm:$0xf]
        %v668 = vld [vmem:[#allocation8 + $0x114] sm:$0xf]
        %v669 = vld [vmem:[#allocation8 + $0x118] sm:$0xf]
        %v670 = vld [vmem:[#allocation8 + $0x11c] sm:$0xf]
        %v671 = vld [vmem:[#allocation8 + $0x120] sm:$0xf]
        %v672 = vld [vmem:[#allocation8 + $0x124] sm:$0xf]
        %v673 = vld [vmem:[#allocation8 + $0x128] sm:$0xf]
        %v674 = vld [vmem:[#allocation8 + $0x12c] sm:$0xf]
        %v675 = vld [vmem:[#allocation8 + $0x130] sm:$0xf]
        %v676 = vld [vmem:[#allocation8 + $0x134] sm:$0xf]
        %v677 = vld [vmem:[#allocation8 + $0x138] sm:$0xf]
        %v678 = vld [vmem:[#allocation8 + $0x13c] sm:$0xf]
        %v679 = vld [vmem:[#allocation8 + $0x140] sm:$0xf]
        %v680 = vld [vmem:[#allocation8 + $0x144] sm:$0xf]
        %v681 = vld [vmem:[#allocation8 + $0x148] sm:$0xf]
        %v682 = vld [vmem:[#allocation8 + $0x14c] sm:$0xf]
        %v683 = vld [vmem:[#allocation8 + $0x150] sm:$0xf]
        %v684 = vld [vmem:[#allocation8 + $0x154] sm:$0xf]
        %v685 = vld [vmem:[#allocation8 + $0x158] sm:$0xf]
        %v686 = vld [vmem:[#allocation8 + $0x15c] sm:$0xf]
        %v687 = vld [vmem:[#allocation8 + $0x160] sm:$0xf]
        %v688 = vld [vmem:[#allocation8 + $0x164] sm:$0xf]
        %v689 = vld [vmem:[#allocation8 + $0x168] sm:$0xf]
        %v690 = vld [vmem:[#allocation8 + $0x16c] sm:$0xf]
        %v691 = vld [vmem:[#allocation8 + $0x170] sm:$0xf]
        %v692 = vld [vmem:[#allocation8 + $0x174] sm:$0xf]
        %v693 = vld [vmem:[#allocation8 + $0x178] sm:$0xf]
        %v694 = vld [vmem:[#allocation8 + $0x17c] sm:$0xf]
        %v695 = vld [vmem:[#allocation8 + $0x180] sm:$0xf]
        %v696 = vld [vmem:[#allocation8 + $0x184] sm:$0xf]
        %v697 = vld [vmem:[#allocation8 + $0x188] sm:$0xf]
        %v698 = vld [vmem:[#allocation8 + $0x18c] sm:$0xf]
        %v699 = vld [vmem:[#allocation8 + $0x190] sm:$0xf]
        %v700 = vld [vmem:[#allocation8 + $0x194] sm:$0xf]
        %v701 = vld [vmem:[#allocation8 + $0x198] sm:$0xf]
        %v702 = vld [vmem:[#allocation8 + $0x19c] sm:$0xf]
        %v703 = vld [vmem:[#allocation8 + $0x1a0] sm:$0xf]
        %v704 = vld [vmem:[#allocation8 + $0x1a4] sm:$0xf]
        %v705 = vld [vmem:[#allocation8 + $0x1a8] sm:$0xf]
        %v706 = vld [vmem:[#allocation8 + $0x1ac] sm:$0xf]
        %v707 = vld [vmem:[#allocation8 + $0x1b0] sm:$0xf]
        %v708 = vld [vmem:[#allocation8 + $0x1b4] sm:$0xf]
        %v709 = vld [vmem:[#allocation8 + $0x1b8] sm:$0xf]
        %v710 = vld [vmem:[#allocation8 + $0x1bc] sm:$0xf]
        %v711 = vld [vmem:[#allocation8 + $0x1c0] sm:$0xf]
        %v712 = vld [vmem:[#allocation8 + $0x1c4] sm:$0xf]
        %v713 = vld [vmem:[#allocation8 + $0x1c8] sm:$0xf]
        %v714 = vld [vmem:[#allocation8 + $0x1cc] sm:$0xf]
        %v715 = vld [vmem:[#allocation8 + $0x1d0] sm:$0xf]
        %v716 = vld [vmem:[#allocation8 + $0x1d4] sm:$0xf]
        %v717 = vld [vmem:[#allocation8 + $0x1d8] sm:$0xf]
        %v718 = vld [vmem:[#allocation8 + $0x1dc] sm:$0xf]
        %v719 = vld [vmem:[#allocation8 + $0x1e0] sm:$0xf]
        %v720 = vld [vmem:[#allocation8 + $0x1e4] sm:$0xf]
        %v721 = vld [vmem:[#allocation8 + $0x1e8] sm:$0xf]
        %v722 = vld [vmem:[#allocation8 + $0x1ec] sm:$0xf]
        %v723 = vld [vmem:[#allocation8 + $0x1f0] sm:$0xf]
        %v724 = vld [vmem:[#allocation8 + $0x1f4] sm:$0xf]
        %v725 = vld [vmem:[#allocation8 + $0x1f8] sm:$0xf]
        %v726 = vld [vmem:[#allocation8 + $0x1fc] sm:$0xf]
        %v727 = vld [vmem:[%s2] sm:$0x1]
        %v729 = vlaneseq
        %v730 = vshrl.u32 %v729, 7
        %v731 = vsub.s32 0, %v730
        %v732 = vrot.slane %v727, %v731
        %v742 = vunpack.c.l.b16 %v591
        %v743 = vunpack.c.h.b16 %v591
        %v744 = vunpack.c.l.b16 %v592
        %v745 = vunpack.c.h.b16 %v592
        %v746 = vunpack.c.l.b16 %v593
        %v747 = vunpack.c.h.b16 %v593
        %v748 = vunpack.c.l.b16 %v594
        %v749 = vunpack.c.h.b16 %v594
        %v750 = vunpack.c.l.b16 %v595
        %v751 = vunpack.c.h.b16 %v595
        %v752 = vunpack.c.l.b16 %v596
        %v753 = vunpack.c.h.b16 %v596
        %v754 = vunpack.c.l.b16 %v597
        %v755 = vunpack.c.h.b16 %v597
        %v756 = vunpack.c.l.b16 %v598
        %v757 = vunpack.c.h.b16 %v598
        %v758 = vpack.c.b16 %v750, %v742
        %v759 = vpack.c.b16 %v751, %v743
        %v760 = vpack.c.b16 %v752, %v744
        %v761 = vpack.c.b16 %v753, %v745
        %v762 = vpack.c.b16 %v754, %v746
        %v763 = vpack.c.b16 %v755, %v747
        %v764 = vpack.c.b16 %v756, %v748
        %v765 = vpack.c.b16 %v757, %v749
        %v902 = vunpack.c.l.b16 %v599
        %v903 = vunpack.c.l.b16 %v600
        %v904 = vunpack.c.l.b16 %v601
        %v905 = vunpack.c.l.b16 %v602
        %v906 = vunpack.c.l.b16 %v603
        %v907 = vunpack.c.l.b16 %v604
        %v908 = vunpack.c.l.b16 %v605
        %v909 = vunpack.c.l.b16 %v606
        %v910 = vunpack.c.l.b16 %v607
        %v911 = vunpack.c.l.b16 %v608
        %v912 = vunpack.c.l.b16 %v609
        %v913 = vunpack.c.l.b16 %v610
        %v914 = vunpack.c.l.b16 %v611
        %v915 = vunpack.c.l.b16 %v612
        %v916 = vunpack.c.l.b16 %v613
        %v917 = vunpack.c.l.b16 %v614
        %v918 = vunpack.c.l.b16 %v615
        %v919 = vunpack.c.l.b16 %v616
        %v920 = vunpack.c.l.b16 %v617
        %v921 = vunpack.c.l.b16 %v618
        %v922 = vunpack.c.l.b16 %v619
        %v923 = vunpack.c.l.b16 %v620
        %v924 = vunpack.c.l.b16 %v621
        %v925 = vunpack.c.l.b16 %v622
        %v926 = vunpack.c.l.b16 %v623
        %v927 = vunpack.c.l.b16 %v624
        %v928 = vunpack.c.l.b16 %v625
        %v929 = vunpack.c.l.b16 %v626
        %v930 = vunpack.c.l.b16 %v627
        %v931 = vunpack.c.l.b16 %v628
        %v932 = vunpack.c.l.b16 %v629
        %v933 = vunpack.c.l.b16 %v630
        %v934 = vunpack.c.l.b16 %v631
        %v935 = vunpack.c.l.b16 %v632
        %v936 = vunpack.c.l.b16 %v633
        %v937 = vunpack.c.l.b16 %v634
        %v938 = vunpack.c.l.b16 %v635
        %v939 = vunpack.c.l.b16 %v636
        %v940 = vunpack.c.l.b16 %v637
        %v941 = vunpack.c.l.b16 %v638
        %v942 = vunpack.c.l.b16 %v639
        %v943 = vunpack.c.l.b16 %v640
        %v944 = vunpack.c.l.b16 %v641
        %v945 = vunpack.c.l.b16 %v642
        %v946 = vunpack.c.l.b16 %v643
        %v947 = vunpack.c.l.b16 %v644
        %v948 = vunpack.c.l.b16 %v645
        %v949 = vunpack.c.l.b16 %v646
        %v950 = vunpack.c.l.b16 %v647
        %v951 = vunpack.c.l.b16 %v648
        %v952 = vunpack.c.l.b16 %v649
        %v953 = vunpack.c.l.b16 %v650
        %v954 = vunpack.c.l.b16 %v651
        %v955 = vunpack.c.l.b16 %v652
        %v956 = vunpack.c.l.b16 %v653
        %v957 = vunpack.c.l.b16 %v654
        %v958 = vunpack.c.l.b16 %v655
        %v959 = vunpack.c.l.b16 %v656
        %v960 = vunpack.c.l.b16 %v657
        %v961 = vunpack.c.l.b16 %v658
        %v962 = vunpack.c.l.b16 %v659
        %v963 = vunpack.c.l.b16 %v660
        %v964 = vunpack.c.l.b16 %v661
        %v965 = vunpack.c.l.b16 %v662
        %v966 = vunpack.c.l.b16 %v663
        %v967 = vunpack.c.l.b16 %v664
        %v968 = vunpack.c.l.b16 %v665
        %v969 = vunpack.c.l.b16 %v666
        %v970 = vunpack.c.l.b16 %v667
        %v971 = vunpack.c.l.b16 %v668
        %v972 = vunpack.c.l.b16 %v669
        %v973 = vunpack.c.l.b16 %v670
        %v974 = vunpack.c.l.b16 %v671
        %v975 = vunpack.c.l.b16 %v672
        %v976 = vunpack.c.l.b16 %v673
        %v977 = vunpack.c.l.b16 %v674
        %v978 = vunpack.c.l.b16 %v675
        %v979 = vunpack.c.l.b16 %v676
        %v980 = vunpack.c.l.b16 %v677
        %v981 = vunpack.c.l.b16 %v678
        %v982 = vunpack.c.l.b16 %v679
        %v983 = vunpack.c.l.b16 %v680
        %v984 = vunpack.c.l.b16 %v681
        %v985 = vunpack.c.l.b16 %v682
        %v986 = vunpack.c.l.b16 %v683
        %v987 = vunpack.c.l.b16 %v684
        %v988 = vunpack.c.l.b16 %v685
        %v989 = vunpack.c.l.b16 %v686
        %v990 = vunpack.c.l.b16 %v687
        %v991 = vunpack.c.l.b16 %v688
        %v992 = vunpack.c.l.b16 %v689
        %v993 = vunpack.c.l.b16 %v690
        %v994 = vunpack.c.l.b16 %v691
        %v995 = vunpack.c.l.b16 %v692
        %v996 = vunpack.c.l.b16 %v693
        %v997 = vunpack.c.l.b16 %v694
        %v998 = vunpack.c.l.b16 %v695
        %v999 = vunpack.c.l.b16 %v696
        %v1000 = vunpack.c.l.b16 %v697
        %v1001 = vunpack.c.l.b16 %v698
        %v1002 = vunpack.c.l.b16 %v699
        %v1003 = vunpack.c.l.b16 %v700
        %v1004 = vunpack.c.l.b16 %v701
        %v1005 = vunpack.c.l.b16 %v702
        %v1006 = vunpack.c.l.b16 %v703
        %v1007 = vunpack.c.l.b16 %v704
        %v1008 = vunpack.c.l.b16 %v705
        %v1009 = vunpack.c.l.b16 %v706
        %v1010 = vunpack.c.l.b16 %v707
        %v1011 = vunpack.c.l.b16 %v708
        %v1012 = vunpack.c.l.b16 %v709
        %v1013 = vunpack.c.l.b16 %v710
        %v1014 = vunpack.c.l.b16 %v711
        %v1015 = vunpack.c.l.b16 %v712
        %v1016 = vunpack.c.l.b16 %v713
        %v1017 = vunpack.c.l.b16 %v714
        %v1018 = vunpack.c.l.b16 %v715
        %v1019 = vunpack.c.l.b16 %v716
        %v1020 = vunpack.c.l.b16 %v717
        %v1021 = vunpack.c.l.b16 %v718
        %v1022 = vunpack.c.l.b16 %v719
        %v1023 = vunpack.c.l.b16 %v720
        %v1024 = vunpack.c.l.b16 %v721
        %v1025 = vunpack.c.l.b16 %v722
        %v1026 = vunpack.c.l.b16 %v723
        %v1027 = vunpack.c.l.b16 %v724
        %v1028 = vunpack.c.l.b16 %v725
        %v1029 = vunpack.c.l.b16 %v726
        %v1030 = vpack.c.b16 %v903, %v902
        %v1031 = vpack.c.b16 %v905, %v904
        %v1032 = vpack.c.b16 %v907, %v906
        %v1033 = vpack.c.b16 %v909, %v908
        %v1034 = vpack.c.b16 %v911, %v910
        %v1035 = vpack.c.b16 %v913, %v912
        %v1036 = vpack.c.b16 %v915, %v914
        %v1037 = vpack.c.b16 %v917, %v916
        %v1038 = vpack.c.b16 %v919, %v918
        %v1039 = vpack.c.b16 %v921, %v920
        %v1040 = vpack.c.b16 %v923, %v922
        %v1041 = vpack.c.b16 %v925, %v924
        %v1042 = vpack.c.b16 %v927, %v926
        %v1043 = vpack.c.b16 %v929, %v928
        %v1044 = vpack.c.b16 %v931, %v930
        %v1045 = vpack.c.b16 %v933, %v932
        %v1046 = vpack.c.b16 %v935, %v934
        %v1047 = vpack.c.b16 %v937, %v936
        %v1048 = vpack.c.b16 %v939, %v938
        %v1049 = vpack.c.b16 %v941, %v940
        %v1050 = vpack.c.b16 %v943, %v942
        %v1051 = vpack.c.b16 %v945, %v944
        %v1052 = vpack.c.b16 %v947, %v946
        %v1053 = vpack.c.b16 %v949, %v948
        %v1054 = vpack.c.b16 %v951, %v950
        %v1055 = vpack.c.b16 %v953, %v952
        %v1056 = vpack.c.b16 %v955, %v954
        %v1057 = vpack.c.b16 %v957, %v956
        %v1058 = vpack.c.b16 %v959, %v958
        %v1059 = vpack.c.b16 %v961, %v960
        %v1060 = vpack.c.b16 %v963, %v962
        %v1061 = vpack.c.b16 %v965, %v964
        %v1062 = vpack.c.b16 %v967, %v966
        %v1063 = vpack.c.b16 %v969, %v968
        %v1064 = vpack.c.b16 %v971, %v970
        %v1065 = vpack.c.b16 %v973, %v972
        %v1066 = vpack.c.b16 %v975, %v974
        %v1067 = vpack.c.b16 %v977, %v976
        %v1068 = vpack.c.b16 %v979, %v978
        %v1069 = vpack.c.b16 %v981, %v980
        %v1070 = vpack.c.b16 %v983, %v982
        %v1071 = vpack.c.b16 %v985, %v984
        %v1072 = vpack.c.b16 %v987, %v986
        %v1073 = vpack.c.b16 %v989, %v988
        %v1074 = vpack.c.b16 %v991, %v990
        %v1075 = vpack.c.b16 %v993, %v992
        %v1076 = vpack.c.b16 %v995, %v994
        %v1077 = vpack.c.b16 %v997, %v996
        %v1078 = vpack.c.b16 %v999, %v998
        %v1079 = vpack.c.b16 %v1001, %v1000
        %v1080 = vpack.c.b16 %v1003, %v1002
        %v1081 = vpack.c.b16 %v1005, %v1004
        %v1082 = vpack.c.b16 %v1007, %v1006
        %v1083 = vpack.c.b16 %v1009, %v1008
        %v1084 = vpack.c.b16 %v1011, %v1010
        %v1085 = vpack.c.b16 %v1013, %v1012
        %v1086 = vpack.c.b16 %v1015, %v1014
        %v1087 = vpack.c.b16 %v1017, %v1016
        %v1088 = vpack.c.b16 %v1019, %v1018
        %v1089 = vpack.c.b16 %v1021, %v1020
        %v1090 = vpack.c.b16 %v1023, %v1022
        %v1091 = vpack.c.b16 %v1025, %v1024
        %v1092 = vpack.c.b16 %v1027, %v1026
        %v1093 = vpack.c.b16 %v1029, %v1028
        %1158 = vmatprep.subr.bf16.mxu0 0
        %1159 = vmatpush1.bf16.msra.mxu0 %v1037
        %1160 = vmatprep.subr.bf16.mxu0 0
        %1161 = vmatpush1.bf16.msra.mxu0 %v1036
        %1162 = vmatprep.subr.bf16.mxu0 0
        %1163 = vmatpush1.bf16.msra.mxu0 %v1035
        %1164 = vmatprep.subr.bf16.mxu0 0
        %1165 = vmatpush1.bf16.msra.mxu0 %v1034
        %1166 = vmatprep.subr.bf16.mxu0 0
        %1167 = vmatpush1.bf16.msra.mxu0 %v1033
        %1168 = vmatprep.subr.bf16.mxu0 0
        %1169 = vmatpush1.bf16.msra.mxu0 %v1032
        %1170 = vmatprep.subr.bf16.mxu0 0
        %1171 = vmatpush1.bf16.msra.mxu0 %v1031
        %1172 = vmatprep.subr.bf16.mxu0 0
        %1173 = vmatpush1.bf16.msra.mxu0 %v1030
        %1174 = vmatprep.subr.bf16.mxu0 0
        %1175 = vmatpush2.bf16.msra.mxu0 %v1045
        %1176 = vmatprep.subr.bf16.mxu0 0
        %1177 = vmatpush2.bf16.msra.mxu0 %v1044
        %1178 = vmatprep.subr.bf16.mxu0 0
        %1179 = vmatpush2.bf16.msra.mxu0 %v1043
        %1180 = vmatprep.subr.bf16.mxu0 0
        %1181 = vmatpush2.bf16.msra.mxu0 %v1042
        %1182 = vmatprep.subr.bf16.mxu0 0
        %1183 = vmatpush2.bf16.msra.mxu0 %v1041
        %1184 = vmatprep.subr.bf16.mxu0 0
        %1185 = vmatpush2.bf16.msra.mxu0 %v1040
        %1186 = vmatprep.subr.bf16.mxu0 0
        %1187 = vmatpush2.bf16.msra.mxu0 %v1039
        %1188 = vmatprep.subr.bf16.mxu0 0
        %1189 = vmatpush2.bf16.msra.mxu0 %v1038
        %1190 = vmatprep.mubr.bf16.mxu0 %v759
        %1191 = vmatmul.mubr.bf16.gmra.mxu0 %v758
        %v1192 = vpop.f32.mrf.mxu0
        %v1193 = vadd.f32 %v732, %v1192
        %v1194 = vpop.f32.mrf.mxu0
        %v1195 = vpop.f32.mrf.mxu0
        %v1196 = vadd.f32 %v732, %v1195
        %v1197 = vpop.f32.mrf.mxu0
        %1198 = vdwg.mxu0
        %1199 = vmatprep.subr.bf16.mxu0 0
        %1200 = vmatpush1.bf16.msra.mxu0 %v1053
        %1201 = vmatprep.subr.bf16.mxu0 0
        %1202 = vmatpush1.bf16.msra.mxu0 %v1052
        %1203 = vmatprep.subr.bf16.mxu0 0
        %1204 = vmatpush1.bf16.msra.mxu0 %v1051
        %1205 = vmatprep.subr.bf16.mxu0 0
        %1206 = vmatpush1.bf16.msra.mxu0 %v1050
        %1207 = vmatprep.subr.bf16.mxu0 0
        %1208 = vmatpush1.bf16.msra.mxu0 %v1049
        %1209 = vmatprep.subr.bf16.mxu0 0
        %1210 = vmatpush1.bf16.msra.mxu0 %v1048
        %1211 = vmatprep.subr.bf16.mxu0 0
        %1212 = vmatpush1.bf16.msra.mxu0 %v1047
        %1213 = vmatprep.subr.bf16.mxu0 0
        %1214 = vmatpush1.bf16.msra.mxu0 %v1046
        %1215 = vmatprep.subr.bf16.mxu0 0
        %1216 = vmatpush2.bf16.msra.mxu0 %v1061
        %1217 = vmatprep.subr.bf16.mxu0 0
        %1218 = vmatpush2.bf16.msra.mxu0 %v1060
        %1219 = vmatprep.subr.bf16.mxu0 0
        %1220 = vmatpush2.bf16.msra.mxu0 %v1059
        %1221 = vmatprep.subr.bf16.mxu0 0
        %1222 = vmatpush2.bf16.msra.mxu0 %v1058
        %1223 = vmatprep.subr.bf16.mxu0 0
        %1224 = vmatpush2.bf16.msra.mxu0 %v1057
        %1225 = vmatprep.subr.bf16.mxu0 0
        %1226 = vmatpush2.bf16.msra.mxu0 %v1056
        %1227 = vmatprep.subr.bf16.mxu0 0
        %1228 = vmatpush2.bf16.msra.mxu0 %v1055
        %1229 = vmatprep.subr.bf16.mxu0 0
        %1230 = vmatpush2.bf16.msra.mxu0 %v1054
        %1231 = vmatprep.mubr.bf16.mxu0 %v761
        %1232 = vmatmul.mubr.bf16.gmra.mxu0 %v760
        %v1233 = vpop.f32.mrf.mxu0
        %v1234 = vadd.f32 %v1193, %v1233
        %v1235 = vpop.f32.mrf.mxu0
        %v1236 = vpop.f32.mrf.mxu0
        %v1237 = vadd.f32 %v1196, %v1236
        %v1238 = vpop.f32.mrf.mxu0
        %1239 = vdwg.mxu0
        %1240 = vmatprep.subr.bf16.mxu0 0
        %1241 = vmatpush1.bf16.msra.mxu0 %v1069
        %1242 = vmatprep.subr.bf16.mxu0 0
        %1243 = vmatpush1.bf16.msra.mxu0 %v1068
        %1244 = vmatprep.subr.bf16.mxu0 0
        %1245 = vmatpush1.bf16.msra.mxu0 %v1067
        %1246 = vmatprep.subr.bf16.mxu0 0
        %1247 = vmatpush1.bf16.msra.mxu0 %v1066
        %1248 = vmatprep.subr.bf16.mxu0 0
        %1249 = vmatpush1.bf16.msra.mxu0 %v1065
        %1250 = vmatprep.subr.bf16.mxu0 0
        %1251 = vmatpush1.bf16.msra.mxu0 %v1064
        %1252 = vmatprep.subr.bf16.mxu0 0
        %1253 = vmatpush1.bf16.msra.mxu0 %v1063
        %1254 = vmatprep.subr.bf16.mxu0 0
        %1255 = vmatpush1.bf16.msra.mxu0 %v1062
        %1256 = vmatprep.subr.bf16.mxu0 0
        %1257 = vmatpush2.bf16.msra.mxu0 %v1077
        %1258 = vmatprep.subr.bf16.mxu0 0
        %1259 = vmatpush2.bf16.msra.mxu0 %v1076
        %1260 = vmatprep.subr.bf16.mxu0 0
        %1261 = vmatpush2.bf16.msra.mxu0 %v1075
        %1262 = vmatprep.subr.bf16.mxu0 0
        %1263 = vmatpush2.bf16.msra.mxu0 %v1074
        %1264 = vmatprep.subr.bf16.mxu0 0
        %1265 = vmatpush2.bf16.msra.mxu0 %v1073
        %1266 = vmatprep.subr.bf16.mxu0 0
        %1267 = vmatpush2.bf16.msra.mxu0 %v1072
        %1268 = vmatprep.subr.bf16.mxu0 0
        %1269 = vmatpush2.bf16.msra.mxu0 %v1071
        %1270 = vmatprep.subr.bf16.mxu0 0
        %1271 = vmatpush2.bf16.msra.mxu0 %v1070
        %1272 = vmatprep.mubr.bf16.mxu0 %v763
        %1273 = vmatmul.mubr.bf16.gmra.mxu0 %v762
        %v1274 = vpop.f32.mrf.mxu0
        %v1275 = vadd.f32 %v1234, %v1274
        %v1276 = vpop.f32.mrf.mxu0
        %v1277 = vpop.f32.mrf.mxu0
        %v1278 = vadd.f32 %v1237, %v1277
        %v1279 = vpop.f32.mrf.mxu0
        %1280 = vdwg.mxu0
        %1281 = vmatprep.subr.bf16.mxu0 0
        %1282 = vmatpush1.bf16.msra.mxu0 %v1085
        %1283 = vmatprep.subr.bf16.mxu0 0
        %1284 = vmatpush1.bf16.msra.mxu0 %v1084
        %1285 = vmatprep.subr.bf16.mxu0 0
        %1286 = vmatpush1.bf16.msra.mxu0 %v1083
        %1287 = vmatprep.subr.bf16.mxu0 0
        %1288 = vmatpush1.bf16.msra.mxu0 %v1082
        %1289 = vmatprep.subr.bf16.mxu0 0
        %1290 = vmatpush1.bf16.msra.mxu0 %v1081
        %1291 = vmatprep.subr.bf16.mxu0 0
        %1292 = vmatpush1.bf16.msra.mxu0 %v1080
        %1293 = vmatprep.subr.bf16.mxu0 0
        %1294 = vmatpush1.bf16.msra.mxu0 %v1079
        %1295 = vmatprep.subr.bf16.mxu0 0
        %1296 = vmatpush1.bf16.msra.mxu0 %v1078
        %1297 = vmatprep.subr.bf16.mxu0 0
        %1298 = vmatpush2.bf16.msra.mxu0 %v1093
        %1299 = vmatprep.subr.bf16.mxu0 0
        %1300 = vmatpush2.bf16.msra.mxu0 %v1092
        %1301 = vmatprep.subr.bf16.mxu0 0
        %1302 = vmatpush2.bf16.msra.mxu0 %v1091
        %1303 = vmatprep.subr.bf16.mxu0 0
        %1304 = vmatpush2.bf16.msra.mxu0 %v1090
        %1305 = vmatprep.subr.bf16.mxu0 0
        %1306 = vmatpush2.bf16.msra.mxu0 %v1089
        %1307 = vmatprep.subr.bf16.mxu0 0
        %1308 = vmatpush2.bf16.msra.mxu0 %v1088
        %1309 = vmatprep.subr.bf16.mxu0 0
        %1310 = vmatpush2.bf16.msra.mxu0 %v1087
        %1311 = vmatprep.subr.bf16.mxu0 0
        %1312 = vmatpush2.bf16.msra.mxu0 %v1086
        %1313 = vmatprep.mubr.bf16.mxu0 %v765
        %1314 = vmatmul.mubr.bf16.gmra.mxu0 %v764
        %v1315 = vpop.f32.mrf.mxu0
        %v1316 = vadd.f32 %v1275, %v1315
        %v1317 = vpop.f32.mrf.mxu0
        %v1318 = vpop.f32.mrf.mxu0
        %v1319 = vadd.f32 %v1278, %v1318
        %v1320 = vpop.f32.mrf.mxu0
        %1321 = vdwg.mxu0
        %v1322 = vmax.f32 %v1316, 0.0
        %v1323 = vmax.f32 %v1319, 0.0
        %v1324 = vpack.c.bf16 %v1323, %v1322
        %v1325 = vld [vmem:[%s3] sm:$0xf]
        %v1326 = vld [vmem:[%s3 + $0x4] sm:$0xf]
        %v1327 = vld [vmem:[%s3 + $0x8] sm:$0xf]
        %v1328 = vld [vmem:[%s3 + $0xc] sm:$0xf]
        %v1329 = vld [vmem:[%s3 + $0x10] sm:$0xf]
        %v1330 = vld [vmem:[%s3 + $0x14] sm:$0xf]
        %v1331 = vld [vmem:[%s3 + $0x18] sm:$0xf]
        %v1332 = vld [vmem:[%s3 + $0x1c] sm:$0xf]
        %v1333 = vld [vmem:[%s3 + $0x20] sm:$0xf]
        %v1334 = vld [vmem:[%s3 + $0x24] sm:$0xf]
        %v1335 = vld [vmem:[%s3 + $0x28] sm:$0xf]
        %v1336 = vld [vmem:[%s3 + $0x2c] sm:$0xf]
        %v1337 = vld [vmem:[%s3 + $0x30] sm:$0xf]
        %v1338 = vld [vmem:[%s3 + $0x34] sm:$0xf]
        %v1339 = vld [vmem:[%s3 + $0x38] sm:$0xf]
        %v1340 = vld [vmem:[%s3 + $0x3c] sm:$0xf]
        %v1341 = vld [vmem:[%s4] sm:$0x1]
        %v1343 = vlaneseq
        %v1344 = vshrl.u32 %v1343, 7
        %v1345 = vsub.s32 0, %v1344
        %v1346 = vrot.slane %v1341, %v1345
        %v1364 = vunpack.c.l.b16 %v1325
        %v1365 = vunpack.c.l.b16 %v1326
        %v1366 = vunpack.c.l.b16 %v1327
        %v1367 = vunpack.c.l.b16 %v1328
        %v1368 = vunpack.c.l.b16 %v1329
        %v1369 = vunpack.c.l.b16 %v1330
        %v1370 = vunpack.c.l.b16 %v1331
        %v1371 = vunpack.c.l.b16 %v1332
        %v1372 = vunpack.c.l.b16 %v1333
        %v1373 = vunpack.c.l.b16 %v1334
        %v1374 = vunpack.c.l.b16 %v1335
        %v1375 = vunpack.c.l.b16 %v1336
        %v1376 = vunpack.c.l.b16 %v1337
        %v1377 = vunpack.c.l.b16 %v1338
        %v1378 = vunpack.c.l.b16 %v1339
        %v1379 = vunpack.c.l.b16 %v1340
        %v1380 = vpack.c.b16 %v1365, %v1364
        %v1381 = vpack.c.b16 %v1367, %v1366
        %v1382 = vpack.c.b16 %v1369, %v1368
        %v1383 = vpack.c.b16 %v1371, %v1370
        %v1384 = vpack.c.b16 %v1373, %v1372
        %v1385 = vpack.c.b16 %v1375, %v1374
        %v1386 = vpack.c.b16 %v1377, %v1376
        %v1387 = vpack.c.b16 %v1379, %v1378
        %1396 = vmatprep.subr.bf16.mxu0 0
        %1397 = vmatpush1.bf16.msra.mxu0 %v1387
        %1398 = vmatprep.subr.bf16.mxu0 0
        %1399 = vmatpush1.bf16.msra.mxu0 %v1386
        %1400 = vmatprep.subr.bf16.mxu0 0
        %1401 = vmatpush1.bf16.msra.mxu0 %v1385
        %1402 = vmatprep.subr.bf16.mxu0 0
        %1403 = vmatpush1.bf16.msra.mxu0 %v1384
        %1404 = vmatprep.subr.bf16.mxu0 0
        %1405 = vmatpush1.bf16.msra.mxu0 %v1383
        %1406 = vmatprep.subr.bf16.mxu0 0
        %1407 = vmatpush1.bf16.msra.mxu0 %v1382
        %1408 = vmatprep.subr.bf16.mxu0 0
        %1409 = vmatpush1.bf16.msra.mxu0 %v1381
        %1410 = vmatprep.subr.bf16.mxu0 0
        %1411 = vmatpush1.bf16.msra.mxu0 %v1380
        %1412 = vmatprep.subr.bf16.mxu0 0
        %1413 = vmatpush2.bf16.msra.mxu0 0
        %1414 = vmatprep.subr.bf16.mxu0 0
        %1415 = vmatpush2.bf16.msra.mxu0 0
        %1416 = vmatprep.subr.bf16.mxu0 0
        %1417 = vmatpush2.bf16.msra.mxu0 0
        %1418 = vmatprep.subr.bf16.mxu0 0
        %1419 = vmatpush2.bf16.msra.mxu0 0
        %1420 = vmatprep.subr.bf16.mxu0 0
        %1421 = vmatpush2.bf16.msra.mxu0 0
        %1422 = vmatprep.subr.bf16.mxu0 0
        %1423 = vmatpush2.bf16.msra.mxu0 0
        %1424 = vmatprep.subr.bf16.mxu0 0
        %1425 = vmatpush2.bf16.msra.mxu0 0
        %1426 = vmatprep.subr.bf16.mxu0 0
        %1427 = vmatpush2.bf16.msra.mxu0 0
        %1428 = vmatprep.mubr.bf16.mxu0 0
        %1429 = vmatmul.mubr.bf16.gmra.mxu0 %v1324
        %v1430 = vpop.f32.mrf.mxu0
        %v1431 = vadd.f32 %v1346, %v1430
        %v1432 = vpop.f32.mrf.mxu0
        %v1433 = vpop.f32.mrf.mxu0
        %v1434 = vadd.f32 %v1346, %v1433
        %v1435 = vpop.f32.mrf.mxu0
        %1436 = vdwg.mxu0
        %v1437 = vpack.c.bf16 %v1434, %v1431
        %v1438 = vld [vmem:[%s5] sm:$0xf]
        %v1439 = vld [vmem:[%s5 + $0x4] sm:$0xf]
        %v1440 = vld [vmem:[%s5 + $0x8] sm:$0xf]
        %v1441 = vld [vmem:[%s5 + $0xc] sm:$0xf]
        %v1442 = vld [vmem:[%s5 + $0x10] sm:$0xf]
        %v1443 = vld [vmem:[%s5 + $0x14] sm:$0xf]
        %v1444 = vld [vmem:[%s5 + $0x18] sm:$0xf]
        %v1445 = vld [vmem:[%s5 + $0x1c] sm:$0xf]
        %v1446 = vld [vmem:[%s5 + $0x20] sm:$0xf]
        %v1447 = vld [vmem:[%s5 + $0x24] sm:$0xf]
        %v1448 = vld [vmem:[%s5 + $0x28] sm:$0xf]
        %v1449 = vld [vmem:[%s5 + $0x2c] sm:$0xf]
        %v1450 = vld [vmem:[%s5 + $0x30] sm:$0xf]
        %v1451 = vld [vmem:[%s5 + $0x34] sm:$0xf]
        %v1452 = vld [vmem:[%s5 + $0x38] sm:$0xf]
        %v1453 = vld [vmem:[%s5 + $0x3c] sm:$0xf]
        %v1454 = vld [vmem:[%s6] sm:$0x1]
        %v1456 = vlaneseq
        %v1457 = vshrl.u32 %v1456, 7
        %v1458 = vsub.s32 0, %v1457
        %v1459 = vrot.slane %v1454, %v1458
        %v1477 = vunpack.c.l.b16 %v1438
        %v1478 = vunpack.c.l.b16 %v1439
        %v1479 = vunpack.c.l.b16 %v1440
        %v1480 = vunpack.c.l.b16 %v1441
        %v1481 = vunpack.c.l.b16 %v1442
        %v1482 = vunpack.c.l.b16 %v1443
        %v1483 = vunpack.c.l.b16 %v1444
        %v1484 = vunpack.c.l.b16 %v1445
        %v1485 = vunpack.c.l.b16 %v1446
        %v1486 = vunpack.c.l.b16 %v1447
        %v1487 = vunpack.c.l.b16 %v1448
        %v1488 = vunpack.c.l.b16 %v1449
        %v1489 = vunpack.c.l.b16 %v1450
        %v1490 = vunpack.c.l.b16 %v1451
        %v1491 = vunpack.c.l.b16 %v1452
        %v1492 = vunpack.c.l.b16 %v1453
        %v1493 = vpack.c.b16 %v1478, %v1477
        %v1494 = vpack.c.b16 %v1480, %v1479
        %v1495 = vpack.c.b16 %v1482, %v1481
        %v1496 = vpack.c.b16 %v1484, %v1483
        %v1497 = vpack.c.b16 %v1486, %v1485
        %v1498 = vpack.c.b16 %v1488, %v1487
        %v1499 = vpack.c.b16 %v1490, %v1489
        %v1500 = vpack.c.b16 %v1492, %v1491
        %1509 = vmatprep.subr.bf16.mxu0 0
        %1510 = vmatpush1.bf16.msra.mxu0 %v1500
        %1511 = vmatprep.subr.bf16.mxu0 0
        %1512 = vmatpush1.bf16.msra.mxu0 %v1499
        %1513 = vmatprep.subr.bf16.mxu0 0
        %1514 = vmatpush1.bf16.msra.mxu0 %v1498
        %1515 = vmatprep.subr.bf16.mxu0 0
        %1516 = vmatpush1.bf16.msra.mxu0 %v1497
        %1517 = vmatprep.subr.bf16.mxu0 0
        %1518 = vmatpush1.bf16.msra.mxu0 %v1496
        %1519 = vmatprep.subr.bf16.mxu0 0
        %1520 = vmatpush1.bf16.msra.mxu0 %v1495
        %1521 = vmatprep.subr.bf16.mxu0 0
        %1522 = vmatpush1.bf16.msra.mxu0 %v1494
        %1523 = vmatprep.subr.bf16.mxu0 0
        %1524 = vmatpush1.bf16.msra.mxu0 %v1493
        %1525 = vmatprep.subr.bf16.mxu0 0
        %1526 = vmatpush2.bf16.msra.mxu0 0
        %1527 = vmatprep.subr.bf16.mxu0 0
        %1528 = vmatpush2.bf16.msra.mxu0 0
        %1529 = vmatprep.subr.bf16.mxu0 0
        %1530 = vmatpush2.bf16.msra.mxu0 0
        %1531 = vmatprep.subr.bf16.mxu0 0
        %1532 = vmatpush2.bf16.msra.mxu0 0
        %1533 = vmatprep.subr.bf16.mxu0 0
        %1534 = vmatpush2.bf16.msra.mxu0 0
        %1535 = vmatprep.subr.bf16.mxu0 0
        %1536 = vmatpush2.bf16.msra.mxu0 0
        %1537 = vmatprep.subr.bf16.mxu0 0
        %1538 = vmatpush2.bf16.msra.mxu0 0
        %1539 = vmatprep.subr.bf16.mxu0 0
        %1540 = vmatpush2.bf16.msra.mxu0 0
        %1541 = vmatprep.mubr.bf16.mxu0 0
        %1542 = vmatmul.mubr.bf16.gmra.mxu0 %v1437
        %v1543 = vpop.f32.mrf.mxu0
        %v1544 = vadd.f32 %v1459, %v1543
        %v1545 = vpop.f32.mrf.mxu0
        %v1546 = vpop.f32.mrf.mxu0
        %v1547 = vadd.f32 %v1459, %v1546
        %v1548 = vpop.f32.mrf.mxu0
        %1549 = vdwg.mxu0
        %v1550 = vtanh.pop %v1544
        %v1551 = vtanh.pop %v1547
        %v1552 = vld [vmem:[%s7] sm:$0xf]
        %v1553 = vld [vmem:[%s7 + $0x4] sm:$0xf]
        %v1554 = vld [vmem:[%s7 + $0x8] sm:$0xf]
        %v1555 = vld [vmem:[%s7 + $0xc] sm:$0xf]
        %v1556 = vld [vmem:[%s7 + $0x10] sm:$0xf]
        %v1557 = vld [vmem:[%s7 + $0x14] sm:$0xf]
        %v1558 = vld [vmem:[%s7 + $0x18] sm:$0xf]
        %v1559 = vld [vmem:[%s7 + $0x1c] sm:$0xf]
        %v1560 = vld [vmem:[%s7 + $0x20] sm:$0xf]
        %v1561 = vld [vmem:[%s7 + $0x24] sm:$0xf]
        %v1562 = vld [vmem:[%s7 + $0x28] sm:$0xf]
        %v1563 = vld [vmem:[%s7 + $0x2c] sm:$0xf]
        %v1564 = vld [vmem:[%s7 + $0x30] sm:$0xf]
        %v1565 = vld [vmem:[%s7 + $0x34] sm:$0xf]
        %v1566 = vld [vmem:[%s7 + $0x38] sm:$0xf]
        %v1567 = vld [vmem:[%s7 + $0x3c] sm:$0xf]
        %v1568 = vld [vmem:[%s8] sm:$0x1]
        %v1570 = vlaneseq
        %v1571 = vshrl.u32 %v1570, 7
        %v1572 = vsub.s32 0, %v1571
        %v1573 = vrot.slane %v1568, %v1572
        %v1591 = vunpack.c.l.b16 %v1552
        %v1592 = vunpack.c.l.b16 %v1553
        %v1593 = vunpack.c.l.b16 %v1554
        %v1594 = vunpack.c.l.b16 %v1555
        %v1595 = vunpack.c.l.b16 %v1556
        %v1596 = vunpack.c.l.b16 %v1557
        %v1597 = vunpack.c.l.b16 %v1558
        %v1598 = vunpack.c.l.b16 %v1559
        %v1599 = vunpack.c.l.b16 %v1560
        %v1600 = vunpack.c.l.b16 %v1561
        %v1601 = vunpack.c.l.b16 %v1562
        %v1602 = vunpack.c.l.b16 %v1563
        %v1603 = vunpack.c.l.b16 %v1564
        %v1604 = vunpack.c.l.b16 %v1565
        %v1605 = vunpack.c.l.b16 %v1566
        %v1606 = vunpack.c.l.b16 %v1567
        %v1607 = vpack.c.b16 %v1592, %v1591
        %v1608 = vpack.c.b16 %v1594, %v1593
        %v1609 = vpack.c.b16 %v1596, %v1595
        %v1610 = vpack.c.b16 %v1598, %v1597
        %v1611 = vpack.c.b16 %v1600, %v1599
        %v1612 = vpack.c.b16 %v1602, %v1601
        %v1613 = vpack.c.b16 %v1604, %v1603
        %v1614 = vpack.c.b16 %v1606, %v1605
        %1623 = vmatprep.subr.bf16.mxu0 0
        %1624 = vmatpush1.bf16.msra.mxu0 %v1614
        %1625 = vmatprep.subr.bf16.mxu0 0
        %1626 = vmatpush1.bf16.msra.mxu0 %v1613
        %1627 = vmatprep.subr.bf16.mxu0 0
        %1628 = vmatpush1.bf16.msra.mxu0 %v1612
        %1629 = vmatprep.subr.bf16.mxu0 0
        %1630 = vmatpush1.bf16.msra.mxu0 %v1611
        %1631 = vmatprep.subr.bf16.mxu0 0
        %1632 = vmatpush1.bf16.msra.mxu0 %v1610
        %1633 = vmatprep.subr.bf16.mxu0 0
        %1634 = vmatpush1.bf16.msra.mxu0 %v1609
        %1635 = vmatprep.subr.bf16.mxu0 0
        %1636 = vmatpush1.bf16.msra.mxu0 %v1608
        %1637 = vmatprep.subr.bf16.mxu0 0
        %1638 = vmatpush1.bf16.msra.mxu0 %v1607
        %1639 = vmatprep.subr.bf16.mxu0 0
        %1640 = vmatpush2.bf16.msra.mxu0 0
        %1641 = vmatprep.subr.bf16.mxu0 0
        %1642 = vmatpush2.bf16.msra.mxu0 0
        %1643 = vmatprep.subr.bf16.mxu0 0
        %1644 = vmatpush2.bf16.msra.mxu0 0
        %1645 = vmatprep.subr.bf16.mxu0 0
        %1646 = vmatpush2.bf16.msra.mxu0 0
        %1647 = vmatprep.subr.bf16.mxu0 0
        %1648 = vmatpush2.bf16.msra.mxu0 0
        %1649 = vmatprep.subr.bf16.mxu0 0
        %1650 = vmatpush2.bf16.msra.mxu0 0
        %1651 = vmatprep.subr.bf16.mxu0 0
        %1652 = vmatpush2.bf16.msra.mxu0 0
        %1653 = vmatprep.subr.bf16.mxu0 0
        %1654 = vmatpush2.bf16.msra.mxu0 0
        %1655 = vmatprep.mubr.bf16.mxu0 0
        %1656 = vmatmul.mubr.bf16.gmra.mxu0 %v1437
        %v1657 = vpop.f32.mrf.mxu0
        %v1658 = vadd.f32 %v1573, %v1657
        %v1659 = vpop.f32.mrf.mxu0
        %v1660 = vpop.f32.mrf.mxu0
        %v1661 = vadd.f32 %v1573, %v1660
        %v1662 = vpop.f32.mrf.mxu0
        %1663 = vdwg.mxu0
        %v1664 = vxor.u32 %v1658, 2147483648
        %v1665 = vxor.u32 %v1661, 2147483648
        %v1666 = vmul.f32 %v1664, 1.442695
        %v1667 = vpow.pop %v1666
        %v1668 = vmul.f32 %v1665, 1.442695
        %v1669 = vpow.pop %v1668
        %v1670 = vadd.f32 %v1667, 1.0
        %v1671 = vadd.f32 %v1669, 1.0
        %v1672 = vrcp.pop %v1670
        %v1673 = vmul.f32 1.0, %v1672
        %v1674 = vrcp.pop %v1671
        %v1675 = vmul.f32 1.0, %v1674
        %v1676 = vmul.f32 %v1550, %v1673
        %v1677 = vmul.f32 %v1551, %v1675
        %v1678 = vpack.c.bf16 %v1677, %v1676
        %v1679 = vld [vmem:[%s9] sm:$0x1]
        %v1680 = vld [vmem:[#allocation7] sm:$0x1]
        %1682 = vset.pattern.permute.xlu0 0
        %1683 = vperm.xlu0 %1682, %v1680
        %v1684 = vpop.permute.xlu0 %1683
        %v1686 = vlaneseq
        %v1687 = vshrl.u32 %v1686, 7
        %v1688 = vsub.s32 0, %v1687
        %v1689 = vrot.slane %v1684, %v1688
        %vm1690 = vcmask 523264
        %v1692 = vsel %vm1690, %v1679, 0
        %v1695 = vsel %vm1690, %v1678, 0
        %1697 = vmatprep.subr.bf16.mxu0 0
        %1698 = vmatpush1.bf16.xpose.msra.mxu0 0
        %1699 = vmatprep.subr.bf16.mxu0 0
        %1700 = vmatpush1.bf16.xpose.msra.mxu0 0
        %1701 = vmatprep.subr.bf16.mxu0 0
        %1702 = vmatpush1.bf16.xpose.msra.mxu0 0
        %1703 = vmatprep.subr.bf16.mxu0 0
        %1704 = vmatpush1.bf16.xpose.msra.mxu0 0
        %1705 = vmatprep.subr.bf16.mxu0 0
        %1706 = vmatpush1.bf16.xpose.msra.mxu0 0
        %1707 = vmatprep.subr.bf16.mxu0 0
        %1708 = vmatpush1.bf16.xpose.msra.mxu0 0
        %1709 = vmatprep.subr.bf16.mxu0 0
        %1710 = vmatpush1.bf16.xpose.msra.mxu0 0
        %1711 = vmatprep.subr.bf16.mxu0 0
        %1712 = vmatpush1.bf16.xpose.msra.mxu0 %v1695
        %1713 = vmatprep.subr.bf16.mxu0 0
        %1714 = vmatpush2.bf16.xpose.msra.mxu0 0
        %1715 = vmatprep.subr.bf16.mxu0 0
        %1716 = vmatpush2.bf16.xpose.msra.mxu0 0
        %1717 = vmatprep.subr.bf16.mxu0 0
        %1718 = vmatpush2.bf16.xpose.msra.mxu0 0
        %1719 = vmatprep.subr.bf16.mxu0 0
        %1720 = vmatpush2.bf16.xpose.msra.mxu0 0
        %1721 = vmatprep.subr.bf16.mxu0 0
        %1722 = vmatpush2.bf16.xpose.msra.mxu0 0
        %1723 = vmatprep.subr.bf16.mxu0 0
        %1724 = vmatpush2.bf16.xpose.msra.mxu0 0
        %1725 = vmatprep.subr.bf16.mxu0 0
        %1726 = vmatpush2.bf16.xpose.msra.mxu0 0
        %1727 = vmatprep.subr.bf16.mxu0 0
        %1728 = vmatpush2.bf16.xpose.msra.mxu0 0
        %1729 = vmatprep.mubr.bf16.mxu0 0
        %1730 = vmatmul.mubr.bf16.gmra.mxu0 %v1692
        %v1731 = vpop.f32.mrf.mxu0
        %v1732 = vadd.f32 %v1689, %v1731
        %v1733 = vpop.f32.mrf.mxu0
        %v1734 = vpop.f32.mrf.mxu0
        %v1735 = vpop.f32.mrf.mxu0
        %1736 = vdwg.mxu0
        %vm1737 = vcmask 122880
        %1738 = vst.msk [vmem:[#allocation6] sm:$0x1] %vm1737, %v1732
        %v1739 = vlaneseq
        %v1740 = vand.u32 %v1739, 127
        %s1741 = smul.u32 %s42, 16
        %v1742 = vstv %s1741
        %v1743 = vadd.s32 %v1740, %v1742
        %vm1744 = vcmp.lt.s32.totalorder %v1743, 8
        %v1745 = vsel %vm1744, %v1732, -1e+30
        %v1746 = vld [vmem:[#allocation3] sm:$0x1]
        %v1747 = vsel %vm1737, %v1745, -inf
        %1748 = vmax.xlane.f32.xlu0 %v1747
        %v1749 = vpop.xlane.xlu0 %1748
        %v1750 = vmax.f32 %v1746, %v1749
        %v1751 = vsub.f32 %v1746, %v1750
        %v1752 = vmul.f32 %v1751, 1.442695
        %v1753 = vpow.pop %v1752
        %1755 = vset.pattern.permute.xlu0 0
        %1756 = vperm.xlu0 %1755, %v1750
        %v1757 = vpop.permute.xlu0 %1756
        %v1759 = vlaneseq
        %v1760 = vshrl.u32 %v1759, 7
        %v1761 = vsub.s32 0, %v1760
        %v1762 = vrot.slane %v1757, %v1761
        %v1763 = vsub.f32 %v1745, %v1762
        %v1764 = vmul.f32 %v1763, 1.442695
        %v1765 = vpow.pop %v1764
        %v1766 = vld [vmem:[#allocation4] sm:$0x1]
        %v1767 = vmul.f32 %v1753, %v1766
        %v1768 = vsel %vm1737, %v1765, 0.0
        %1769 = vadd.xlane.f32.xlu0 %v1768
        %v1770 = vpop.xlane.xlu0 %1769
        %v1771 = vadd.f32 %v1767, %v1770
        %vm1772 = vcmask 0
        %1773 = vst.msk [vmem:[#allocation4] sm:$0x1] %vm1772, %v1771
        %v1774 = vld [vmem:[#allocation5] sm:$0x1]
        %1776 = vset.pattern.permute.xlu0 0
        %1777 = vperm.xlu0 %1776, %v1753
        %v1778 = vpop.permute.xlu0 %1777
        %v1780 = vlaneseq
        %v1781 = vshrl.u32 %v1780, 7
        %v1782 = vsub.s32 0, %v1781
        %v1783 = vrot.slane %v1778, %v1782
        %v1784 = vmul.f32 %v1783, %v1774
        %v1785 = vpack.c.bf16 %v1765, %v1765
        %vm1786 = vcmask 130048
        %v1788 = vsel %vm1786, %v1785, 0
        %1790 = vmatprep.subr.bf16.mxu0 0
        %1791 = vmatpush1.bf16.msra.mxu0 0
        %1792 = vmatprep.subr.bf16.mxu0 0
        %1793 = vmatpush1.bf16.msra.mxu0 0
        %1794 = vmatprep.subr.bf16.mxu0 0
        %1795 = vmatpush1.bf16.msra.mxu0 0
        %1796 = vmatprep.subr.bf16.mxu0 0
        %1797 = vmatpush1.bf16.msra.mxu0 0
        %1798 = vmatprep.subr.bf16.mxu0 0
        %1799 = vmatpush1.bf16.msra.mxu0 0
        %1800 = vmatprep.subr.bf16.mxu0 0
        %1801 = vmatpush1.bf16.msra.mxu0 0
        %1802 = vmatprep.subr.bf16.mxu0 0
        %1803 = vmatpush1.bf16.msra.mxu0 0
        %1804 = vmatprep.subr.bf16.mxu0 0
        %1805 = vmatpush1.bf16.msra.mxu0 %v1437
        %1806 = vmatprep.subr.bf16.mxu0 0
        %1807 = vmatpush2.bf16.msra.mxu0 0
        %1808 = vmatprep.subr.bf16.mxu0 0
        %1809 = vmatpush2.bf16.msra.mxu0 0
        %1810 = vmatprep.subr.bf16.mxu0 0
        %1811 = vmatpush2.bf16.msra.mxu0 0
        %1812 = vmatprep.subr.bf16.mxu0 0
        %1813 = vmatpush2.bf16.msra.mxu0 0
        %1814 = vmatprep.subr.bf16.mxu0 0
        %1815 = vmatpush2.bf16.msra.mxu0 0
        %1816 = vmatprep.subr.bf16.mxu0 0
        %1817 = vmatpush2.bf16.msra.mxu0 0
        %1818 = vmatprep.subr.bf16.mxu0 0
        %1819 = vmatpush2.bf16.msra.mxu0 0
        %1820 = vmatprep.subr.bf16.mxu0 0
        %1821 = vmatpush2.bf16.msra.mxu0 0
        %1822 = vmatprep.mubr.bf16.mxu0 0
        %1823 = vmatmul.mubr.bf16.gmra.mxu0 %v1788
        %v1824 = vpop.f32.mrf.mxu0
        %v1825 = vadd.f32 0.0, %v1824
        %v1826 = vpop.f32.mrf.mxu0
        %v1827 = vpop.f32.mrf.mxu0
        %v1828 = vpop.f32.mrf.mxu0
        %1829 = vdwg.mxu0
        %v1830 = vadd.f32 %v1784, %v1825
        %1831 = vst [vmem:[#allocation5] sm:$0x1] %v1830
        %1832 = vst.msk [vmem:[#allocation3] sm:$0x1] %vm1772, %v1750
        // Predicated region
        $region81: #{tpu_custom_call.1} parent=71 // pred_check
          %p1833 = pneg %p580
        $region82: #{tpu_custom_call.1} parent=71 // pred_check_branch
          %1835 = sbr.rel (%p1833) target = $region84
        $region83: #{tpu_custom_call.1} parent=71 // pred_region
          %v1836 = vld [vmem:[#allocation5] sm:$0x1]
          %v1837 = vld [vmem:[#allocation4] sm:$0x1]
          %1839 = vset.pattern.permute.xlu0 0
          %1840 = vperm.xlu0 %1839, %v1837
          %v1841 = vpop.permute.xlu0 %1840
          %v1843 = vlaneseq
          %v1844 = vshrl.u32 %v1843, 7
          %v1845 = vsub.s32 0, %v1844
          %v1846 = vrot.slane %v1841, %v1845
          %v1847 = vrcp.pop %v1846
          %v1848 = vmul.f32 %v1836, %v1847
          %v1849 = vpack.c.bf16 %v1848, %v1848
          %v1850 = vld [vmem:[%s11] sm:$0xf]
          %v1851 = vld [vmem:[%s11 + $0x4] sm:$0xf]
          %v1852 = vld [vmem:[%s11 + $0x8] sm:$0xf]
          %v1853 = vld [vmem:[%s11 + $0xc] sm:$0xf]
          %v1854 = vld [vmem:[%s11 + $0x10] sm:$0xf]
          %v1855 = vld [vmem:[%s11 + $0x14] sm:$0xf]
          %v1856 = vld [vmem:[%s11 + $0x18] sm:$0xf]
          %v1857 = vld [vmem:[%s11 + $0x1c] sm:$0xf]
          %v1858 = vld [vmem:[%s11 + $0x20] sm:$0xf]
          %v1859 = vld [vmem:[%s11 + $0x24] sm:$0xf]
          %v1860 = vld [vmem:[%s11 + $0x28] sm:$0xf]
          %v1861 = vld [vmem:[%s11 + $0x2c] sm:$0xf]
          %v1862 = vld [vmem:[%s11 + $0x30] sm:$0xf]
          %v1863 = vld [vmem:[%s11 + $0x34] sm:$0xf]
          %v1864 = vld [vmem:[%s11 + $0x38] sm:$0xf]
          %v1865 = vld [vmem:[%s11 + $0x3c] sm:$0xf]
          %v1866 = vld [vmem:[%s12] sm:$0x1]
          %v1883 = vunpack.c.l.b16 %v1850
          %v1884 = vunpack.c.l.b16 %v1851
          %v1885 = vunpack.c.l.b16 %v1852
          %v1886 = vunpack.c.l.b16 %v1853
          %v1887 = vunpack.c.l.b16 %v1854
          %v1888 = vunpack.c.l.b16 %v1855
          %v1889 = vunpack.c.l.b16 %v1856
          %v1890 = vunpack.c.l.b16 %v1857
          %v1891 = vunpack.c.l.b16 %v1858
          %v1892 = vunpack.c.l.b16 %v1859
          %v1893 = vunpack.c.l.b16 %v1860
          %v1894 = vunpack.c.l.b16 %v1861
          %v1895 = vunpack.c.l.b16 %v1862
          %v1896 = vunpack.c.l.b16 %v1863
          %v1897 = vunpack.c.l.b16 %v1864
          %v1898 = vunpack.c.l.b16 %v1865
          %v1899 = vpack.c.b16 %v1884, %v1883
          %v1900 = vpack.c.b16 %v1886, %v1885
          %v1901 = vpack.c.b16 %v1888, %v1887
          %v1902 = vpack.c.b16 %v1890, %v1889
          %v1903 = vpack.c.b16 %v1892, %v1891
          %v1904 = vpack.c.b16 %v1894, %v1893
          %v1905 = vpack.c.b16 %v1896, %v1895
          %v1906 = vpack.c.b16 %v1898, %v1897
          %1915 = vmatprep.subr.bf16.mxu0 0
          %1916 = vmatpush1.bf16.msra.mxu0 %v1906
          %1917 = vmatprep.subr.bf16.mxu0 0
          %1918 = vmatpush1.bf16.msra.mxu0 %v1905
          %1919 = vmatprep.subr.bf16.mxu0 0
          %1920 = vmatpush1.bf16.msra.mxu0 %v1904
          %1921 = vmatprep.subr.bf16.mxu0 0
          %1922 = vmatpush1.bf16.msra.mxu0 %v1903
          %1923 = vmatprep.subr.bf16.mxu0 0
          %1924 = vmatpush1.bf16.msra.mxu0 %v1902
          %1925 = vmatprep.subr.bf16.mxu0 0
          %1926 = vmatpush1.bf16.msra.mxu0 %v1901
          %1927 = vmatprep.subr.bf16.mxu0 0
          %1928 = vmatpush1.bf16.msra.mxu0 %v1900
          %1929 = vmatprep.subr.bf16.mxu0 0
          %1930 = vmatpush1.bf16.msra.mxu0 %v1899
          %1931 = vmatprep.subr.bf16.mxu0 0
          %1932 = vmatpush2.bf16.msra.mxu0 0
          %1933 = vmatprep.subr.bf16.mxu0 0
          %1934 = vmatpush2.bf16.msra.mxu0 0
          %1935 = vmatprep.subr.bf16.mxu0 0
          %1936 = vmatpush2.bf16.msra.mxu0 0
          %1937 = vmatprep.subr.bf16.mxu0 0
          %1938 = vmatpush2.bf16.msra.mxu0 0
          %1939 = vmatprep.subr.bf16.mxu0 0
          %1940 = vmatpush2.bf16.msra.mxu0 0
          %1941 = vmatprep.subr.bf16.mxu0 0
          %1942 = vmatpush2.bf16.msra.mxu0 0
          %1943 = vmatprep.subr.bf16.mxu0 0
          %1944 = vmatpush2.bf16.msra.mxu0 0
          %1945 = vmatprep.subr.bf16.mxu0 0
          %1946 = vmatpush2.bf16.msra.mxu0 0
          %1947 = vmatprep.mubr.bf16.mxu0 0
          %1948 = vmatmul.mubr.bf16.gmra.mxu0 %v1849
          %v1949 = vpop.f32.mrf.mxu0
          %v1950 = vadd.f32 %v1866, %v1949
          %v1951 = vpop.f32.mrf.mxu0
          %v1952 = vpop.f32.mrf.mxu0
          %v1953 = vpop.f32.mrf.mxu0
          %1954 = vdwg.mxu0
          %vm1955 = vcmask 8192
          %1956 = vst.msk [vmem:[%s550] sm:$0x1] %vm1955, %v1950
          %v1957 = vsel %vm1955, %v1950, -inf
          %1958 = vmax.xlane.f32.xlu0 %v1957
          %v1959 = vpop.xlane.xlu0 %1958
          %v1960 = vsub.f32 %v1950, %v1959
          %v1961 = vmul.f32 %v1960, 1.442695
          %v1962 = vpow.pop %v1961
          %v1963 = vsel %vm1955, %v1962, 0.0
          %1964 = vadd.xlane.f32.xlu0 %v1963
          %v1965 = vpop.xlane.xlu0 %1964
          %v1966 = vrcp.pop %v1965
          %v1967 = vmul.f32 %v1962, %v1966
          %1968 = vst.msk [vmem:[%s556] sm:$0x1] %vm1955, %v1967
          %v1969 = vld [vmem:[#allocation6] sm:$0x1]
          %1970 = vst [vmem:[%s562] sm:$0x1] %v1969
        $region84: #{tpu_custom_call.1} parent=71 // pred_fallthru
          _
        %s1971 = sand.u32 %s345, 1
        %s1972 = scalar_lea.sflag [#allocation10], %s1971
        %s1973 = sand.u32 %s345, 1
        %s1974 = scalar_lea.vmem [#allocation11], %s1973
        %s1975 = sand.u32 %s36, 1
        %s1976 = scalar_lea.sflag [#allocation13], %s1975
        %s1977 = sand.u32 %s371, 1
        %s1978 = scalar_lea.vmem [#allocation12], %s1977
        %s1979 = sand.u32 %s36, 1
        %s1980 = scalar_lea.sflag [#allocation13], %s1979
        %s1981 = sand.u32 %s397, 1
        %s1982 = scalar_lea.vmem [#allocation14], %s1981
        // Predicated region
        $region85: #{tpu_custom_call.1} parent=71 // pred_check
          %p1983 = pneg %p355
        $region86: #{tpu_custom_call.1} parent=71 // pred_check_branch
          %1985 = sbr.rel (%p1983) target = $region88
        $region87: #{tpu_custom_call.1} parent=71 // pred_region
          %s1987 = ssub.s32 16, 16
          %1988 = vsyncadd %s1972, %s1987
          %s1989 = smul.addr %s41, 16
          %s1990 = scalar_lea.hbm %s13, %s1989
          %s1992 = sshll.u32 %s1974, 4
          %s1993 = int_to_ptr.vmem [resolvable:$true] %s1992
          %1995 = dma.vmem_to_hbm [thread:$0]  %s1993, 16, %s1990, %s1972
        $region88: #{tpu_custom_call.1} parent=71 // pred_fallthru
          _
        // Predicated region
        $region89: #{tpu_custom_call.1} parent=71 // pred_check
          %p1996 = pneg %p381
        $region90: #{tpu_custom_call.1} parent=71 // pred_check_branch
          %1998 = sbr.rel (%p1996) target = $region92
        $region91: #{tpu_custom_call.1} parent=71 // pred_region
          %s2000 = ssub.s32 16, 16
          %2001 = vsyncadd %s1976, %s2000
          %s2002 = smul.addr %s41, 16
          %s2003 = scalar_lea.hbm %s14, %s2002
          %s2005 = sshll.u32 %s1978, 4
          %s2006 = int_to_ptr.vmem [resolvable:$true] %s2005
          %2008 = dma.vmem_to_hbm [thread:$0]  %s2006, 16, %s2003, %s1976
        $region92: #{tpu_custom_call.1} parent=71 // pred_fallthru
          _
        // Predicated region
        $region93: #{tpu_custom_call.1} parent=71 // pred_check
          %p2009 = pneg %p407
        $region94: #{tpu_custom_call.1} parent=71 // pred_check_branch
          %2011 = sbr.rel (%p2009) target = $region96
        $region95: #{tpu_custom_call.1} parent=71 // pred_region
          %s2013 = ssub.s32 16, 16
          %2014 = vsyncadd %s1980, %s2013
          %s2015 = smul.addr %s41, 16
          %s2016 = scalar_lea.hbm %s15, %s2015
          %s2018 = sshll.u32 %s1982, 4
          %s2019 = int_to_ptr.vmem [resolvable:$true] %s2018
          %2021 = dma.vmem_to_hbm [thread:$0]  %s2019, 16, %s2016, %s1980
        $region96: #{tpu_custom_call.1} parent=71 // pred_fallthru
          _
      $region72: #{tpu_custom_call.1} parent=5 // pred_fallthru
        _
      %p2022 = scmp.le.s32.totalorder 2, %s31
      // Predicated region
      $region97: #{tpu_custom_call.1} parent=5 // pred_check
        %p2023 = pneg %p2022
      $region98: #{tpu_custom_call.1} parent=5 // pred_check_branch
        %2025 = sbr.rel (%p2023) target = $region100
      $region99: #{tpu_custom_call.1} parent=5 // pred_region
        %s2026 = ssub.s32 %s31, 2
        // Predicated region
        $region101: #{tpu_custom_call.1} parent=99 // pred_check
          %p2027 = pneg %p361
        $region102: #{tpu_custom_call.1} parent=99 // pred_check_branch
          %2029 = sbr.rel (%p2027) target = $region104
        $region103: #{tpu_custom_call.1} parent=99 // pred_region
          %s2030 = sand.u32 %s346, 1
          %s2031 = scalar_lea.sflag [#allocation10], %s2030
          %s2032 = sand.u32 %s346, 1
          %s2033 = scalar_lea.vmem [#allocation11], %s2032
          %2034 = dma.done %s2031, 16
        $region104: #{tpu_custom_call.1} parent=99 // pred_fallthru
          _
        // Predicated region
        $region105: #{tpu_custom_call.1} parent=99 // pred_check
          %p2035 = pneg %p387
        $region106: #{tpu_custom_call.1} parent=99 // pred_check_branch
          %2037 = sbr.rel (%p2035) target = $region108
        $region107: #{tpu_custom_call.1} parent=99 // pred_region
          %s2038 = sand.u32 %s37, 1
          %s2039 = scalar_lea.sflag [#allocation13], %s2038
          %s2040 = sand.u32 %s372, 1
          %s2041 = scalar_lea.vmem [#allocation12], %s2040
          %2042 = dma.done %s2039, 16
        $region108: #{tpu_custom_call.1} parent=99 // pred_fallthru
          _
        // Predicated region
        $region109: #{tpu_custom_call.1} parent=99 // pred_check
          %p2043 = pneg %p413
        $region110: #{tpu_custom_call.1} parent=99 // pred_check_branch
          %2045 = sbr.rel (%p2043) target = $region112
        $region111: #{tpu_custom_call.1} parent=99 // pred_region
          %s2046 = sand.u32 %s37, 1
          %s2047 = scalar_lea.sflag [#allocation13], %s2046
          %s2048 = sand.u32 %s398, 1
          %s2049 = scalar_lea.vmem [#allocation14], %s2048
          %2050 = dma.done %s2047, 16
        $region112: #{tpu_custom_call.1} parent=99 // pred_fallthru
          _
      $region100: #{tpu_custom_call.1} parent=5 // pred_fallthru
        _
    $region6: #{tpu_custom_call.1} parent=1 // loop_footer
      %s35 = sadd.s32 1, %s31
    $region7: #{tpu_custom_call.1} parent=1 // loop_footer_branch
      %30 = sbr.rel target = $region3
    $region8: #{tpu_custom_call.1} parent=1 // loop_exit
      _
    %2051 = vsyncpa [#allocation9], 1
    %s2052 = scalar_lea.sflag [#allocation9], 1
    %2053 = vsyncpa %s2052, 1
    %2054 = vsyncpa [#allocation10], 1
    %s2055 = scalar_lea.sflag [#allocation10], 1
    %2056 = vsyncpa %s2055, 1
    %2057 = vsyncpa [#allocation13], 1
    %s2058 = scalar_lea.sflag [#allocation13], 1
    %2059 = vsyncpa %s2058, 1

</llo_original>
